<compile_context>
chip_gen: v6e
topology: v6e:2x2x1
jax: 0.10.0
libtpu: 0.0.40
codegen_flags: <defaults>
</compile_context>

<pallas_src>
import functools
import math

import jax
import jax.numpy as jnp
from jax.experimental import pallas as pl
from jax.experimental.pallas import tpu as pltpu

_LANE = 128
_SUBLANE = 8


def _round_up(a, b):
    return ((a + b - 1) // b) * b


def _ffm_kernel(x_ref, f_ref, o_ref, *, n_freqs):
    """One (tm, 2*n_freqs) output tile: [sin(x @ F) | cos(x @ F)].

    f_ref is (K, n_freqs) with the 2*pi factor already folded in, so the MXU
    result IS the phase. Two independent EUP pushes (sin, cos) overlap the
    lane-aligned stores.
    """
    theta = jax.lax.dot_general(
        x_ref[...], f_ref[...],
        dimension_numbers=(((1,), (0,)), ((), ())),
        preferred_element_type=jnp.float32,
    )  # (tm, n_freqs), f32
    o_ref[:, :n_freqs] = jnp.sin(theta).astype(o_ref.dtype)
    o_ref[:, n_freqs:] = jnp.cos(theta).astype(o_ref.dtype)


def ffm_layer_forward(x, freqs, *, tm=4096, out_dtype=None):
    """Pallas equivalent of FFMLayer.forward.

    x:     (M, K)        = (batch, in_features)
    freqs: (n_freqs, K)  with n_freqs = out_features // 2 (PyTorch layout)
    out_dtype: optional narrower store dtype (e.g. jnp.bfloat16) for the
               bandwidth-bound output writeback; phase math stays f32.
    returns (M, 2 * n_freqs)
    """
    M, K = x.shape
    n_freqs, K2 = freqs.shape
    assert K == K2, "freqs and x disagree on in_features"
    out_features = 2 * n_freqs
    out_dtype = x.dtype if out_dtype is None else jnp.dtype(out_dtype)
    # Note: n_freqs % 128 == 0 keeps both half-stores unmasked / lane-aligned.
    # (Other sizes remain correct, just slower masked stores.)

    # Fold 2*pi into the tiny weight and transpose to (K, n_freqs) once on the
    # host: freqs is ~KiB, so this is a free one-off XLA op, not a per-element
    # activation prescale.
    f_t = (jnp.float32(2.0 * math.pi) * freqs.astype(jnp.float32)).T
    f_t = f_t.astype(freqs.dtype)

    x_item = jnp.dtype(x.dtype).itemsize
    f_item = jnp.dtype(f_t.dtype).itemsize
    o_item = jnp.dtype(out_dtype).itemsize

    # VMEM footprint WITH (8,128) tile padding of every block.
    k_lanes = _round_up(K, _LANE)             # (tm, K) block pads K to 128 lanes
    nf_lanes = _round_up(n_freqs, _LANE)
    of_lanes = _round_up(out_features, _LANE)
    kf_rows = _round_up(K, _SUBLANE)          # (K, n_freqs) block pads rows to 8

    def _vmem_bytes(tm_):
        x_buf = 2 * tm_ * k_lanes * x_item            # double-buffered input tile
        f_buf = 2 * kf_rows * nf_lanes * f_item       # resident weights (tiny)
        o_buf = 2 * tm_ * of_lanes * o_item           # double-buffered output tile
        tmp = 3 * tm_ * nf_lanes * 4                  # theta / sin / cos temporaries
        return x_buf + f_buf + o_buf + tmp

    # Per-chip VMEM budget: ~70% of capacity for our buffers, ~80% as the
    # scoped limit (leaves compiler scratch / semaphore headroom).
    try:
        vmem_cap = int(pltpu.get_tpu_info().vmem_capacity_bytes)
    except Exception:
        vmem_cap = 64 * 1024 * 1024   # conservative fallback (v7x per-TC)
    budget = int(0.70 * vmem_cap)

    # --- tile sizing ---------------------------------------------------------
    # 1) largest tile that fits the budget (capped by the batch itself);
    # 2) keep >= 4 grid steps (2 per TensorCore on megacore parts) when the
    #    batch allows, and bound padding waste by sizing tm ~ ceil(M / n_tiles).
    MIN_GRID = 4
    tm_max = max(_SUBLANE, _round_up(min(int(tm), max(M, 1)), _SUBLANE))
    while tm_max > _SUBLANE and _vmem_bytes(tm_max) > budget:
        tm_max = _round_up(max(tm_max // 2, _SUBLANE), _SUBLANE)

    grid_m = max(pl.cdiv(M, tm_max), 1)
    grid_m = max(grid_m, min(MIN_GRID, pl.cdiv(M, _SUBLANE)))
    tm_sz = _round_up(pl.cdiv(M, grid_m), _SUBLANE)
    while tm_sz > _SUBLANE and _vmem_bytes(tm_sz) > budget:
        tm_sz = _round_up(max(tm_sz // 2, _SUBLANE), _SUBLANE)
    grid_m = pl.cdiv(M, tm_sz)
    m_pad = grid_m * tm_sz

    x_in = x if m_pad == M else jnp.pad(x, ((0, m_pad - M), (0, 0)))

    est = _vmem_bytes(tm_sz)
    vmem_limit = int(min(int(0.80 * vmem_cap), max(32 * 1024 * 1024, 2 * est)))

    kernel = functools.partial(_ffm_kernel, n_freqs=n_freqs)

    out = pl.pallas_call(
        kernel,
        out_shape=jax.ShapeDtypeStruct((m_pad, out_features), out_dtype),
        grid_spec=pltpu.PrefetchScalarGridSpec(
            num_scalar_prefetch=0,
            grid=(grid_m,),
            in_specs=[
                pl.BlockSpec((tm_sz, K), lambda i: (i, 0)),        # x: streams over batch
                pl.BlockSpec((K, n_freqs), lambda i: (0, 0)),      # freqs^T * 2pi: resident
            ],
            out_specs=pl.BlockSpec((tm_sz, out_features), lambda i: (i, 0)),
        ),
        compiler_params=pltpu.CompilerParams(
            dimension_semantics=("parallel",),
            vmem_limit_bytes=vmem_limit,
        ),
    )(x_in, f_t)

    return out if m_pad == M else out[:M]


def _init_ffm_params(key, in_features, out_features, omega_0=30, dtype=jnp.float32):
    """Matches FFMLayer.__init__: freqs ~ N(0, sqrt(omega_0)^2), shape (out//2, in)."""
    n_freqs = out_features // 2
    std = math.sqrt(omega_0)
    return std * jax.random.normal(key, (n_freqs, in_features), dtype=dtype)


if __name__ == "__main__":
    key = jax.random.PRNGKey(0)
    k_x, k_f = jax.random.split(key)

    batch = 520            # deliberately not a multiple of the tile size
    in_features = 3        # e.g. (x, y, t) coordinates
    out_features = 256     # -> n_freqs = 128 (lane-aligned sin/cos halves)
    omega_0 = 30

    x = jax.random.uniform(
        k_x, (batch, in_features), dtype=jnp.float32, minval=-1.0, maxval=1.0
    )
    freqs = _init_ffm_params(k_f, in_features, out_features, omega_0)

    out = ffm_layer_forward(x, freqs)
    out = jax.block_until_ready(out)

    # Reference in plain JAX (same semantics as the PyTorch module's forward).
    proj = 2.0 * math.pi * (x @ freqs.T)
    ref = jnp.concatenate([jnp.sin(proj), jnp.cos(proj)], axis=-1)

    assert out.shape == (batch, out_features), out.shape
    assert jnp.allclose(out, ref, atol=1e-3, rtol=1e-3), float(
        jnp.max(jnp.abs(out - ref))
    )

    print("KERNEL_OK")
</pallas_src>

<mosaic_0001>
module attributes {stable_mosaic.version = 11 : i64} {
  func.func @_ffm_kernel(%arg0: i32, %arg1: memref<136x3xf32, #tpu.memory_space<vmem>>, %arg2: memref<3x128xf32, #tpu.memory_space<vmem>>, %arg3: memref<136x256xf32, #tpu.memory_space<vmem>>) attributes {dimension_semantics = [#tpu.dimension_semantics<parallel>], iteration_bounds = array<i64: 4>, scalar_prefetch = 0 : i64, scratch_operands = 0 : i64, tpu.core_type = #tpu.core_type<tc>, window_params = [{transform_indices = @transform_0, window_bounds = array<i64: 136, 3>}, {pipeline_mode = #tpu.pipeline_mode<synchronous>, transform_indices = @transform_1, window_bounds = array<i64: 3, 128>}, {transform_indices = @transform_2, window_bounds = array<i64: 136, 256>}]} {
    %c0 = arith.constant 0 : index
    %c0_0 = arith.constant 0 : index
    %0 = vector.load %arg1[%c0, %c0_0] : memref<136x3xf32, #tpu.memory_space<vmem>>, vector<136x3xf32>
    %c0_1 = arith.constant 0 : index
    %c0_2 = arith.constant 0 : index
    %1 = vector.load %arg2[%c0_1, %c0_2] : memref<3x128xf32, #tpu.memory_space<vmem>>, vector<3x128xf32>
    %cst = arith.constant dense<0.000000e+00> : vector<136x128xf32>
    %2 = tpu.matmul %0, %1, %cst {dimension_numbers = #tpu.dot_dimension_numbers<[1], [0], [0], [1], [0, 0, 1, 1], [], []>} : vector<136x3xf32>, vector<3x128xf32>, vector<136x128xf32> -> vector<136x128xf32>
    %3 = math.sin %2 : vector<136x128xf32>
    %c0_3 = arith.constant 0 : index
    %c0_4 = arith.constant 0 : index
    %4 = vector.load %arg3[%c0_3, %c0_4] : memref<136x256xf32, #tpu.memory_space<vmem>>, vector<136x128xf32>
    tpu.vector_store %arg3[%c0_3, %c0_4], %3 {strides = array<i32>} : memref<136x256xf32, #tpu.memory_space<vmem>>, vector<136x128xf32>,
    %5 = math.cos %2 : vector<136x128xf32>
    %c0_5 = arith.constant 0 : index
    %c128 = arith.constant 128 : index
    %6 = vector.load %arg3[%c0_5, %c128] : memref<136x256xf32, #tpu.memory_space<vmem>>, vector<136x128xf32>
    tpu.vector_store %arg3[%c0_5, %c128], %5 {strides = array<i32>} : memref<136x256xf32, #tpu.memory_space<vmem>>, vector<136x128xf32>,
    return
  }
  func.func @transform_0(%arg0: i32) -> (i32, i32) {
    %c0_i32 = arith.constant 0 : i32
    %c0_i32_0 = arith.constant 0 : i32
    return %arg0, %c0_i32 : i32, i32
  }
  func.func @transform_1(%arg0: i32) -> (i32, i32) {
    %c0_i32 = arith.constant 0 : i32
    %c0_i32_0 = arith.constant 0 : i32
    %c0_i32_1 = arith.constant 0 : i32
    return %c0_i32, %c0_i32_0 : i32, i32
  }
  func.func @transform_2(%arg0: i32) -> (i32, i32) {
    %c0_i32 = arith.constant 0 : i32
    %c0_i32_0 = arith.constant 0 : i32
    return %arg0, %c0_i32 : i32, i32
  }
}

</mosaic_0001>

<llo_original>
// kernel: tpu_custom_call.1
$region0: #{tpu_custom_call.1}
  #allocation0 [shape = 'u32[]', space=smem, size = 0x4, offset = 0x4, fixed_abs, tag = 'smem constant byte address 0x4 - core index']
  #allocation1 [shape = 'u32[144,128]{1,0:T(1,128)}', space=vmem, size = 0x12000, scoped, tag = 'internal scratch']
  %s0 = inlined_call_operand.vmem [shape: f32[544,3], index: 0, kind: input, shape index: {}]
  %s1 = inlined_call_operand.vmem [shape: f32[3,128], index: 1, kind: input, shape index: {}]
  %s2 = inlined_call_operand.hbm [shape: f32[544,256], index: 2, kind: output, shape index: {}]
  %s3 = sld [smem:[#allocation0]]
  $region41: #{tpu_custom_call.1} parent=0
    _
  %s5 = ssub.s32 1, %s3
  %s6 = scalar_select 0, %s5, %s3
  $region1: #{tpu_custom_call.1} parent=0
    #allocation2 [shape = 'u8[278528]{0}', space=vmem, size = 0x44000, scoped, tag = 'output window, operand 0']
    #allocation3 [shape = 's32[2]{0}', space=sflag, size = 0x8, scoped, tag = 'scoped memory for tpu_custom_call.1']
    %7 = vsyncpa [#allocation3], 0
    %s8 = scalar_lea.sflag [#allocation3], 1
    %9 = vsyncpa %s8, 0
    loop: start=0, step=1, limit=6
    $region2: #{tpu_custom_call.1} parent=1 // loop_pre_header
      _
    $region3: #{tpu_custom_call.1} parent=1 // loop_header
      %s11 = sphi 0, %s15
      %p12 = scmp.ge.s32.totalorder %s11, 6
      %s21 = sphi 0, %s23
      %s24 = sphi 0, %s21
      %s25 = sphi 0, %s24
      %s41 = sphi 0, %s25
      %s45 = sphi 0, %s45
      %s47 = sphi 0, %s45
      %s48 = sphi 0, %s47
      %s62 = sphi 0, %s48
      %s68 = sphi 0, %s70
      %s71 = sphi 0, %s68
      %s72 = sphi 0, %s71
      %s88 = sphi 0, %s72
    $region4: #{tpu_custom_call.1} parent=1 // loop_header_branch
      %14 = sbr.rel (%p12) target = $region8
    $region5: #{tpu_custom_call.1} parent=1 // loop_body
      %s16 = ssub.s32 %s11, 1
      %s17 = ssub.s32 %s11, 2
      %s18 = sadd.s32 %s11, 1
      %s19 = ssub.s32 %s11, %s18
      %p20 = scmp.eq.s32.totalorder %s19, 0
      %s22 = sadd.s32 %s21, 1
      %s23 = scalar_select %p20, %s21, %s22
      %p26 = pneg %p20
      %p27 = scmp.eq.s32.totalorder %s11, 3
      %p28 = por %p26, %p27
      %p29 = scmp.ne.s32.totalorder %s21, %s24
      %p30 = scmp.eq.s32.totalorder %s11, 0
      %p31 = por %p29, %p30
      %p32 = scmp.ne.s32.totalorder %s21, %s24
      %p33 = scmp.eq.s32.totalorder %s16, 3
      %p34 = por %p32, %p33
      %p35 = scmp.ne.s32.totalorder %s24, %s25
      %p36 = scmp.eq.s32.totalorder %s16, 0
      %p37 = por %p35, %p36
      %p38 = scmp.ne.s32.totalorder %s24, %s25
      %p39 = scmp.eq.s32.totalorder %s17, 3
      %p40 = por %p38, %p39
      %p42 = scmp.ne.s32.totalorder %s25, %s41
      %p43 = scmp.eq.s32.totalorder %s17, 0
      %p44 = por %p42, %p43
      %s46 = sadd.s32 %s45, 1
      %p49 = scmp.eq.s32.totalorder %s11, 3
      %p50 = scmp.ne.s32.totalorder %s45, %s47
      %p51 = scmp.eq.s32.totalorder %s11, 0
      %p52 = por %p50, %p51
      %p53 = scmp.ne.s32.totalorder %s45, %s47
      %p54 = scmp.eq.s32.totalorder %s16, 3
      %p55 = por %p53, %p54
      %p56 = scmp.ne.s32.totalorder %s47, %s48
      %p57 = scmp.eq.s32.totalorder %s16, 0
      %p58 = por %p56, %p57
      %p59 = scmp.ne.s32.totalorder %s47, %s48
      %p60 = scmp.eq.s32.totalorder %s17, 3
      %p61 = por %p59, %p60
      %p63 = scmp.ne.s32.totalorder %s48, %s62
      %p64 = scmp.eq.s32.totalorder %s17, 0
      %p65 = por %p63, %p64
      %s66 = ssub.s32 %s11, %s18
      %p67 = scmp.eq.s32.totalorder %s66, 0
      %s69 = sadd.s32 %s68, 1
      %s70 = scalar_select %p67, %s68, %s69
      %p73 = pneg %p67
      %p74 = scmp.eq.s32.totalorder %s11, 3
      %p75 = por %p73, %p74
      %p76 = scmp.ne.s32.totalorder %s68, %s71
      %p77 = scmp.eq.s32.totalorder %s11, 0
      %p78 = por %p76, %p77
      %p79 = scmp.ne.s32.totalorder %s68, %s71
      %p80 = scmp.eq.s32.totalorder %s16, 3
      %p81 = por %p79, %p80
      %p82 = scmp.ne.s32.totalorder %s71, %s72
      %p83 = scmp.eq.s32.totalorder %s16, 0
      %p84 = por %p82, %p83
      %p85 = scmp.ne.s32.totalorder %s71, %s72
      %p86 = scmp.eq.s32.totalorder %s17, 3
      %p87 = por %p85, %p86
      %p89 = scmp.ne.s32.totalorder %s72, %s88
      %p90 = scmp.eq.s32.totalorder %s17, 0
      %p91 = por %p89, %p90
      %p92 = scmp.le.s32.totalorder 1, %s11
      %p93 = scmp.lt.s32.totalorder %s11, 5
      %p94 = pnand %p92, %p93
      %p95 = pneg %p94
      // Predicated region
      $region9: #{tpu_custom_call.1} parent=5 // pred_check
        _
      $region10: #{tpu_custom_call.1} parent=5 // pred_check_branch
        %97 = sbr.rel (%p94) target = $region12
      $region11: #{tpu_custom_call.1} parent=5 // pred_region
        %s98 = ssub.s32 %s11, 1
        // Predicated region
        $region13: #{tpu_custom_call.1} parent=11 // pred_check
          %p99 = pneg %p58
        $region14: #{tpu_custom_call.1} parent=11 // pred_check_branch
          %101 = sbr.rel (%p99) target = $region16
        $region15: #{tpu_custom_call.1} parent=11 // pred_region
          _
        $region16: #{tpu_custom_call.1} parent=11 // pred_fallthru
          _
      $region12: #{tpu_custom_call.1} parent=5 // pred_fallthru
        _
      %p102 = scmp.lt.s32.totalorder %s11, 4
      // Predicated region
      $region17: #{tpu_custom_call.1} parent=5 // pred_check
        %p103 = pneg %p102
      $region18: #{tpu_custom_call.1} parent=5 // pred_check_branch
        %105 = sbr.rel (%p103) target = $region20
      $region19: #{tpu_custom_call.1} parent=5 // pred_region
        // Predicated region
        $region21: #{tpu_custom_call.1} parent=19 // pred_check
          %p106 = pneg %p31
        $region22: #{tpu_custom_call.1} parent=19 // pred_check_branch
          %108 = sbr.rel (%p106) target = $region24
        $region23: #{tpu_custom_call.1} parent=19 // pred_region
          %s109 = smul.u32 17, %s11
          %p110 = scmp.lt.s32.totalorder %s109, 67
          %s111 = scalar_select %p110, %s109, 67
          %s112 = smul.addr %s111, 8
          %s113 = scalar_lea.vmem %s0, %s112
          %s114 = smul.u32 17, %s11
        $region24: #{tpu_custom_call.1} parent=19 // pred_fallthru
          _
      $region20: #{tpu_custom_call.1} parent=5 // pred_fallthru
        _
      %p115 = scmp.le.s32.totalorder 1, %s11
      %p116 = scmp.lt.s32.totalorder %s11, 5
      %p117 = pnand %p115, %p116
      %p118 = pneg %p117
      // Predicated region
      $region25: #{tpu_custom_call.1} parent=5 // pred_check
        _
      $region26: #{tpu_custom_call.1} parent=5 // pred_check_branch
        %120 = sbr.rel (%p117) target = $region28
      $region27: #{tpu_custom_call.1} parent=5 // pred_region
        %s121 = ssub.s32 %s11, 1
        %s122 = smul.u32 17, %s16
        %p123 = scmp.lt.s32.totalorder %s122, 67
        %s124 = scalar_select %p123, %s122, 67
        %s125 = smul.addr %s124, 8
        %s126 = scalar_lea.vmem %s0, %s125
        %p127 = pneg %p37
        %p128 = pneg %p34
        %p129 = pneg %p58
        %p130 = pneg %p55
        %p131 = pneg %p84
        %p132 = pneg %p81
        %s133 = sand.u32 %s71, 1
        %s134 = scalar_lea.sflag [#allocation3], %s133
        %s135 = sand.u32 %s71, 1
        %s136 = smul.addr %s135, 272
        %s137 = scalar_lea.vmem [#allocation2], %s136
        %s138 = smul.u32 17, %s16
        %p139 = scmp.lt.s32.totalorder %s138, 67
        %s140 = scalar_select %p139, %s138, 67
        %s141 = smul.addr %s140, 8
        %s142 = scalar_lea.vmem %s0, %s141
        %s143 = smul.u32 17, %s16
        %s144 = smul.u32 17, %s16
        %v145 = vld [vmem:[%s142] sm:$0xff]
        %v146 = vld [vmem:[%s142 + $0x8] sm:$0xff]
        %v147 = vld [vmem:[%s142 + $0x10] sm:$0xff]
        %v148 = vld [vmem:[%s142 + $0x18] sm:$0xff]
        %v149 = vld [vmem:[%s142 + $0x20] sm:$0xff]
        %v150 = vld [vmem:[%s142 + $0x28] sm:$0xff]
        %v151 = vld [vmem:[%s142 + $0x30] sm:$0xff]
        %v152 = vld [vmem:[%s142 + $0x38] sm:$0xff]
        %v153 = vld [vmem:[%s142 + $0x40] sm:$0xff]
        %v154 = vld [vmem:[%s142 + $0x48] sm:$0xff]
        %v155 = vld [vmem:[%s142 + $0x50] sm:$0xff]
        %v156 = vld [vmem:[%s142 + $0x58] sm:$0xff]
        %v157 = vld [vmem:[%s142 + $0x60] sm:$0xff]
        %v158 = vld [vmem:[%s142 + $0x68] sm:$0xff]
        %v159 = vld [vmem:[%s142 + $0x70] sm:$0xff]
        %v160 = vld [vmem:[%s142 + $0x78] sm:$0xff]
        %v161 = vld [vmem:[%s142 + $0x80] sm:$0xff]
        %v162 = vld [vmem:[%s1] sm:$0x7]
        %vm163 = vcmask 23552
        %v165 = vsel %vm163, %v145, 0
        %v168 = vsel %vm163, %v146, 0
        %v171 = vsel %vm163, %v147, 0
        %v174 = vsel %vm163, %v148, 0
        %v177 = vsel %vm163, %v149, 0
        %v180 = vsel %vm163, %v150, 0
        %v183 = vsel %vm163, %v151, 0
        %v186 = vsel %vm163, %v152, 0
        %v189 = vsel %vm163, %v153, 0
        %v192 = vsel %vm163, %v154, 0
        %v195 = vsel %vm163, %v155, 0
        %v198 = vsel %vm163, %v156, 0
        %v201 = vsel %vm163, %v157, 0
        %v204 = vsel %vm163, %v158, 0
        %v207 = vsel %vm163, %v159, 0
        %v210 = vsel %vm163, %v160, 0
        %v213 = vsel %vm163, %v161, 0
        %vm215 = vcmask 1042432
        %v217 = vsel %vm215, %v162, 0
        %219 = vmatprep.subr.mxu0 0.0
        %220 = vmatpush1.msra.mxu0 0.0
        %221 = vmatprep.subr.mxu0 0.0
        %222 = vmatpush1.msra.mxu0 0.0
        %223 = vmatprep.subr.mxu0 0.0
        %224 = vmatpush1.msra.mxu0 0.0
        %225 = vmatprep.subr.mxu0 0.0
        %226 = vmatpush1.msra.mxu0 0.0
        %227 = vmatprep.subr.mxu0 0.0
        %228 = vmatpush1.msra.mxu0 0.0
        %229 = vmatprep.subr.mxu0 0.0
        %230 = vmatpush1.msra.mxu0 0.0
        %231 = vmatprep.subr.mxu0 0.0
        %232 = vmatpush1.msra.mxu0 0.0
        %233 = vmatprep.subr.mxu0 0.0
        %234 = vmatpush1.msra.mxu0 0.0
        %235 = vmatprep.subr.mxu0 0.0
        %236 = vmatpush1.msra.mxu0 0.0
        %237 = vmatprep.subr.mxu0 0.0
        %238 = vmatpush1.msra.mxu0 0.0
        %239 = vmatprep.subr.mxu0 0.0
        %240 = vmatpush1.msra.mxu0 0.0
        %241 = vmatprep.subr.mxu0 0.0
        %242 = vmatpush1.msra.mxu0 0.0
        %243 = vmatprep.subr.mxu0 0.0
        %244 = vmatpush1.msra.mxu0 0.0
        %245 = vmatprep.subr.mxu0 0.0
        %246 = vmatpush1.msra.mxu0 0.0
        %247 = vmatprep.subr.mxu0 0.0
        %248 = vmatpush1.msra.mxu0 0.0
        %249 = vmatprep.subr.mxu0 0.0
        %250 = vmatpush1.msra.mxu0 %v217
        %251 = vmatprep.subr.mxu0 0.0
        %252 = vmatpush2.msra.mxu0 0.0
        %253 = vmatprep.subr.mxu0 0.0
        %254 = vmatpush2.msra.mxu0 0.0
        %255 = vmatprep.subr.mxu0 0.0
        %256 = vmatpush2.msra.mxu0 0.0
        %257 = vmatprep.subr.mxu0 0.0
        %258 = vmatpush2.msra.mxu0 0.0
        %259 = vmatprep.subr.mxu0 0.0
        %260 = vmatpush2.msra.mxu0 0.0
        %261 = vmatprep.subr.mxu0 0.0
        %262 = vmatpush2.msra.mxu0 0.0
        %263 = vmatprep.subr.mxu0 0.0
        %264 = vmatpush2.msra.mxu0 0.0
        %265 = vmatprep.subr.mxu0 0.0
        %266 = vmatpush2.msra.mxu0 0.0
        %267 = vmatprep.subr.mxu0 0.0
        %268 = vmatpush2.msra.mxu0 0.0
        %269 = vmatprep.subr.mxu0 0.0
        %270 = vmatpush2.msra.mxu0 0.0
        %271 = vmatprep.subr.mxu0 0.0
        %272 = vmatpush2.msra.mxu0 0.0
        %273 = vmatprep.subr.mxu0 0.0
        %274 = vmatpush2.msra.mxu0 0.0
        %275 = vmatprep.subr.mxu0 0.0
        %276 = vmatpush2.msra.mxu0 0.0
        %277 = vmatprep.subr.mxu0 0.0
        %278 = vmatpush2.msra.mxu0 0.0
        %279 = vmatprep.subr.mxu0 0.0
        %280 = vmatpush2.msra.mxu0 0.0
        %281 = vmatprep.subr.mxu0 0.0
        %282 = vmatpush2.msra.mxu0 0.0
        %283 = vmatprep.mubr.f32.mxu0 0.0
        %284 = vmatmul.mubr.f32.gmra.mxu0 %v165
        %v285 = vpop.f32.mrf.mxu0
        %v286 = vadd.f32 0.0, %v285
        %v287 = vpop.f32.mrf.mxu0
        %288 = vmatprep.mubr.f32.mxu0 0.0
        %289 = vmatmul.mubr.f32.gmra.mxu0 %v168
        %v290 = vpop.f32.mrf.mxu0
        %v291 = vadd.f32 0.0, %v290
        %v292 = vpop.f32.mrf.mxu0
        %293 = vmatprep.mubr.f32.mxu0 0.0
        %294 = vmatmul.mubr.f32.gmra.mxu0 %v171
        %v295 = vpop.f32.mrf.mxu0
        %v296 = vadd.f32 0.0, %v295
        %v297 = vpop.f32.mrf.mxu0
        %298 = vmatprep.mubr.f32.mxu0 0.0
        %299 = vmatmul.mubr.f32.gmra.mxu0 %v174
        %v300 = vpop.f32.mrf.mxu0
        %v301 = vadd.f32 0.0, %v300
        %v302 = vpop.f32.mrf.mxu0
        %303 = vmatprep.mubr.f32.mxu0 0.0
        %304 = vmatmul.mubr.f32.gmra.mxu0 %v177
        %v305 = vpop.f32.mrf.mxu0
        %v306 = vadd.f32 0.0, %v305
        %v307 = vpop.f32.mrf.mxu0
        %308 = vmatprep.mubr.f32.mxu0 0.0
        %309 = vmatmul.mubr.f32.gmra.mxu0 %v180
        %v310 = vpop.f32.mrf.mxu0
        %v311 = vadd.f32 0.0, %v310
        %v312 = vpop.f32.mrf.mxu0
        %313 = vmatprep.mubr.f32.mxu0 0.0
        %314 = vmatmul.mubr.f32.gmra.mxu0 %v183
        %v315 = vpop.f32.mrf.mxu0
        %v316 = vadd.f32 0.0, %v315
        %v317 = vpop.f32.mrf.mxu0
        %318 = vmatprep.mubr.f32.mxu0 0.0
        %319 = vmatmul.mubr.f32.gmra.mxu0 %v186
        %v320 = vpop.f32.mrf.mxu0
        %v321 = vadd.f32 0.0, %v320
        %v322 = vpop.f32.mrf.mxu0
        %323 = vmatprep.mubr.f32.mxu0 0.0
        %324 = vmatmul.mubr.f32.gmra.mxu0 %v189
        %v325 = vpop.f32.mrf.mxu0
        %v326 = vadd.f32 0.0, %v325
        %v327 = vpop.f32.mrf.mxu0
        %328 = vmatprep.mubr.f32.mxu0 0.0
        %329 = vmatmul.mubr.f32.gmra.mxu0 %v192
        %v330 = vpop.f32.mrf.mxu0
        %v331 = vadd.f32 0.0, %v330
        %v332 = vpop.f32.mrf.mxu0
        %333 = vmatprep.mubr.f32.mxu0 0.0
        %334 = vmatmul.mubr.f32.gmra.mxu0 %v195
        %v335 = vpop.f32.mrf.mxu0
        %v336 = vadd.f32 0.0, %v335
        %v337 = vpop.f32.mrf.mxu0
        %338 = vmatprep.mubr.f32.mxu0 0.0
        %339 = vmatmul.mubr.f32.gmra.mxu0 %v198
        %v340 = vpop.f32.mrf.mxu0
        %v341 = vadd.f32 0.0, %v340
        %v342 = vpop.f32.mrf.mxu0
        %343 = vmatprep.mubr.f32.mxu0 0.0
        %344 = vmatmul.mubr.f32.gmra.mxu0 %v201
        %v345 = vpop.f32.mrf.mxu0
        %v346 = vadd.f32 0.0, %v345
        %v347 = vpop.f32.mrf.mxu0
        %348 = vmatprep.mubr.f32.mxu0 0.0
        %349 = vmatmul.mubr.f32.gmra.mxu0 %v204
        %v350 = vpop.f32.mrf.mxu0
        %v351 = vadd.f32 0.0, %v350
        %v352 = vpop.f32.mrf.mxu0
        %353 = vmatprep.mubr.f32.mxu0 0.0
        %354 = vmatmul.mubr.f32.gmra.mxu0 %v207
        %v355 = vpop.f32.mrf.mxu0
        %v356 = vadd.f32 0.0, %v355
        %v357 = vpop.f32.mrf.mxu0
        %358 = vmatprep.mubr.f32.mxu0 0.0
        %359 = vmatmul.mubr.f32.gmra.mxu0 %v210
        %v360 = vpop.f32.mrf.mxu0
        %v361 = vadd.f32 0.0, %v360
        %v362 = vpop.f32.mrf.mxu0
        %363 = vmatprep.mubr.f32.mxu0 0.0
        %364 = vmatmul.mubr.f32.gmra.mxu0 %v213
        %v365 = vpop.f32.mrf.mxu0
        %v366 = vadd.f32 0.0, %v365
        %v367 = vpop.f32.mrf.mxu0
        %368 = vdwg.mxu0
        %v369 = vand.u32 2147483647, %v286
        %vm370 = vcmp.le.f32.partialorder %v369, 0.7853982
        %vm371 = vcmp.lt.s32.totalorder %v286, 0
        %v372 = vand.u32 %v286, 2139095040
        %v373 = vshrl.u32 %v372, 23
        %v374 = vsub.s32 %v373, 127
        %v375 = vand.u32 2147483647, %v286
        %v376 = vand.u32 %v375, 8388607
        %v377 = vor.u32 %v376, 8388608
        %v378 = vsub.s32 0, %v377
        %v379 = vadd.s32 %v374, 1
        %vm380 = vcmp.gt.s32.totalorder %v379, 0
        %v381 = vsel %vm380, %v379, 0
        %v382 = vshrl.u32 %v381, 5
        %v383 = vand.u32 %v381, 31
        %v384 = vsub.s32 32, %v383
        %v385 = vshrl.u32 683565275, %v384
        %v386 = vshll.u32 683565275, %v383
        %v387 = vshrl.u32 2475754826, %v384
        %v388 = vor.u32 %v386, %v387
        %v389 = vshll.u32 2475754826, %v383
        %v390 = vshrl.u32 2131351028, %v384
        %v391 = vor.u32 %v389, %v390
        %v392 = vshll.u32 2131351028, %v383
        %v393 = vshrl.u32 2102212464, %v384
        %v394 = vor.u32 %v392, %v393
        %v395 = vshll.u32 2102212464, %v383
        %v396 = vshrl.u32 920167782, %v384
        %v397 = vor.u32 %v395, %v396
        %v398 = vshll.u32 920167782, %v383
        %v399 = vshrl.u32 1326507024, %v384
        %v400 = vor.u32 %v398, %v399
        %vm401 = vcmp.lt.s32.totalorder %v382, 1
        %vm402 = vcmp.lt.s32.totalorder %v382, 2
        %vm403 = vcmp.lt.s32.totalorder %v382, 3
        %vm404 = vcmp.lt.s32.totalorder %v382, 4
        %v405 = vsel %vm401, %v385, %v388
        %v406 = vsel %vm404, %v394, 2102212464
        %v407 = vsel %vm403, %v391, %v406
        %v408 = vsel %vm402, %v405, %v407
        %v409 = vsel %vm401, %v388, %v391
        %v410 = vsel %vm404, %v397, 920167782
        %v411 = vsel %vm403, %v394, %v410
        %v412 = vsel %vm402, %v409, %v411
        %v413 = vsel %vm401, %v391, %v394
        %v414 = vsel %vm404, %v400, 1326507024
        %v415 = vsel %vm403, %v397, %v414
        %v416 = vsel %vm402, %v413, %v415
        %v417 = vshll.u32 %v377, 8
        %v418 = vmul.u32.u64.compose %v417, %v416
        %v419 = vextract.low.u32 %v418
        %v420 = vextract.high.u32 %v418
        %v421 = vmul.u32.u64.compose %v417, %v412
        %v422 = vextract.low.u32 %v421
        %v423 = vextract.high.u32 %v421
        %v424 = vmul.u32 %v417, %v408
        %v425 = vadd.s32 %v420, %v422
        %vm426 = vc.u32 %v420, %v422
        %v427 = vadd.s32 %v423, 1
        %v428 = vsel %vm426, %v427, %v423
        %v429 = vadd.s32 %v424, %v428
        %v430 = vadd.s32 %v429, 536870912
        %v431 = vshrl.u32 %v430, 30
        %v432 = vshll.u32 %v431, 30
        %v433 = vsub.s32 %v429, %v432
        %vm434 = vcmp.lt.s32.totalorder %v433, 0
        %v435 = vsub.s32 0, %v433
        %v436 = vsel %vm434, %v435, %v433
        %v437 = vclz %v436
        %v438 = vsub.s32 %v437, 2
        %vm439 = vcmp.gt.s32.totalorder 0, %v438
        %v440 = vsel %vm439, 0, %v438
        %v441 = vsub.s32 32, %v440
        %v442 = vshll.u32 %v433, %v440
        %v443 = vshrl.u32 %v425, %v441
        %v444 = vor.u32 %v442, %v443
        %v445 = vsub.s32 4294967266, %v440
        %v446 = vadd.s32 %v445, 127
        %v447 = vshll.u32 %v446, 23
        %v448 = vor.u32 4788187, %v447
        %v449 = vand.u32 2147483647, %v448
        %v451 = vcvt.s32.f32 %v444
        %v452 = vmul.f32 %v451, %v449
        %v453 = vxor.u32 %v452, 2147483648
        %v454 = vsel %vm371, %v453, %v452
        %v455 = vsub.s32 4, %v431
        %v456 = vsel %vm371, %v455, %v431
        %v457 = vsel %vm370, %v286, %v454
        %v458 = vsel %vm370, 0, %v456
        %v459 = vcosq.f32.pop %v457
        %v460 = vsinq.f32.pop %v457
        %vm461 = vweird.f32 %v286
        %v462 = vadd.s32 %v458, 3
        %v463 = vand.u32 %v462, 3
        %vm464 = vcmp.lt.s32.totalorder %v463, 2
        %vm465 = vcmp.eq.s32.totalorder %v463, 0
        %v466 = vxor.u32 %v460, 2147483648
        %v467 = vsel %vm465, %v459, %v466
        %vm468 = vcmp.eq.s32.totalorder %v463, 2
        %v469 = vxor.u32 %v459, 2147483648
        %v470 = vsel %vm468, %v469, %v460
        %v471 = vsel %vm464, %v467, %v470
        %v472 = vsel %vm461, nan, %v471
        %v473 = vand.u32 2147483647, %v291
        %vm474 = vcmp.le.f32.partialorder %v473, 0.7853982
        %vm475 = vcmp.lt.s32.totalorder %v291, 0
        %v476 = vand.u32 %v291, 2139095040
        %v477 = vshrl.u32 %v476, 23
        %v478 = vsub.s32 %v477, 127
        %v479 = vand.u32 2147483647, %v291
        %v480 = vand.u32 %v479, 8388607
        %v481 = vor.u32 %v480, 8388608
        %v482 = vsub.s32 0, %v481
        %v483 = vadd.s32 %v478, 1
        %vm484 = vcmp.gt.s32.totalorder %v483, 0
        %v485 = vsel %vm484, %v483, 0
        %v486 = vshrl.u32 %v485, 5
        %v487 = vand.u32 %v485, 31
        %v488 = vsub.s32 32, %v487
        %v489 = vshrl.u32 683565275, %v488
        %v490 = vshll.u32 683565275, %v487
        %v491 = vshrl.u32 2475754826, %v488
        %v492 = vor.u32 %v490, %v491
        %v493 = vshll.u32 2475754826, %v487
        %v494 = vshrl.u32 2131351028, %v488
        %v495 = vor.u32 %v493, %v494
        %v496 = vshll.u32 2131351028, %v487
        %v497 = vshrl.u32 2102212464, %v488
        %v498 = vor.u32 %v496, %v497
        %v499 = vshll.u32 2102212464, %v487
        %v500 = vshrl.u32 920167782, %v488
        %v501 = vor.u32 %v499, %v500
        %v502 = vshll.u32 920167782, %v487
        %v503 = vshrl.u32 1326507024, %v488
        %v504 = vor.u32 %v502, %v503
        %vm505 = vcmp.lt.s32.totalorder %v486, 1
        %vm506 = vcmp.lt.s32.totalorder %v486, 2
        %vm507 = vcmp.lt.s32.totalorder %v486, 3
        %vm508 = vcmp.lt.s32.totalorder %v486, 4
        %v509 = vsel %vm505, %v489, %v492
        %v510 = vsel %vm508, %v498, 2102212464
        %v511 = vsel %vm507, %v495, %v510
        %v512 = vsel %vm506, %v509, %v511
        %v513 = vsel %vm505, %v492, %v495
        %v514 = vsel %vm508, %v501, 920167782
        %v515 = vsel %vm507, %v498, %v514
        %v516 = vsel %vm506, %v513, %v515
        %v517 = vsel %vm505, %v495, %v498
        %v518 = vsel %vm508, %v504, 1326507024
        %v519 = vsel %vm507, %v501, %v518
        %v520 = vsel %vm506, %v517, %v519
        %v521 = vshll.u32 %v481, 8
        %v522 = vmul.u32.u64.compose %v521, %v520
        %v523 = vextract.low.u32 %v522
        %v524 = vextract.high.u32 %v522
        %v525 = vmul.u32.u64.compose %v521, %v516
        %v526 = vextract.low.u32 %v525
        %v527 = vextract.high.u32 %v525
        %v528 = vmul.u32 %v521, %v512
        %v529 = vadd.s32 %v524, %v526
        %vm530 = vc.u32 %v524, %v526
        %v531 = vadd.s32 %v527, 1
        %v532 = vsel %vm530, %v531, %v527
        %v533 = vadd.s32 %v528, %v532
        %v534 = vadd.s32 %v533, 536870912
        %v535 = vshrl.u32 %v534, 30
        %v536 = vshll.u32 %v535, 30
        %v537 = vsub.s32 %v533, %v536
        %vm538 = vcmp.lt.s32.totalorder %v537, 0
        %v539 = vsub.s32 0, %v537
        %v540 = vsel %vm538, %v539, %v537
        %v541 = vclz %v540
        %v542 = vsub.s32 %v541, 2
        %vm543 = vcmp.gt.s32.totalorder 0, %v542
        %v544 = vsel %vm543, 0, %v542
        %v545 = vsub.s32 32, %v544
        %v546 = vshll.u32 %v537, %v544
        %v547 = vshrl.u32 %v529, %v545
        %v548 = vor.u32 %v546, %v547
        %v549 = vsub.s32 4294967266, %v544
        %v550 = vadd.s32 %v549, 127
        %v551 = vshll.u32 %v550, 23
        %v552 = vor.u32 4788187, %v551
        %v553 = vand.u32 2147483647, %v552
        %v555 = vcvt.s32.f32 %v548
        %v556 = vmul.f32 %v555, %v553
        %v557 = vxor.u32 %v556, 2147483648
        %v558 = vsel %vm475, %v557, %v556
        %v559 = vsub.s32 4, %v535
        %v560 = vsel %vm475, %v559, %v535
        %v561 = vsel %vm474, %v291, %v558
        %v562 = vsel %vm474, 0, %v560
        %v563 = vcosq.f32.pop %v561
        %v564 = vsinq.f32.pop %v561
        %vm565 = vweird.f32 %v291
        %v566 = vadd.s32 %v562, 3
        %v567 = vand.u32 %v566, 3
        %vm568 = vcmp.lt.s32.totalorder %v567, 2
        %vm569 = vcmp.eq.s32.totalorder %v567, 0
        %v570 = vxor.u32 %v564, 2147483648
        %v571 = vsel %vm569, %v563, %v570
        %vm572 = vcmp.eq.s32.totalorder %v567, 2
        %v573 = vxor.u32 %v563, 2147483648
        %v574 = vsel %vm572, %v573, %v564
        %v575 = vsel %vm568, %v571, %v574
        %v576 = vsel %vm565, nan, %v575
        %v577 = vand.u32 2147483647, %v296
        %vm578 = vcmp.le.f32.partialorder %v577, 0.7853982
        %vm579 = vcmp.lt.s32.totalorder %v296, 0
        %v580 = vand.u32 %v296, 2139095040
        %v581 = vshrl.u32 %v580, 23
        %v582 = vsub.s32 %v581, 127
        %v583 = vand.u32 2147483647, %v296
        %v584 = vand.u32 %v583, 8388607
        %v585 = vor.u32 %v584, 8388608
        %v586 = vsub.s32 0, %v585
        %v587 = vadd.s32 %v582, 1
        %vm588 = vcmp.gt.s32.totalorder %v587, 0
        %v589 = vsel %vm588, %v587, 0
        %v590 = vshrl.u32 %v589, 5
        %v591 = vand.u32 %v589, 31
        %v592 = vsub.s32 32, %v591
        %v593 = vshrl.u32 683565275, %v592
        %v594 = vshll.u32 683565275, %v591
        %v595 = vshrl.u32 2475754826, %v592
        %v596 = vor.u32 %v594, %v595
        %v597 = vshll.u32 2475754826, %v591
        %v598 = vshrl.u32 2131351028, %v592
        %v599 = vor.u32 %v597, %v598
        %v600 = vshll.u32 2131351028, %v591
        %v601 = vshrl.u32 2102212464, %v592
        %v602 = vor.u32 %v600, %v601
        %v603 = vshll.u32 2102212464, %v591
        %v604 = vshrl.u32 920167782, %v592
        %v605 = vor.u32 %v603, %v604
        %v606 = vshll.u32 920167782, %v591
        %v607 = vshrl.u32 1326507024, %v592
        %v608 = vor.u32 %v606, %v607
        %vm609 = vcmp.lt.s32.totalorder %v590, 1
        %vm610 = vcmp.lt.s32.totalorder %v590, 2
        %vm611 = vcmp.lt.s32.totalorder %v590, 3
        %vm612 = vcmp.lt.s32.totalorder %v590, 4
        %v613 = vsel %vm609, %v593, %v596
        %v614 = vsel %vm612, %v602, 2102212464
        %v615 = vsel %vm611, %v599, %v614
        %v616 = vsel %vm610, %v613, %v615
        %v617 = vsel %vm609, %v596, %v599
        %v618 = vsel %vm612, %v605, 920167782
        %v619 = vsel %vm611, %v602, %v618
        %v620 = vsel %vm610, %v617, %v619
        %v621 = vsel %vm609, %v599, %v602
        %v622 = vsel %vm612, %v608, 1326507024
        %v623 = vsel %vm611, %v605, %v622
        %v624 = vsel %vm610, %v621, %v623
        %v625 = vshll.u32 %v585, 8
        %v626 = vmul.u32.u64.compose %v625, %v624
        %v627 = vextract.low.u32 %v626
        %v628 = vextract.high.u32 %v626
        %v629 = vmul.u32.u64.compose %v625, %v620
        %v630 = vextract.low.u32 %v629
        %v631 = vextract.high.u32 %v629
        %v632 = vmul.u32 %v625, %v616
        %v633 = vadd.s32 %v628, %v630
        %vm634 = vc.u32 %v628, %v630
        %v635 = vadd.s32 %v631, 1
        %v636 = vsel %vm634, %v635, %v631
        %v637 = vadd.s32 %v632, %v636
        %v638 = vadd.s32 %v637, 536870912
        %v639 = vshrl.u32 %v638, 30
        %v640 = vshll.u32 %v639, 30
        %v641 = vsub.s32 %v637, %v640
        %vm642 = vcmp.lt.s32.totalorder %v641, 0
        %v643 = vsub.s32 0, %v641
        %v644 = vsel %vm642, %v643, %v641
        %v645 = vclz %v644
        %v646 = vsub.s32 %v645, 2
        %vm647 = vcmp.gt.s32.totalorder 0, %v646
        %v648 = vsel %vm647, 0, %v646
        %v649 = vsub.s32 32, %v648
        %v650 = vshll.u32 %v641, %v648
        %v651 = vshrl.u32 %v633, %v649
        %v652 = vor.u32 %v650, %v651
        %v653 = vsub.s32 4294967266, %v648
        %v654 = vadd.s32 %v653, 127
        %v655 = vshll.u32 %v654, 23
        %v656 = vor.u32 4788187, %v655
        %v657 = vand.u32 2147483647, %v656
        %v659 = vcvt.s32.f32 %v652
        %v660 = vmul.f32 %v659, %v657
        %v661 = vxor.u32 %v660, 2147483648
        %v662 = vsel %vm579, %v661, %v660
        %v663 = vsub.s32 4, %v639
        %v664 = vsel %vm579, %v663, %v639
        %v665 = vsel %vm578, %v296, %v662
        %v666 = vsel %vm578, 0, %v664
        %v667 = vcosq.f32.pop %v665
        %v668 = vsinq.f32.pop %v665
        %vm669 = vweird.f32 %v296
        %v670 = vadd.s32 %v666, 3
        %v671 = vand.u32 %v670, 3
        %vm672 = vcmp.lt.s32.totalorder %v671, 2
        %vm673 = vcmp.eq.s32.totalorder %v671, 0
        %v674 = vxor.u32 %v668, 2147483648
        %v675 = vsel %vm673, %v667, %v674
        %vm676 = vcmp.eq.s32.totalorder %v671, 2
        %v677 = vxor.u32 %v667, 2147483648
        %v678 = vsel %vm676, %v677, %v668
        %v679 = vsel %vm672, %v675, %v678
        %v680 = vsel %vm669, nan, %v679
        %v681 = vand.u32 2147483647, %v301
        %vm682 = vcmp.le.f32.partialorder %v681, 0.7853982
        %vm683 = vcmp.lt.s32.totalorder %v301, 0
        %v684 = vand.u32 %v301, 2139095040
        %v685 = vshrl.u32 %v684, 23
        %v686 = vsub.s32 %v685, 127
        %v687 = vand.u32 2147483647, %v301
        %v688 = vand.u32 %v687, 8388607
        %v689 = vor.u32 %v688, 8388608
        %v690 = vsub.s32 0, %v689
        %v691 = vadd.s32 %v686, 1
        %vm692 = vcmp.gt.s32.totalorder %v691, 0
        %v693 = vsel %vm692, %v691, 0
        %v694 = vshrl.u32 %v693, 5
        %v695 = vand.u32 %v693, 31
        %v696 = vsub.s32 32, %v695
        %v697 = vshrl.u32 683565275, %v696
        %v698 = vshll.u32 683565275, %v695
        %v699 = vshrl.u32 2475754826, %v696
        %v700 = vor.u32 %v698, %v699
        %v701 = vshll.u32 2475754826, %v695
        %v702 = vshrl.u32 2131351028, %v696
        %v703 = vor.u32 %v701, %v702
        %v704 = vshll.u32 2131351028, %v695
        %v705 = vshrl.u32 2102212464, %v696
        %v706 = vor.u32 %v704, %v705
        %v707 = vshll.u32 2102212464, %v695
        %v708 = vshrl.u32 920167782, %v696
        %v709 = vor.u32 %v707, %v708
        %v710 = vshll.u32 920167782, %v695
        %v711 = vshrl.u32 1326507024, %v696
        %v712 = vor.u32 %v710, %v711
        %vm713 = vcmp.lt.s32.totalorder %v694, 1
        %vm714 = vcmp.lt.s32.totalorder %v694, 2
        %vm715 = vcmp.lt.s32.totalorder %v694, 3
        %vm716 = vcmp.lt.s32.totalorder %v694, 4
        %v717 = vsel %vm713, %v697, %v700
        %v718 = vsel %vm716, %v706, 2102212464
        %v719 = vsel %vm715, %v703, %v718
        %v720 = vsel %vm714, %v717, %v719
        %v721 = vsel %vm713, %v700, %v703
        %v722 = vsel %vm716, %v709, 920167782
        %v723 = vsel %vm715, %v706, %v722
        %v724 = vsel %vm714, %v721, %v723
        %v725 = vsel %vm713, %v703, %v706
        %v726 = vsel %vm716, %v712, 1326507024
        %v727 = vsel %vm715, %v709, %v726
        %v728 = vsel %vm714, %v725, %v727
        %v729 = vshll.u32 %v689, 8
        %v730 = vmul.u32.u64.compose %v729, %v728
        %v731 = vextract.low.u32 %v730
        %v732 = vextract.high.u32 %v730
        %v733 = vmul.u32.u64.compose %v729, %v724
        %v734 = vextract.low.u32 %v733
        %v735 = vextract.high.u32 %v733
        %v736 = vmul.u32 %v729, %v720
        %v737 = vadd.s32 %v732, %v734
        %vm738 = vc.u32 %v732, %v734
        %v739 = vadd.s32 %v735, 1
        %v740 = vsel %vm738, %v739, %v735
        %v741 = vadd.s32 %v736, %v740
        %v742 = vadd.s32 %v741, 536870912
        %v743 = vshrl.u32 %v742, 30
        %v744 = vshll.u32 %v743, 30
        %v745 = vsub.s32 %v741, %v744
        %vm746 = vcmp.lt.s32.totalorder %v745, 0
        %v747 = vsub.s32 0, %v745
        %v748 = vsel %vm746, %v747, %v745
        %v749 = vclz %v748
        %v750 = vsub.s32 %v749, 2
        %vm751 = vcmp.gt.s32.totalorder 0, %v750
        %v752 = vsel %vm751, 0, %v750
        %v753 = vsub.s32 32, %v752
        %v754 = vshll.u32 %v745, %v752
        %v755 = vshrl.u32 %v737, %v753
        %v756 = vor.u32 %v754, %v755
        %v757 = vsub.s32 4294967266, %v752
        %v758 = vadd.s32 %v757, 127
        %v759 = vshll.u32 %v758, 23
        %v760 = vor.u32 4788187, %v759
        %v761 = vand.u32 2147483647, %v760
        %v763 = vcvt.s32.f32 %v756
        %v764 = vmul.f32 %v763, %v761
        %v765 = vxor.u32 %v764, 2147483648
        %v766 = vsel %vm683, %v765, %v764
        %v767 = vsub.s32 4, %v743
        %v768 = vsel %vm683, %v767, %v743
        %v769 = vsel %vm682, %v301, %v766
        %v770 = vsel %vm682, 0, %v768
        %v771 = vcosq.f32.pop %v769
        %v772 = vsinq.f32.pop %v769
        %vm773 = vweird.f32 %v301
        %v774 = vadd.s32 %v770, 3
        %v775 = vand.u32 %v774, 3
        %vm776 = vcmp.lt.s32.totalorder %v775, 2
        %vm777 = vcmp.eq.s32.totalorder %v775, 0
        %v778 = vxor.u32 %v772, 2147483648
        %v779 = vsel %vm777, %v771, %v778
        %vm780 = vcmp.eq.s32.totalorder %v775, 2
        %v781 = vxor.u32 %v771, 2147483648
        %v782 = vsel %vm780, %v781, %v772
        %v783 = vsel %vm776, %v779, %v782
        %v784 = vsel %vm773, nan, %v783
        %v785 = vand.u32 2147483647, %v306
        %vm786 = vcmp.le.f32.partialorder %v785, 0.7853982
        %vm787 = vcmp.lt.s32.totalorder %v306, 0
        %v788 = vand.u32 %v306, 2139095040
        %v789 = vshrl.u32 %v788, 23
        %v790 = vsub.s32 %v789, 127
        %v791 = vand.u32 2147483647, %v306
        %v792 = vand.u32 %v791, 8388607
        %v793 = vor.u32 %v792, 8388608
        %v794 = vsub.s32 0, %v793
        %v795 = vadd.s32 %v790, 1
        %vm796 = vcmp.gt.s32.totalorder %v795, 0
        %v797 = vsel %vm796, %v795, 0
        %v798 = vshrl.u32 %v797, 5
        %v799 = vand.u32 %v797, 31
        %v800 = vsub.s32 32, %v799
        %v801 = vshrl.u32 683565275, %v800
        %v802 = vshll.u32 683565275, %v799
        %v803 = vshrl.u32 2475754826, %v800
        %v804 = vor.u32 %v802, %v803
        %v805 = vshll.u32 2475754826, %v799
        %v806 = vshrl.u32 2131351028, %v800
        %v807 = vor.u32 %v805, %v806
        %v808 = vshll.u32 2131351028, %v799
        %v809 = vshrl.u32 2102212464, %v800
        %v810 = vor.u32 %v808, %v809
        %v811 = vshll.u32 2102212464, %v799
        %v812 = vshrl.u32 920167782, %v800
        %v813 = vor.u32 %v811, %v812
        %v814 = vshll.u32 920167782, %v799
        %v815 = vshrl.u32 1326507024, %v800
        %v816 = vor.u32 %v814, %v815
        %vm817 = vcmp.lt.s32.totalorder %v798, 1
        %vm818 = vcmp.lt.s32.totalorder %v798, 2
        %vm819 = vcmp.lt.s32.totalorder %v798, 3
        %vm820 = vcmp.lt.s32.totalorder %v798, 4
        %v821 = vsel %vm817, %v801, %v804
        %v822 = vsel %vm820, %v810, 2102212464
        %v823 = vsel %vm819, %v807, %v822
        %v824 = vsel %vm818, %v821, %v823
        %v825 = vsel %vm817, %v804, %v807
        %v826 = vsel %vm820, %v813, 920167782
        %v827 = vsel %vm819, %v810, %v826
        %v828 = vsel %vm818, %v825, %v827
        %v829 = vsel %vm817, %v807, %v810
        %v830 = vsel %vm820, %v816, 1326507024
        %v831 = vsel %vm819, %v813, %v830
        %v832 = vsel %vm818, %v829, %v831
        %v833 = vshll.u32 %v793, 8
        %v834 = vmul.u32.u64.compose %v833, %v832
        %v835 = vextract.low.u32 %v834
        %v836 = vextract.high.u32 %v834
        %v837 = vmul.u32.u64.compose %v833, %v828
        %v838 = vextract.low.u32 %v837
        %v839 = vextract.high.u32 %v837
        %v840 = vmul.u32 %v833, %v824
        %v841 = vadd.s32 %v836, %v838
        %vm842 = vc.u32 %v836, %v838
        %v843 = vadd.s32 %v839, 1
        %v844 = vsel %vm842, %v843, %v839
        %v845 = vadd.s32 %v840, %v844
        %v846 = vadd.s32 %v845, 536870912
        %v847 = vshrl.u32 %v846, 30
        %v848 = vshll.u32 %v847, 30
        %v849 = vsub.s32 %v845, %v848
        %vm850 = vcmp.lt.s32.totalorder %v849, 0
        %v851 = vsub.s32 0, %v849
        %v852 = vsel %vm850, %v851, %v849
        %v853 = vclz %v852
        %v854 = vsub.s32 %v853, 2
        %vm855 = vcmp.gt.s32.totalorder 0, %v854
        %v856 = vsel %vm855, 0, %v854
        %v857 = vsub.s32 32, %v856
        %v858 = vshll.u32 %v849, %v856
        %v859 = vshrl.u32 %v841, %v857
        %v860 = vor.u32 %v858, %v859
        %v861 = vsub.s32 4294967266, %v856
        %v862 = vadd.s32 %v861, 127
        %v863 = vshll.u32 %v862, 23
        %v864 = vor.u32 4788187, %v863
        %v865 = vand.u32 2147483647, %v864
        %v867 = vcvt.s32.f32 %v860
        %v868 = vmul.f32 %v867, %v865
        %v869 = vxor.u32 %v868, 2147483648
        %v870 = vsel %vm787, %v869, %v868
        %v871 = vsub.s32 4, %v847
        %v872 = vsel %vm787, %v871, %v847
        %v873 = vsel %vm786, %v306, %v870
        %v874 = vsel %vm786, 0, %v872
        %v875 = vcosq.f32.pop %v873
        %v876 = vsinq.f32.pop %v873
        %vm877 = vweird.f32 %v306
        %v878 = vadd.s32 %v874, 3
        %v879 = vand.u32 %v878, 3
        %vm880 = vcmp.lt.s32.totalorder %v879, 2
        %vm881 = vcmp.eq.s32.totalorder %v879, 0
        %v882 = vxor.u32 %v876, 2147483648
        %v883 = vsel %vm881, %v875, %v882
        %vm884 = vcmp.eq.s32.totalorder %v879, 2
        %v885 = vxor.u32 %v875, 2147483648
        %v886 = vsel %vm884, %v885, %v876
        %v887 = vsel %vm880, %v883, %v886
        %v888 = vsel %vm877, nan, %v887
        %v889 = vand.u32 2147483647, %v311
        %vm890 = vcmp.le.f32.partialorder %v889, 0.7853982
        %vm891 = vcmp.lt.s32.totalorder %v311, 0
        %v892 = vand.u32 %v311, 2139095040
        %v893 = vshrl.u32 %v892, 23
        %v894 = vsub.s32 %v893, 127
        %v895 = vand.u32 2147483647, %v311
        %v896 = vand.u32 %v895, 8388607
        %v897 = vor.u32 %v896, 8388608
        %v898 = vsub.s32 0, %v897
        %v899 = vadd.s32 %v894, 1
        %vm900 = vcmp.gt.s32.totalorder %v899, 0
        %v901 = vsel %vm900, %v899, 0
        %v902 = vshrl.u32 %v901, 5
        %v903 = vand.u32 %v901, 31
        %v904 = vsub.s32 32, %v903
        %v905 = vshrl.u32 683565275, %v904
        %v906 = vshll.u32 683565275, %v903
        %v907 = vshrl.u32 2475754826, %v904
        %v908 = vor.u32 %v906, %v907
        %v909 = vshll.u32 2475754826, %v903
        %v910 = vshrl.u32 2131351028, %v904
        %v911 = vor.u32 %v909, %v910
        %v912 = vshll.u32 2131351028, %v903
        %v913 = vshrl.u32 2102212464, %v904
        %v914 = vor.u32 %v912, %v913
        %v915 = vshll.u32 2102212464, %v903
        %v916 = vshrl.u32 920167782, %v904
        %v917 = vor.u32 %v915, %v916
        %v918 = vshll.u32 920167782, %v903
        %v919 = vshrl.u32 1326507024, %v904
        %v920 = vor.u32 %v918, %v919
        %vm921 = vcmp.lt.s32.totalorder %v902, 1
        %vm922 = vcmp.lt.s32.totalorder %v902, 2
        %vm923 = vcmp.lt.s32.totalorder %v902, 3
        %vm924 = vcmp.lt.s32.totalorder %v902, 4
        %v925 = vsel %vm921, %v905, %v908
        %v926 = vsel %vm924, %v914, 2102212464
        %v927 = vsel %vm923, %v911, %v926
        %v928 = vsel %vm922, %v925, %v927
        %v929 = vsel %vm921, %v908, %v911
        %v930 = vsel %vm924, %v917, 920167782
        %v931 = vsel %vm923, %v914, %v930
        %v932 = vsel %vm922, %v929, %v931
        %v933 = vsel %vm921, %v911, %v914
        %v934 = vsel %vm924, %v920, 1326507024
        %v935 = vsel %vm923, %v917, %v934
        %v936 = vsel %vm922, %v933, %v935
        %v937 = vshll.u32 %v897, 8
        %v938 = vmul.u32.u64.compose %v937, %v936
        %v939 = vextract.low.u32 %v938
        %v940 = vextract.high.u32 %v938
        %v941 = vmul.u32.u64.compose %v937, %v932
        %v942 = vextract.low.u32 %v941
        %v943 = vextract.high.u32 %v941
        %v944 = vmul.u32 %v937, %v928
        %v945 = vadd.s32 %v940, %v942
        %vm946 = vc.u32 %v940, %v942
        %v947 = vadd.s32 %v943, 1
        %v948 = vsel %vm946, %v947, %v943
        %v949 = vadd.s32 %v944, %v948
        %v950 = vadd.s32 %v949, 536870912
        %v951 = vshrl.u32 %v950, 30
        %v952 = vshll.u32 %v951, 30
        %v953 = vsub.s32 %v949, %v952
        %vm954 = vcmp.lt.s32.totalorder %v953, 0
        %v955 = vsub.s32 0, %v953
        %v956 = vsel %vm954, %v955, %v953
        %v957 = vclz %v956
        %v958 = vsub.s32 %v957, 2
        %vm959 = vcmp.gt.s32.totalorder 0, %v958
        %v960 = vsel %vm959, 0, %v958
        %v961 = vsub.s32 32, %v960
        %v962 = vshll.u32 %v953, %v960
        %v963 = vshrl.u32 %v945, %v961
        %v964 = vor.u32 %v962, %v963
        %v965 = vsub.s32 4294967266, %v960
        %v966 = vadd.s32 %v965, 127
        %v967 = vshll.u32 %v966, 23
        %v968 = vor.u32 4788187, %v967
        %v969 = vand.u32 2147483647, %v968
        %v971 = vcvt.s32.f32 %v964
        %v972 = vmul.f32 %v971, %v969
        %v973 = vxor.u32 %v972, 2147483648
        %v974 = vsel %vm891, %v973, %v972
        %v975 = vsub.s32 4, %v951
        %v976 = vsel %vm891, %v975, %v951
        %v977 = vsel %vm890, %v311, %v974
        %v978 = vsel %vm890, 0, %v976
        %v979 = vcosq.f32.pop %v977
        %v980 = vsinq.f32.pop %v977
        %vm981 = vweird.f32 %v311
        %v982 = vadd.s32 %v978, 3
        %v983 = vand.u32 %v982, 3
        %vm984 = vcmp.lt.s32.totalorder %v983, 2
        %vm985 = vcmp.eq.s32.totalorder %v983, 0
        %v986 = vxor.u32 %v980, 2147483648
        %v987 = vsel %vm985, %v979, %v986
        %vm988 = vcmp.eq.s32.totalorder %v983, 2
        %v989 = vxor.u32 %v979, 2147483648
        %v990 = vsel %vm988, %v989, %v980
        %v991 = vsel %vm984, %v987, %v990
        %v992 = vsel %vm981, nan, %v991
        %v993 = vand.u32 2147483647, %v316
        %vm994 = vcmp.le.f32.partialorder %v993, 0.7853982
        %vm995 = vcmp.lt.s32.totalorder %v316, 0
        %v996 = vand.u32 %v316, 2139095040
        %v997 = vshrl.u32 %v996, 23
        %v998 = vsub.s32 %v997, 127
        %v999 = vand.u32 2147483647, %v316
        %v1000 = vand.u32 %v999, 8388607
        %v1001 = vor.u32 %v1000, 8388608
        %v1002 = vsub.s32 0, %v1001
        %v1003 = vadd.s32 %v998, 1
        %vm1004 = vcmp.gt.s32.totalorder %v1003, 0
        %v1005 = vsel %vm1004, %v1003, 0
        %v1006 = vshrl.u32 %v1005, 5
        %v1007 = vand.u32 %v1005, 31
        %v1008 = vsub.s32 32, %v1007
        %v1009 = vshrl.u32 683565275, %v1008
        %v1010 = vshll.u32 683565275, %v1007
        %v1011 = vshrl.u32 2475754826, %v1008
        %v1012 = vor.u32 %v1010, %v1011
        %v1013 = vshll.u32 2475754826, %v1007
        %v1014 = vshrl.u32 2131351028, %v1008
        %v1015 = vor.u32 %v1013, %v1014
        %v1016 = vshll.u32 2131351028, %v1007
        %v1017 = vshrl.u32 2102212464, %v1008
        %v1018 = vor.u32 %v1016, %v1017
        %v1019 = vshll.u32 2102212464, %v1007
        %v1020 = vshrl.u32 920167782, %v1008
        %v1021 = vor.u32 %v1019, %v1020
        %v1022 = vshll.u32 920167782, %v1007
        %v1023 = vshrl.u32 1326507024, %v1008
        %v1024 = vor.u32 %v1022, %v1023
        %vm1025 = vcmp.lt.s32.totalorder %v1006, 1
        %vm1026 = vcmp.lt.s32.totalorder %v1006, 2
        %vm1027 = vcmp.lt.s32.totalorder %v1006, 3
        %vm1028 = vcmp.lt.s32.totalorder %v1006, 4
        %v1029 = vsel %vm1025, %v1009, %v1012
        %v1030 = vsel %vm1028, %v1018, 2102212464
        %v1031 = vsel %vm1027, %v1015, %v1030
        %v1032 = vsel %vm1026, %v1029, %v1031
        %v1033 = vsel %vm1025, %v1012, %v1015
        %v1034 = vsel %vm1028, %v1021, 920167782
        %v1035 = vsel %vm1027, %v1018, %v1034
        %v1036 = vsel %vm1026, %v1033, %v1035
        %v1037 = vsel %vm1025, %v1015, %v1018
        %v1038 = vsel %vm1028, %v1024, 1326507024
        %v1039 = vsel %vm1027, %v1021, %v1038
        %v1040 = vsel %vm1026, %v1037, %v1039
        %v1041 = vshll.u32 %v1001, 8
        %v1042 = vmul.u32.u64.compose %v1041, %v1040
        %v1043 = vextract.low.u32 %v1042
        %v1044 = vextract.high.u32 %v1042
        %v1045 = vmul.u32.u64.compose %v1041, %v1036
        %v1046 = vextract.low.u32 %v1045
        %v1047 = vextract.high.u32 %v1045
        %v1048 = vmul.u32 %v1041, %v1032
        %v1049 = vadd.s32 %v1044, %v1046
        %vm1050 = vc.u32 %v1044, %v1046
        %v1051 = vadd.s32 %v1047, 1
        %v1052 = vsel %vm1050, %v1051, %v1047
        %v1053 = vadd.s32 %v1048, %v1052
        %v1054 = vadd.s32 %v1053, 536870912
        %v1055 = vshrl.u32 %v1054, 30
        %v1056 = vshll.u32 %v1055, 30
        %v1057 = vsub.s32 %v1053, %v1056
        %vm1058 = vcmp.lt.s32.totalorder %v1057, 0
        %v1059 = vsub.s32 0, %v1057
        %v1060 = vsel %vm1058, %v1059, %v1057
        %v1061 = vclz %v1060
        %v1062 = vsub.s32 %v1061, 2
        %vm1063 = vcmp.gt.s32.totalorder 0, %v1062
        %v1064 = vsel %vm1063, 0, %v1062
        %v1065 = vsub.s32 32, %v1064
        %v1066 = vshll.u32 %v1057, %v1064
        %v1067 = vshrl.u32 %v1049, %v1065
        %v1068 = vor.u32 %v1066, %v1067
        %v1069 = vsub.s32 4294967266, %v1064
        %v1070 = vadd.s32 %v1069, 127
        %v1071 = vshll.u32 %v1070, 23
        %v1072 = vor.u32 4788187, %v1071
        %v1073 = vand.u32 2147483647, %v1072
        %v1075 = vcvt.s32.f32 %v1068
        %v1076 = vmul.f32 %v1075, %v1073
        %v1077 = vxor.u32 %v1076, 2147483648
        %v1078 = vsel %vm995, %v1077, %v1076
        %v1079 = vsub.s32 4, %v1055
        %v1080 = vsel %vm995, %v1079, %v1055
        %v1081 = vsel %vm994, %v316, %v1078
        %v1082 = vsel %vm994, 0, %v1080
        %v1083 = vcosq.f32.pop %v1081
        %v1084 = vsinq.f32.pop %v1081
        %vm1085 = vweird.f32 %v316
        %v1086 = vadd.s32 %v1082, 3
        %v1087 = vand.u32 %v1086, 3
        %vm1088 = vcmp.lt.s32.totalorder %v1087, 2
        %vm1089 = vcmp.eq.s32.totalorder %v1087, 0
        %v1090 = vxor.u32 %v1084, 2147483648
        %v1091 = vsel %vm1089, %v1083, %v1090
        %vm1092 = vcmp.eq.s32.totalorder %v1087, 2
        %v1093 = vxor.u32 %v1083, 2147483648
        %v1094 = vsel %vm1092, %v1093, %v1084
        %v1095 = vsel %vm1088, %v1091, %v1094
        %v1096 = vsel %vm1085, nan, %v1095
        %v1097 = vand.u32 2147483647, %v321
        %vm1098 = vcmp.le.f32.partialorder %v1097, 0.7853982
        %vm1099 = vcmp.lt.s32.totalorder %v321, 0
        %v1100 = vand.u32 %v321, 2139095040
        %v1101 = vshrl.u32 %v1100, 23
        %v1102 = vsub.s32 %v1101, 127
        %v1103 = vand.u32 2147483647, %v321
        %v1104 = vand.u32 %v1103, 8388607
        %v1105 = vor.u32 %v1104, 8388608
        %v1106 = vsub.s32 0, %v1105
        %v1107 = vadd.s32 %v1102, 1
        %vm1108 = vcmp.gt.s32.totalorder %v1107, 0
        %v1109 = vsel %vm1108, %v1107, 0
        %v1110 = vshrl.u32 %v1109, 5
        %v1111 = vand.u32 %v1109, 31
        %v1112 = vsub.s32 32, %v1111
        %v1113 = vshrl.u32 683565275, %v1112
        %v1114 = vshll.u32 683565275, %v1111
        %v1115 = vshrl.u32 2475754826, %v1112
        %v1116 = vor.u32 %v1114, %v1115
        %v1117 = vshll.u32 2475754826, %v1111
        %v1118 = vshrl.u32 2131351028, %v1112
        %v1119 = vor.u32 %v1117, %v1118
        %v1120 = vshll.u32 2131351028, %v1111
        %v1121 = vshrl.u32 2102212464, %v1112
        %v1122 = vor.u32 %v1120, %v1121
        %v1123 = vshll.u32 2102212464, %v1111
        %v1124 = vshrl.u32 920167782, %v1112
        %v1125 = vor.u32 %v1123, %v1124
        %v1126 = vshll.u32 920167782, %v1111
        %v1127 = vshrl.u32 1326507024, %v1112
        %v1128 = vor.u32 %v1126, %v1127
        %vm1129 = vcmp.lt.s32.totalorder %v1110, 1
        %vm1130 = vcmp.lt.s32.totalorder %v1110, 2
        %vm1131 = vcmp.lt.s32.totalorder %v1110, 3
        %vm1132 = vcmp.lt.s32.totalorder %v1110, 4
        %v1133 = vsel %vm1129, %v1113, %v1116
        %v1134 = vsel %vm1132, %v1122, 2102212464
        %v1135 = vsel %vm1131, %v1119, %v1134
        %v1136 = vsel %vm1130, %v1133, %v1135
        %v1137 = vsel %vm1129, %v1116, %v1119
        %v1138 = vsel %vm1132, %v1125, 920167782
        %v1139 = vsel %vm1131, %v1122, %v1138
        %v1140 = vsel %vm1130, %v1137, %v1139
        %v1141 = vsel %vm1129, %v1119, %v1122
        %v1142 = vsel %vm1132, %v1128, 1326507024
        %v1143 = vsel %vm1131, %v1125, %v1142
        %v1144 = vsel %vm1130, %v1141, %v1143
        %v1145 = vshll.u32 %v1105, 8
        %v1146 = vmul.u32.u64.compose %v1145, %v1144
        %v1147 = vextract.low.u32 %v1146
        %v1148 = vextract.high.u32 %v1146
        %v1149 = vmul.u32.u64.compose %v1145, %v1140
        %v1150 = vextract.low.u32 %v1149
        %v1151 = vextract.high.u32 %v1149
        %v1152 = vmul.u32 %v1145, %v1136
        %v1153 = vadd.s32 %v1148, %v1150
        %vm1154 = vc.u32 %v1148, %v1150
        %v1155 = vadd.s32 %v1151, 1
        %v1156 = vsel %vm1154, %v1155, %v1151
        %v1157 = vadd.s32 %v1152, %v1156
        %v1158 = vadd.s32 %v1157, 536870912
        %v1159 = vshrl.u32 %v1158, 30
        %v1160 = vshll.u32 %v1159, 30
        %v1161 = vsub.s32 %v1157, %v1160
        %vm1162 = vcmp.lt.s32.totalorder %v1161, 0
        %v1163 = vsub.s32 0, %v1161
        %v1164 = vsel %vm1162, %v1163, %v1161
        %v1165 = vclz %v1164
        %v1166 = vsub.s32 %v1165, 2
        %vm1167 = vcmp.gt.s32.totalorder 0, %v1166
        %v1168 = vsel %vm1167, 0, %v1166
        %v1169 = vsub.s32 32, %v1168
        %v1170 = vshll.u32 %v1161, %v1168
        %v1171 = vshrl.u32 %v1153, %v1169
        %v1172 = vor.u32 %v1170, %v1171
        %v1173 = vsub.s32 4294967266, %v1168
        %v1174 = vadd.s32 %v1173, 127
        %v1175 = vshll.u32 %v1174, 23
        %v1176 = vor.u32 4788187, %v1175
        %v1177 = vand.u32 2147483647, %v1176
        %v1179 = vcvt.s32.f32 %v1172
        %v1180 = vmul.f32 %v1179, %v1177
        %v1181 = vxor.u32 %v1180, 2147483648
        %v1182 = vsel %vm1099, %v1181, %v1180
        %v1183 = vsub.s32 4, %v1159
        %v1184 = vsel %vm1099, %v1183, %v1159
        %v1185 = vsel %vm1098, %v321, %v1182
        %v1186 = vsel %vm1098, 0, %v1184
        %v1187 = vcosq.f32.pop %v1185
        %v1188 = vsinq.f32.pop %v1185
        %vm1189 = vweird.f32 %v321
        %v1190 = vadd.s32 %v1186, 3
        %v1191 = vand.u32 %v1190, 3
        %vm1192 = vcmp.lt.s32.totalorder %v1191, 2
        %vm1193 = vcmp.eq.s32.totalorder %v1191, 0
        %v1194 = vxor.u32 %v1188, 2147483648
        %v1195 = vsel %vm1193, %v1187, %v1194
        %vm1196 = vcmp.eq.s32.totalorder %v1191, 2
        %v1197 = vxor.u32 %v1187, 2147483648
        %v1198 = vsel %vm1196, %v1197, %v1188
        %v1199 = vsel %vm1192, %v1195, %v1198
        %v1200 = vsel %vm1189, nan, %v1199
        %v1201 = vand.u32 2147483647, %v326
        %vm1202 = vcmp.le.f32.partialorder %v1201, 0.7853982
        %vm1203 = vcmp.lt.s32.totalorder %v326, 0
        %v1204 = vand.u32 %v326, 2139095040
        %v1205 = vshrl.u32 %v1204, 23
        %v1206 = vsub.s32 %v1205, 127
        %v1207 = vand.u32 2147483647, %v326
        %v1208 = vand.u32 %v1207, 8388607
        %v1209 = vor.u32 %v1208, 8388608
        %v1210 = vsub.s32 0, %v1209
        %v1211 = vadd.s32 %v1206, 1
        %vm1212 = vcmp.gt.s32.totalorder %v1211, 0
        %v1213 = vsel %vm1212, %v1211, 0
        %v1214 = vshrl.u32 %v1213, 5
        %v1215 = vand.u32 %v1213, 31
        %v1216 = vsub.s32 32, %v1215
        %v1217 = vshrl.u32 683565275, %v1216
        %v1218 = vshll.u32 683565275, %v1215
        %v1219 = vshrl.u32 2475754826, %v1216
        %v1220 = vor.u32 %v1218, %v1219
        %v1221 = vshll.u32 2475754826, %v1215
        %v1222 = vshrl.u32 2131351028, %v1216
        %v1223 = vor.u32 %v1221, %v1222
        %v1224 = vshll.u32 2131351028, %v1215
        %v1225 = vshrl.u32 2102212464, %v1216
        %v1226 = vor.u32 %v1224, %v1225
        %v1227 = vshll.u32 2102212464, %v1215
        %v1228 = vshrl.u32 920167782, %v1216
        %v1229 = vor.u32 %v1227, %v1228
        %v1230 = vshll.u32 920167782, %v1215
        %v1231 = vshrl.u32 1326507024, %v1216
        %v1232 = vor.u32 %v1230, %v1231
        %vm1233 = vcmp.lt.s32.totalorder %v1214, 1
        %vm1234 = vcmp.lt.s32.totalorder %v1214, 2
        %vm1235 = vcmp.lt.s32.totalorder %v1214, 3
        %vm1236 = vcmp.lt.s32.totalorder %v1214, 4
        %v1237 = vsel %vm1233, %v1217, %v1220
        %v1238 = vsel %vm1236, %v1226, 2102212464
        %v1239 = vsel %vm1235, %v1223, %v1238
        %v1240 = vsel %vm1234, %v1237, %v1239
        %v1241 = vsel %vm1233, %v1220, %v1223
        %v1242 = vsel %vm1236, %v1229, 920167782
        %v1243 = vsel %vm1235, %v1226, %v1242
        %v1244 = vsel %vm1234, %v1241, %v1243
        %v1245 = vsel %vm1233, %v1223, %v1226
        %v1246 = vsel %vm1236, %v1232, 1326507024
        %v1247 = vsel %vm1235, %v1229, %v1246
        %v1248 = vsel %vm1234, %v1245, %v1247
        %v1249 = vshll.u32 %v1209, 8
        %v1250 = vmul.u32.u64.compose %v1249, %v1248
        %v1251 = vextract.low.u32 %v1250
        %v1252 = vextract.high.u32 %v1250
        %v1253 = vmul.u32.u64.compose %v1249, %v1244
        %v1254 = vextract.low.u32 %v1253
        %v1255 = vextract.high.u32 %v1253
        %v1256 = vmul.u32 %v1249, %v1240
        %v1257 = vadd.s32 %v1252, %v1254
        %vm1258 = vc.u32 %v1252, %v1254
        %v1259 = vadd.s32 %v1255, 1
        %v1260 = vsel %vm1258, %v1259, %v1255
        %v1261 = vadd.s32 %v1256, %v1260
        %v1262 = vadd.s32 %v1261, 536870912
        %v1263 = vshrl.u32 %v1262, 30
        %v1264 = vshll.u32 %v1263, 30
        %v1265 = vsub.s32 %v1261, %v1264
        %vm1266 = vcmp.lt.s32.totalorder %v1265, 0
        %v1267 = vsub.s32 0, %v1265
        %v1268 = vsel %vm1266, %v1267, %v1265
        %v1269 = vclz %v1268
        %v1270 = vsub.s32 %v1269, 2
        %vm1271 = vcmp.gt.s32.totalorder 0, %v1270
        %v1272 = vsel %vm1271, 0, %v1270
        %v1273 = vsub.s32 32, %v1272
        %v1274 = vshll.u32 %v1265, %v1272
        %v1275 = vshrl.u32 %v1257, %v1273
        %v1276 = vor.u32 %v1274, %v1275
        %v1277 = vsub.s32 4294967266, %v1272
        %v1278 = vadd.s32 %v1277, 127
        %v1279 = vshll.u32 %v1278, 23
        %v1280 = vor.u32 4788187, %v1279
        %v1281 = vand.u32 2147483647, %v1280
        %v1283 = vcvt.s32.f32 %v1276
        %v1284 = vmul.f32 %v1283, %v1281
        %v1285 = vxor.u32 %v1284, 2147483648
        %v1286 = vsel %vm1203, %v1285, %v1284
        %v1287 = vsub.s32 4, %v1263
        %v1288 = vsel %vm1203, %v1287, %v1263
        %v1289 = vsel %vm1202, %v326, %v1286
        %v1290 = vsel %vm1202, 0, %v1288
        %v1291 = vcosq.f32.pop %v1289
        %v1292 = vsinq.f32.pop %v1289
        %vm1293 = vweird.f32 %v326
        %v1294 = vadd.s32 %v1290, 3
        %v1295 = vand.u32 %v1294, 3
        %vm1296 = vcmp.lt.s32.totalorder %v1295, 2
        %vm1297 = vcmp.eq.s32.totalorder %v1295, 0
        %v1298 = vxor.u32 %v1292, 2147483648
        %v1299 = vsel %vm1297, %v1291, %v1298
        %vm1300 = vcmp.eq.s32.totalorder %v1295, 2
        %v1301 = vxor.u32 %v1291, 2147483648
        %v1302 = vsel %vm1300, %v1301, %v1292
        %v1303 = vsel %vm1296, %v1299, %v1302
        %v1304 = vsel %vm1293, nan, %v1303
        %v1305 = vand.u32 2147483647, %v331
        %vm1306 = vcmp.le.f32.partialorder %v1305, 0.7853982
        %vm1307 = vcmp.lt.s32.totalorder %v331, 0
        %v1308 = vand.u32 %v331, 2139095040
        %v1309 = vshrl.u32 %v1308, 23
        %v1310 = vsub.s32 %v1309, 127
        %v1311 = vand.u32 2147483647, %v331
        %v1312 = vand.u32 %v1311, 8388607
        %v1313 = vor.u32 %v1312, 8388608
        %v1314 = vsub.s32 0, %v1313
        %v1315 = vadd.s32 %v1310, 1
        %vm1316 = vcmp.gt.s32.totalorder %v1315, 0
        %v1317 = vsel %vm1316, %v1315, 0
        %v1318 = vshrl.u32 %v1317, 5
        %v1319 = vand.u32 %v1317, 31
        %v1320 = vsub.s32 32, %v1319
        %v1321 = vshrl.u32 683565275, %v1320
        %v1322 = vshll.u32 683565275, %v1319
        %v1323 = vshrl.u32 2475754826, %v1320
        %v1324 = vor.u32 %v1322, %v1323
        %v1325 = vshll.u32 2475754826, %v1319
        %v1326 = vshrl.u32 2131351028, %v1320
        %v1327 = vor.u32 %v1325, %v1326
        %v1328 = vshll.u32 2131351028, %v1319
        %v1329 = vshrl.u32 2102212464, %v1320
        %v1330 = vor.u32 %v1328, %v1329
        %v1331 = vshll.u32 2102212464, %v1319
        %v1332 = vshrl.u32 920167782, %v1320
        %v1333 = vor.u32 %v1331, %v1332
        %v1334 = vshll.u32 920167782, %v1319
        %v1335 = vshrl.u32 1326507024, %v1320
        %v1336 = vor.u32 %v1334, %v1335
        %vm1337 = vcmp.lt.s32.totalorder %v1318, 1
        %vm1338 = vcmp.lt.s32.totalorder %v1318, 2
        %vm1339 = vcmp.lt.s32.totalorder %v1318, 3
        %vm1340 = vcmp.lt.s32.totalorder %v1318, 4
        %v1341 = vsel %vm1337, %v1321, %v1324
        %v1342 = vsel %vm1340, %v1330, 2102212464
        %v1343 = vsel %vm1339, %v1327, %v1342
        %v1344 = vsel %vm1338, %v1341, %v1343
        %v1345 = vsel %vm1337, %v1324, %v1327
        %v1346 = vsel %vm1340, %v1333, 920167782
        %v1347 = vsel %vm1339, %v1330, %v1346
        %v1348 = vsel %vm1338, %v1345, %v1347
        %v1349 = vsel %vm1337, %v1327, %v1330
        %v1350 = vsel %vm1340, %v1336, 1326507024
        %v1351 = vsel %vm1339, %v1333, %v1350
        %v1352 = vsel %vm1338, %v1349, %v1351
        %v1353 = vshll.u32 %v1313, 8
        %v1354 = vmul.u32.u64.compose %v1353, %v1352
        %v1355 = vextract.low.u32 %v1354
        %v1356 = vextract.high.u32 %v1354
        %v1357 = vmul.u32.u64.compose %v1353, %v1348
        %v1358 = vextract.low.u32 %v1357
        %v1359 = vextract.high.u32 %v1357
        %v1360 = vmul.u32 %v1353, %v1344
        %v1361 = vadd.s32 %v1356, %v1358
        %vm1362 = vc.u32 %v1356, %v1358
        %v1363 = vadd.s32 %v1359, 1
        %v1364 = vsel %vm1362, %v1363, %v1359
        %v1365 = vadd.s32 %v1360, %v1364
        %v1366 = vadd.s32 %v1365, 536870912
        %v1367 = vshrl.u32 %v1366, 30
        %v1368 = vshll.u32 %v1367, 30
        %v1369 = vsub.s32 %v1365, %v1368
        %vm1370 = vcmp.lt.s32.totalorder %v1369, 0
        %v1371 = vsub.s32 0, %v1369
        %v1372 = vsel %vm1370, %v1371, %v1369
        %v1373 = vclz %v1372
        %v1374 = vsub.s32 %v1373, 2
        %vm1375 = vcmp.gt.s32.totalorder 0, %v1374
        %v1376 = vsel %vm1375, 0, %v1374
        %v1377 = vsub.s32 32, %v1376
        %v1378 = vshll.u32 %v1369, %v1376
        %v1379 = vshrl.u32 %v1361, %v1377
        %v1380 = vor.u32 %v1378, %v1379
        %v1381 = vsub.s32 4294967266, %v1376
        %v1382 = vadd.s32 %v1381, 127
        %v1383 = vshll.u32 %v1382, 23
        %v1384 = vor.u32 4788187, %v1383
        %v1385 = vand.u32 2147483647, %v1384
        %v1387 = vcvt.s32.f32 %v1380
        %v1388 = vmul.f32 %v1387, %v1385
        %v1389 = vxor.u32 %v1388, 2147483648
        %v1390 = vsel %vm1307, %v1389, %v1388
        %v1391 = vsub.s32 4, %v1367
        %v1392 = vsel %vm1307, %v1391, %v1367
        %v1393 = vsel %vm1306, %v331, %v1390
        %v1394 = vsel %vm1306, 0, %v1392
        %v1395 = vcosq.f32.pop %v1393
        %v1396 = vsinq.f32.pop %v1393
        %vm1397 = vweird.f32 %v331
        %v1398 = vadd.s32 %v1394, 3
        %v1399 = vand.u32 %v1398, 3
        %vm1400 = vcmp.lt.s32.totalorder %v1399, 2
        %vm1401 = vcmp.eq.s32.totalorder %v1399, 0
        %v1402 = vxor.u32 %v1396, 2147483648
        %v1403 = vsel %vm1401, %v1395, %v1402
        %vm1404 = vcmp.eq.s32.totalorder %v1399, 2
        %v1405 = vxor.u32 %v1395, 2147483648
        %v1406 = vsel %vm1404, %v1405, %v1396
        %v1407 = vsel %vm1400, %v1403, %v1406
        %v1408 = vsel %vm1397, nan, %v1407
        %v1409 = vand.u32 2147483647, %v336
        %vm1410 = vcmp.le.f32.partialorder %v1409, 0.7853982
        %vm1411 = vcmp.lt.s32.totalorder %v336, 0
        %v1412 = vand.u32 %v336, 2139095040
        %v1413 = vshrl.u32 %v1412, 23
        %v1414 = vsub.s32 %v1413, 127
        %v1415 = vand.u32 2147483647, %v336
        %v1416 = vand.u32 %v1415, 8388607
        %v1417 = vor.u32 %v1416, 8388608
        %v1418 = vsub.s32 0, %v1417
        %v1419 = vadd.s32 %v1414, 1
        %vm1420 = vcmp.gt.s32.totalorder %v1419, 0
        %v1421 = vsel %vm1420, %v1419, 0
        %v1422 = vshrl.u32 %v1421, 5
        %v1423 = vand.u32 %v1421, 31
        %v1424 = vsub.s32 32, %v1423
        %v1425 = vshrl.u32 683565275, %v1424
        %v1426 = vshll.u32 683565275, %v1423
        %v1427 = vshrl.u32 2475754826, %v1424
        %v1428 = vor.u32 %v1426, %v1427
        %v1429 = vshll.u32 2475754826, %v1423
        %v1430 = vshrl.u32 2131351028, %v1424
        %v1431 = vor.u32 %v1429, %v1430
        %v1432 = vshll.u32 2131351028, %v1423
        %v1433 = vshrl.u32 2102212464, %v1424
        %v1434 = vor.u32 %v1432, %v1433
        %v1435 = vshll.u32 2102212464, %v1423
        %v1436 = vshrl.u32 920167782, %v1424
        %v1437 = vor.u32 %v1435, %v1436
        %v1438 = vshll.u32 920167782, %v1423
        %v1439 = vshrl.u32 1326507024, %v1424
        %v1440 = vor.u32 %v1438, %v1439
        %vm1441 = vcmp.lt.s32.totalorder %v1422, 1
        %vm1442 = vcmp.lt.s32.totalorder %v1422, 2
        %vm1443 = vcmp.lt.s32.totalorder %v1422, 3
        %vm1444 = vcmp.lt.s32.totalorder %v1422, 4
        %v1445 = vsel %vm1441, %v1425, %v1428
        %v1446 = vsel %vm1444, %v1434, 2102212464
        %v1447 = vsel %vm1443, %v1431, %v1446
        %v1448 = vsel %vm1442, %v1445, %v1447
        %v1449 = vsel %vm1441, %v1428, %v1431
        %v1450 = vsel %vm1444, %v1437, 920167782
        %v1451 = vsel %vm1443, %v1434, %v1450
        %v1452 = vsel %vm1442, %v1449, %v1451
        %v1453 = vsel %vm1441, %v1431, %v1434
        %v1454 = vsel %vm1444, %v1440, 1326507024
        %v1455 = vsel %vm1443, %v1437, %v1454
        %v1456 = vsel %vm1442, %v1453, %v1455
        %v1457 = vshll.u32 %v1417, 8
        %v1458 = vmul.u32.u64.compose %v1457, %v1456
        %v1459 = vextract.low.u32 %v1458
        %v1460 = vextract.high.u32 %v1458
        %v1461 = vmul.u32.u64.compose %v1457, %v1452
        %v1462 = vextract.low.u32 %v1461
        %v1463 = vextract.high.u32 %v1461
        %v1464 = vmul.u32 %v1457, %v1448
        %v1465 = vadd.s32 %v1460, %v1462
        %vm1466 = vc.u32 %v1460, %v1462
        %v1467 = vadd.s32 %v1463, 1
        %v1468 = vsel %vm1466, %v1467, %v1463
        %v1469 = vadd.s32 %v1464, %v1468
        %v1470 = vadd.s32 %v1469, 536870912
        %v1471 = vshrl.u32 %v1470, 30
        %v1472 = vshll.u32 %v1471, 30
        %v1473 = vsub.s32 %v1469, %v1472
        %vm1474 = vcmp.lt.s32.totalorder %v1473, 0
        %v1475 = vsub.s32 0, %v1473
        %v1476 = vsel %vm1474, %v1475, %v1473
        %v1477 = vclz %v1476
        %v1478 = vsub.s32 %v1477, 2
        %vm1479 = vcmp.gt.s32.totalorder 0, %v1478
        %v1480 = vsel %vm1479, 0, %v1478
        %v1481 = vsub.s32 32, %v1480
        %v1482 = vshll.u32 %v1473, %v1480
        %v1483 = vshrl.u32 %v1465, %v1481
        %v1484 = vor.u32 %v1482, %v1483
        %v1485 = vsub.s32 4294967266, %v1480
        %v1486 = vadd.s32 %v1485, 127
        %v1487 = vshll.u32 %v1486, 23
        %v1488 = vor.u32 4788187, %v1487
        %v1489 = vand.u32 2147483647, %v1488
        %v1491 = vcvt.s32.f32 %v1484
        %v1492 = vmul.f32 %v1491, %v1489
        %v1493 = vxor.u32 %v1492, 2147483648
        %v1494 = vsel %vm1411, %v1493, %v1492
        %v1495 = vsub.s32 4, %v1471
        %v1496 = vsel %vm1411, %v1495, %v1471
        %v1497 = vsel %vm1410, %v336, %v1494
        %v1498 = vsel %vm1410, 0, %v1496
        %v1499 = vcosq.f32.pop %v1497
        %v1500 = vsinq.f32.pop %v1497
        %vm1501 = vweird.f32 %v336
        %v1502 = vadd.s32 %v1498, 3
        %v1503 = vand.u32 %v1502, 3
        %vm1504 = vcmp.lt.s32.totalorder %v1503, 2
        %vm1505 = vcmp.eq.s32.totalorder %v1503, 0
        %v1506 = vxor.u32 %v1500, 2147483648
        %v1507 = vsel %vm1505, %v1499, %v1506
        %vm1508 = vcmp.eq.s32.totalorder %v1503, 2
        %v1509 = vxor.u32 %v1499, 2147483648
        %v1510 = vsel %vm1508, %v1509, %v1500
        %v1511 = vsel %vm1504, %v1507, %v1510
        %v1512 = vsel %vm1501, nan, %v1511
        %v1513 = vand.u32 2147483647, %v341
        %vm1514 = vcmp.le.f32.partialorder %v1513, 0.7853982
        %vm1515 = vcmp.lt.s32.totalorder %v341, 0
        %v1516 = vand.u32 %v341, 2139095040
        %v1517 = vshrl.u32 %v1516, 23
        %v1518 = vsub.s32 %v1517, 127
        %v1519 = vand.u32 2147483647, %v341
        %v1520 = vand.u32 %v1519, 8388607
        %v1521 = vor.u32 %v1520, 8388608
        %v1522 = vsub.s32 0, %v1521
        %v1523 = vadd.s32 %v1518, 1
        %vm1524 = vcmp.gt.s32.totalorder %v1523, 0
        %v1525 = vsel %vm1524, %v1523, 0
        %v1526 = vshrl.u32 %v1525, 5
        %v1527 = vand.u32 %v1525, 31
        %v1528 = vsub.s32 32, %v1527
        %v1529 = vshrl.u32 683565275, %v1528
        %v1530 = vshll.u32 683565275, %v1527
        %v1531 = vshrl.u32 2475754826, %v1528
        %v1532 = vor.u32 %v1530, %v1531
        %v1533 = vshll.u32 2475754826, %v1527
        %v1534 = vshrl.u32 2131351028, %v1528
        %v1535 = vor.u32 %v1533, %v1534
        %v1536 = vshll.u32 2131351028, %v1527
        %v1537 = vshrl.u32 2102212464, %v1528
        %v1538 = vor.u32 %v1536, %v1537
        %v1539 = vshll.u32 2102212464, %v1527
        %v1540 = vshrl.u32 920167782, %v1528
        %v1541 = vor.u32 %v1539, %v1540
        %v1542 = vshll.u32 920167782, %v1527
        %v1543 = vshrl.u32 1326507024, %v1528
        %v1544 = vor.u32 %v1542, %v1543
        %vm1545 = vcmp.lt.s32.totalorder %v1526, 1
        %vm1546 = vcmp.lt.s32.totalorder %v1526, 2
        %vm1547 = vcmp.lt.s32.totalorder %v1526, 3
        %vm1548 = vcmp.lt.s32.totalorder %v1526, 4
        %v1549 = vsel %vm1545, %v1529, %v1532
        %v1550 = vsel %vm1548, %v1538, 2102212464
        %v1551 = vsel %vm1547, %v1535, %v1550
        %v1552 = vsel %vm1546, %v1549, %v1551
        %v1553 = vsel %vm1545, %v1532, %v1535
        %v1554 = vsel %vm1548, %v1541, 920167782
        %v1555 = vsel %vm1547, %v1538, %v1554
        %v1556 = vsel %vm1546, %v1553, %v1555
        %v1557 = vsel %vm1545, %v1535, %v1538
        %v1558 = vsel %vm1548, %v1544, 1326507024
        %v1559 = vsel %vm1547, %v1541, %v1558
        %v1560 = vsel %vm1546, %v1557, %v1559
        %v1561 = vshll.u32 %v1521, 8
        %v1562 = vmul.u32.u64.compose %v1561, %v1560
        %v1563 = vextract.low.u32 %v1562
        %v1564 = vextract.high.u32 %v1562
        %v1565 = vmul.u32.u64.compose %v1561, %v1556
        %v1566 = vextract.low.u32 %v1565
        %v1567 = vextract.high.u32 %v1565
        %v1568 = vmul.u32 %v1561, %v1552
        %v1569 = vadd.s32 %v1564, %v1566
        %vm1570 = vc.u32 %v1564, %v1566
        %v1571 = vadd.s32 %v1567, 1
        %v1572 = vsel %vm1570, %v1571, %v1567
        %v1573 = vadd.s32 %v1568, %v1572
        %v1574 = vadd.s32 %v1573, 536870912
        %v1575 = vshrl.u32 %v1574, 30
        %v1576 = vshll.u32 %v1575, 30
        %v1577 = vsub.s32 %v1573, %v1576
        %vm1578 = vcmp.lt.s32.totalorder %v1577, 0
        %v1579 = vsub.s32 0, %v1577
        %v1580 = vsel %vm1578, %v1579, %v1577
        %v1581 = vclz %v1580
        %v1582 = vsub.s32 %v1581, 2
        %vm1583 = vcmp.gt.s32.totalorder 0, %v1582
        %v1584 = vsel %vm1583, 0, %v1582
        %v1585 = vsub.s32 32, %v1584
        %v1586 = vshll.u32 %v1577, %v1584
        %v1587 = vshrl.u32 %v1569, %v1585
        %v1588 = vor.u32 %v1586, %v1587
        %v1589 = vsub.s32 4294967266, %v1584
        %v1590 = vadd.s32 %v1589, 127
        %v1591 = vshll.u32 %v1590, 23
        %v1592 = vor.u32 4788187, %v1591
        %v1593 = vand.u32 2147483647, %v1592
        %v1595 = vcvt.s32.f32 %v1588
        %v1596 = vmul.f32 %v1595, %v1593
        %v1597 = vxor.u32 %v1596, 2147483648
        %v1598 = vsel %vm1515, %v1597, %v1596
        %v1599 = vsub.s32 4, %v1575
        %v1600 = vsel %vm1515, %v1599, %v1575
        %v1601 = vsel %vm1514, %v341, %v1598
        %v1602 = vsel %vm1514, 0, %v1600
        %v1603 = vcosq.f32.pop %v1601
        %v1604 = vsinq.f32.pop %v1601
        %vm1605 = vweird.f32 %v341
        %v1606 = vadd.s32 %v1602, 3
        %v1607 = vand.u32 %v1606, 3
        %vm1608 = vcmp.lt.s32.totalorder %v1607, 2
        %vm1609 = vcmp.eq.s32.totalorder %v1607, 0
        %v1610 = vxor.u32 %v1604, 2147483648
        %v1611 = vsel %vm1609, %v1603, %v1610
        %vm1612 = vcmp.eq.s32.totalorder %v1607, 2
        %v1613 = vxor.u32 %v1603, 2147483648
        %v1614 = vsel %vm1612, %v1613, %v1604
        %v1615 = vsel %vm1608, %v1611, %v1614
        %v1616 = vsel %vm1605, nan, %v1615
        %v1617 = vand.u32 2147483647, %v346
        %vm1618 = vcmp.le.f32.partialorder %v1617, 0.7853982
        %vm1619 = vcmp.lt.s32.totalorder %v346, 0
        %v1620 = vand.u32 %v346, 2139095040
        %v1621 = vshrl.u32 %v1620, 23
        %v1622 = vsub.s32 %v1621, 127
        %v1623 = vand.u32 2147483647, %v346
        %v1624 = vand.u32 %v1623, 8388607
        %v1625 = vor.u32 %v1624, 8388608
        %v1626 = vsub.s32 0, %v1625
        %v1627 = vadd.s32 %v1622, 1
        %vm1628 = vcmp.gt.s32.totalorder %v1627, 0
        %v1629 = vsel %vm1628, %v1627, 0
        %v1630 = vshrl.u32 %v1629, 5
        %v1631 = vand.u32 %v1629, 31
        %v1632 = vsub.s32 32, %v1631
        %v1633 = vshrl.u32 683565275, %v1632
        %v1634 = vshll.u32 683565275, %v1631
        %v1635 = vshrl.u32 2475754826, %v1632
        %v1636 = vor.u32 %v1634, %v1635
        %v1637 = vshll.u32 2475754826, %v1631
        %v1638 = vshrl.u32 2131351028, %v1632
        %v1639 = vor.u32 %v1637, %v1638
        %v1640 = vshll.u32 2131351028, %v1631
        %v1641 = vshrl.u32 2102212464, %v1632
        %v1642 = vor.u32 %v1640, %v1641
        %v1643 = vshll.u32 2102212464, %v1631
        %v1644 = vshrl.u32 920167782, %v1632
        %v1645 = vor.u32 %v1643, %v1644
        %v1646 = vshll.u32 920167782, %v1631
        %v1647 = vshrl.u32 1326507024, %v1632
        %v1648 = vor.u32 %v1646, %v1647
        %vm1649 = vcmp.lt.s32.totalorder %v1630, 1
        %vm1650 = vcmp.lt.s32.totalorder %v1630, 2
        %vm1651 = vcmp.lt.s32.totalorder %v1630, 3
        %vm1652 = vcmp.lt.s32.totalorder %v1630, 4
        %v1653 = vsel %vm1649, %v1633, %v1636
        %v1654 = vsel %vm1652, %v1642, 2102212464
        %v1655 = vsel %vm1651, %v1639, %v1654
        %v1656 = vsel %vm1650, %v1653, %v1655
        %v1657 = vsel %vm1649, %v1636, %v1639
        %v1658 = vsel %vm1652, %v1645, 920167782
        %v1659 = vsel %vm1651, %v1642, %v1658
        %v1660 = vsel %vm1650, %v1657, %v1659
        %v1661 = vsel %vm1649, %v1639, %v1642
        %v1662 = vsel %vm1652, %v1648, 1326507024
        %v1663 = vsel %vm1651, %v1645, %v1662
        %v1664 = vsel %vm1650, %v1661, %v1663
        %v1665 = vshll.u32 %v1625, 8
        %v1666 = vmul.u32.u64.compose %v1665, %v1664
        %v1667 = vextract.low.u32 %v1666
        %v1668 = vextract.high.u32 %v1666
        %v1669 = vmul.u32.u64.compose %v1665, %v1660
        %v1670 = vextract.low.u32 %v1669
        %v1671 = vextract.high.u32 %v1669
        %v1672 = vmul.u32 %v1665, %v1656
        %v1673 = vadd.s32 %v1668, %v1670
        %vm1674 = vc.u32 %v1668, %v1670
        %v1675 = vadd.s32 %v1671, 1
        %v1676 = vsel %vm1674, %v1675, %v1671
        %v1677 = vadd.s32 %v1672, %v1676
        %v1678 = vadd.s32 %v1677, 536870912
        %v1679 = vshrl.u32 %v1678, 30
        %v1680 = vshll.u32 %v1679, 30
        %v1681 = vsub.s32 %v1677, %v1680
        %vm1682 = vcmp.lt.s32.totalorder %v1681, 0
        %v1683 = vsub.s32 0, %v1681
        %v1684 = vsel %vm1682, %v1683, %v1681
        %v1685 = vclz %v1684
        %v1686 = vsub.s32 %v1685, 2
        %vm1687 = vcmp.gt.s32.totalorder 0, %v1686
        %v1688 = vsel %vm1687, 0, %v1686
        %v1689 = vsub.s32 32, %v1688
        %v1690 = vshll.u32 %v1681, %v1688
        %v1691 = vshrl.u32 %v1673, %v1689
        %v1692 = vor.u32 %v1690, %v1691
        %v1693 = vsub.s32 4294967266, %v1688
        %v1694 = vadd.s32 %v1693, 127
        %v1695 = vshll.u32 %v1694, 23
        %v1696 = vor.u32 4788187, %v1695
        %v1697 = vand.u32 2147483647, %v1696
        %v1699 = vcvt.s32.f32 %v1692
        %v1700 = vmul.f32 %v1699, %v1697
        %v1701 = vxor.u32 %v1700, 2147483648
        %v1702 = vsel %vm1619, %v1701, %v1700
        %v1703 = vsub.s32 4, %v1679
        %v1704 = vsel %vm1619, %v1703, %v1679
        %v1705 = vsel %vm1618, %v346, %v1702
        %v1706 = vsel %vm1618, 0, %v1704
        %v1707 = vcosq.f32.pop %v1705
        %v1708 = vsinq.f32.pop %v1705
        %vm1709 = vweird.f32 %v346
        %v1710 = vadd.s32 %v1706, 3
        %v1711 = vand.u32 %v1710, 3
        %vm1712 = vcmp.lt.s32.totalorder %v1711, 2
        %vm1713 = vcmp.eq.s32.totalorder %v1711, 0
        %v1714 = vxor.u32 %v1708, 2147483648
        %v1715 = vsel %vm1713, %v1707, %v1714
        %vm1716 = vcmp.eq.s32.totalorder %v1711, 2
        %v1717 = vxor.u32 %v1707, 2147483648
        %v1718 = vsel %vm1716, %v1717, %v1708
        %v1719 = vsel %vm1712, %v1715, %v1718
        %v1720 = vsel %vm1709, nan, %v1719
        %v1721 = vand.u32 2147483647, %v351
        %vm1722 = vcmp.le.f32.partialorder %v1721, 0.7853982
        %vm1723 = vcmp.lt.s32.totalorder %v351, 0
        %v1724 = vand.u32 %v351, 2139095040
        %v1725 = vshrl.u32 %v1724, 23
        %v1726 = vsub.s32 %v1725, 127
        %v1727 = vand.u32 2147483647, %v351
        %v1728 = vand.u32 %v1727, 8388607
        %v1729 = vor.u32 %v1728, 8388608
        %v1730 = vsub.s32 0, %v1729
        %v1731 = vadd.s32 %v1726, 1
        %vm1732 = vcmp.gt.s32.totalorder %v1731, 0
        %v1733 = vsel %vm1732, %v1731, 0
        %v1734 = vshrl.u32 %v1733, 5
        %v1735 = vand.u32 %v1733, 31
        %v1736 = vsub.s32 32, %v1735
        %v1737 = vshrl.u32 683565275, %v1736
        %v1738 = vshll.u32 683565275, %v1735
        %v1739 = vshrl.u32 2475754826, %v1736
        %v1740 = vor.u32 %v1738, %v1739
        %v1741 = vshll.u32 2475754826, %v1735
        %v1742 = vshrl.u32 2131351028, %v1736
        %v1743 = vor.u32 %v1741, %v1742
        %v1744 = vshll.u32 2131351028, %v1735
        %v1745 = vshrl.u32 2102212464, %v1736
        %v1746 = vor.u32 %v1744, %v1745
        %v1747 = vshll.u32 2102212464, %v1735
        %v1748 = vshrl.u32 920167782, %v1736
        %v1749 = vor.u32 %v1747, %v1748
        %v1750 = vshll.u32 920167782, %v1735
        %v1751 = vshrl.u32 1326507024, %v1736
        %v1752 = vor.u32 %v1750, %v1751
        %vm1753 = vcmp.lt.s32.totalorder %v1734, 1
        %vm1754 = vcmp.lt.s32.totalorder %v1734, 2
        %vm1755 = vcmp.lt.s32.totalorder %v1734, 3
        %vm1756 = vcmp.lt.s32.totalorder %v1734, 4
        %v1757 = vsel %vm1753, %v1737, %v1740
        %v1758 = vsel %vm1756, %v1746, 2102212464
        %v1759 = vsel %vm1755, %v1743, %v1758
        %v1760 = vsel %vm1754, %v1757, %v1759
        %v1761 = vsel %vm1753, %v1740, %v1743
        %v1762 = vsel %vm1756, %v1749, 920167782
        %v1763 = vsel %vm1755, %v1746, %v1762
        %v1764 = vsel %vm1754, %v1761, %v1763
        %v1765 = vsel %vm1753, %v1743, %v1746
        %v1766 = vsel %vm1756, %v1752, 1326507024
        %v1767 = vsel %vm1755, %v1749, %v1766
        %v1768 = vsel %vm1754, %v1765, %v1767
        %v1769 = vshll.u32 %v1729, 8
        %v1770 = vmul.u32.u64.compose %v1769, %v1768
        %v1771 = vextract.low.u32 %v1770
        %v1772 = vextract.high.u32 %v1770
        %v1773 = vmul.u32.u64.compose %v1769, %v1764
        %v1774 = vextract.low.u32 %v1773
        %v1775 = vextract.high.u32 %v1773
        %v1776 = vmul.u32 %v1769, %v1760
        %v1777 = vadd.s32 %v1772, %v1774
        %vm1778 = vc.u32 %v1772, %v1774
        %v1779 = vadd.s32 %v1775, 1
        %v1780 = vsel %vm1778, %v1779, %v1775
        %v1781 = vadd.s32 %v1776, %v1780
        %v1782 = vadd.s32 %v1781, 536870912
        %v1783 = vshrl.u32 %v1782, 30
        %v1784 = vshll.u32 %v1783, 30
        %v1785 = vsub.s32 %v1781, %v1784
        %vm1786 = vcmp.lt.s32.totalorder %v1785, 0
        %v1787 = vsub.s32 0, %v1785
        %v1788 = vsel %vm1786, %v1787, %v1785
        %v1789 = vclz %v1788
        %v1790 = vsub.s32 %v1789, 2
        %vm1791 = vcmp.gt.s32.totalorder 0, %v1790
        %v1792 = vsel %vm1791, 0, %v1790
        %v1793 = vsub.s32 32, %v1792
        %v1794 = vshll.u32 %v1785, %v1792
        %v1795 = vshrl.u32 %v1777, %v1793
        %v1796 = vor.u32 %v1794, %v1795
        %v1797 = vsub.s32 4294967266, %v1792
        %v1798 = vadd.s32 %v1797, 127
        %v1799 = vshll.u32 %v1798, 23
        %v1800 = vor.u32 4788187, %v1799
        %v1801 = vand.u32 2147483647, %v1800
        %v1803 = vcvt.s32.f32 %v1796
        %v1804 = vmul.f32 %v1803, %v1801
        %v1805 = vxor.u32 %v1804, 2147483648
        %v1806 = vsel %vm1723, %v1805, %v1804
        %v1807 = vsub.s32 4, %v1783
        %v1808 = vsel %vm1723, %v1807, %v1783
        %v1809 = vsel %vm1722, %v351, %v1806
        %v1810 = vsel %vm1722, 0, %v1808
        %v1811 = vcosq.f32.pop %v1809
        %v1812 = vsinq.f32.pop %v1809
        %vm1813 = vweird.f32 %v351
        %v1814 = vadd.s32 %v1810, 3
        %v1815 = vand.u32 %v1814, 3
        %vm1816 = vcmp.lt.s32.totalorder %v1815, 2
        %vm1817 = vcmp.eq.s32.totalorder %v1815, 0
        %v1818 = vxor.u32 %v1812, 2147483648
        %v1819 = vsel %vm1817, %v1811, %v1818
        %vm1820 = vcmp.eq.s32.totalorder %v1815, 2
        %v1821 = vxor.u32 %v1811, 2147483648
        %v1822 = vsel %vm1820, %v1821, %v1812
        %v1823 = vsel %vm1816, %v1819, %v1822
        %v1824 = vsel %vm1813, nan, %v1823
        %v1825 = vand.u32 2147483647, %v356
        %vm1826 = vcmp.le.f32.partialorder %v1825, 0.7853982
        %vm1827 = vcmp.lt.s32.totalorder %v356, 0
        %v1828 = vand.u32 %v356, 2139095040
        %v1829 = vshrl.u32 %v1828, 23
        %v1830 = vsub.s32 %v1829, 127
        %v1831 = vand.u32 2147483647, %v356
        %v1832 = vand.u32 %v1831, 8388607
        %v1833 = vor.u32 %v1832, 8388608
        %v1834 = vsub.s32 0, %v1833
        %v1835 = vadd.s32 %v1830, 1
        %vm1836 = vcmp.gt.s32.totalorder %v1835, 0
        %v1837 = vsel %vm1836, %v1835, 0
        %v1838 = vshrl.u32 %v1837, 5
        %v1839 = vand.u32 %v1837, 31
        %v1840 = vsub.s32 32, %v1839
        %v1841 = vshrl.u32 683565275, %v1840
        %v1842 = vshll.u32 683565275, %v1839
        %v1843 = vshrl.u32 2475754826, %v1840
        %v1844 = vor.u32 %v1842, %v1843
        %v1845 = vshll.u32 2475754826, %v1839
        %v1846 = vshrl.u32 2131351028, %v1840
        %v1847 = vor.u32 %v1845, %v1846
        %v1848 = vshll.u32 2131351028, %v1839
        %v1849 = vshrl.u32 2102212464, %v1840
        %v1850 = vor.u32 %v1848, %v1849
        %v1851 = vshll.u32 2102212464, %v1839
        %v1852 = vshrl.u32 920167782, %v1840
        %v1853 = vor.u32 %v1851, %v1852
        %v1854 = vshll.u32 920167782, %v1839
        %v1855 = vshrl.u32 1326507024, %v1840
        %v1856 = vor.u32 %v1854, %v1855
        %vm1857 = vcmp.lt.s32.totalorder %v1838, 1
        %vm1858 = vcmp.lt.s32.totalorder %v1838, 2
        %vm1859 = vcmp.lt.s32.totalorder %v1838, 3
        %vm1860 = vcmp.lt.s32.totalorder %v1838, 4
        %v1861 = vsel %vm1857, %v1841, %v1844
        %v1862 = vsel %vm1860, %v1850, 2102212464
        %v1863 = vsel %vm1859, %v1847, %v1862
        %v1864 = vsel %vm1858, %v1861, %v1863
        %v1865 = vsel %vm1857, %v1844, %v1847
        %v1866 = vsel %vm1860, %v1853, 920167782
        %v1867 = vsel %vm1859, %v1850, %v1866
        %v1868 = vsel %vm1858, %v1865, %v1867
        %v1869 = vsel %vm1857, %v1847, %v1850
        %v1870 = vsel %vm1860, %v1856, 1326507024
        %v1871 = vsel %vm1859, %v1853, %v1870
        %v1872 = vsel %vm1858, %v1869, %v1871
        %v1873 = vshll.u32 %v1833, 8
        %v1874 = vmul.u32.u64.compose %v1873, %v1872
        %v1875 = vextract.low.u32 %v1874
        %v1876 = vextract.high.u32 %v1874
        %v1877 = vmul.u32.u64.compose %v1873, %v1868
        %v1878 = vextract.low.u32 %v1877
        %v1879 = vextract.high.u32 %v1877
        %v1880 = vmul.u32 %v1873, %v1864
        %v1881 = vadd.s32 %v1876, %v1878
        %vm1882 = vc.u32 %v1876, %v1878
        %v1883 = vadd.s32 %v1879, 1
        %v1884 = vsel %vm1882, %v1883, %v1879
        %v1885 = vadd.s32 %v1880, %v1884
        %v1886 = vadd.s32 %v1885, 536870912
        %v1887 = vshrl.u32 %v1886, 30
        %v1888 = vshll.u32 %v1887, 30
        %v1889 = vsub.s32 %v1885, %v1888
        %vm1890 = vcmp.lt.s32.totalorder %v1889, 0
        %v1891 = vsub.s32 0, %v1889
        %v1892 = vsel %vm1890, %v1891, %v1889
        %v1893 = vclz %v1892
        %v1894 = vsub.s32 %v1893, 2
        %vm1895 = vcmp.gt.s32.totalorder 0, %v1894
        %v1896 = vsel %vm1895, 0, %v1894
        %v1897 = vsub.s32 32, %v1896
        %v1898 = vshll.u32 %v1889, %v1896
        %v1899 = vshrl.u32 %v1881, %v1897
        %v1900 = vor.u32 %v1898, %v1899
        %v1901 = vsub.s32 4294967266, %v1896
        %v1902 = vadd.s32 %v1901, 127
        %v1903 = vshll.u32 %v1902, 23
        %v1904 = vor.u32 4788187, %v1903
        %v1905 = vand.u32 2147483647, %v1904
        %v1907 = vcvt.s32.f32 %v1900
        %v1908 = vmul.f32 %v1907, %v1905
        %v1909 = vxor.u32 %v1908, 2147483648
        %v1910 = vsel %vm1827, %v1909, %v1908
        %v1911 = vsub.s32 4, %v1887
        %v1912 = vsel %vm1827, %v1911, %v1887
        %v1913 = vsel %vm1826, %v356, %v1910
        %v1914 = vsel %vm1826, 0, %v1912
        %v1915 = vcosq.f32.pop %v1913
        %v1916 = vsinq.f32.pop %v1913
        %vm1917 = vweird.f32 %v356
        %v1918 = vadd.s32 %v1914, 3
        %v1919 = vand.u32 %v1918, 3
        %vm1920 = vcmp.lt.s32.totalorder %v1919, 2
        %vm1921 = vcmp.eq.s32.totalorder %v1919, 0
        %v1922 = vxor.u32 %v1916, 2147483648
        %v1923 = vsel %vm1921, %v1915, %v1922
        %vm1924 = vcmp.eq.s32.totalorder %v1919, 2
        %v1925 = vxor.u32 %v1915, 2147483648
        %v1926 = vsel %vm1924, %v1925, %v1916
        %v1927 = vsel %vm1920, %v1923, %v1926
        %v1928 = vsel %vm1917, nan, %v1927
        %v1929 = vand.u32 2147483647, %v361
        %vm1930 = vcmp.le.f32.partialorder %v1929, 0.7853982
        %vm1931 = vcmp.lt.s32.totalorder %v361, 0
        %v1932 = vand.u32 %v361, 2139095040
        %v1933 = vshrl.u32 %v1932, 23
        %v1934 = vsub.s32 %v1933, 127
        %v1935 = vand.u32 2147483647, %v361
        %v1936 = vand.u32 %v1935, 8388607
        %v1937 = vor.u32 %v1936, 8388608
        %v1938 = vsub.s32 0, %v1937
        %v1939 = vadd.s32 %v1934, 1
        %vm1940 = vcmp.gt.s32.totalorder %v1939, 0
        %v1941 = vsel %vm1940, %v1939, 0
        %v1942 = vshrl.u32 %v1941, 5
        %v1943 = vand.u32 %v1941, 31
        %v1944 = vsub.s32 32, %v1943
        %v1945 = vshrl.u32 683565275, %v1944
        %v1946 = vshll.u32 683565275, %v1943
        %v1947 = vshrl.u32 2475754826, %v1944
        %v1948 = vor.u32 %v1946, %v1947
        %v1949 = vshll.u32 2475754826, %v1943
        %v1950 = vshrl.u32 2131351028, %v1944
        %v1951 = vor.u32 %v1949, %v1950
        %v1952 = vshll.u32 2131351028, %v1943
        %v1953 = vshrl.u32 2102212464, %v1944
        %v1954 = vor.u32 %v1952, %v1953
        %v1955 = vshll.u32 2102212464, %v1943
        %v1956 = vshrl.u32 920167782, %v1944
        %v1957 = vor.u32 %v1955, %v1956
        %v1958 = vshll.u32 920167782, %v1943
        %v1959 = vshrl.u32 1326507024, %v1944
        %v1960 = vor.u32 %v1958, %v1959
        %vm1961 = vcmp.lt.s32.totalorder %v1942, 1
        %vm1962 = vcmp.lt.s32.totalorder %v1942, 2
        %vm1963 = vcmp.lt.s32.totalorder %v1942, 3
        %vm1964 = vcmp.lt.s32.totalorder %v1942, 4
        %v1965 = vsel %vm1961, %v1945, %v1948
        %v1966 = vsel %vm1964, %v1954, 2102212464
        %v1967 = vsel %vm1963, %v1951, %v1966
        %v1968 = vsel %vm1962, %v1965, %v1967
        %v1969 = vsel %vm1961, %v1948, %v1951
        %v1970 = vsel %vm1964, %v1957, 920167782
        %v1971 = vsel %vm1963, %v1954, %v1970
        %v1972 = vsel %vm1962, %v1969, %v1971
        %v1973 = vsel %vm1961, %v1951, %v1954
        %v1974 = vsel %vm1964, %v1960, 1326507024
        %v1975 = vsel %vm1963, %v1957, %v1974
        %v1976 = vsel %vm1962, %v1973, %v1975
        %v1977 = vshll.u32 %v1937, 8
        %v1978 = vmul.u32.u64.compose %v1977, %v1976
        %v1979 = vextract.low.u32 %v1978
        %v1980 = vextract.high.u32 %v1978
        %v1981 = vmul.u32.u64.compose %v1977, %v1972
        %v1982 = vextract.low.u32 %v1981
        %v1983 = vextract.high.u32 %v1981
        %v1984 = vmul.u32 %v1977, %v1968
        %v1985 = vadd.s32 %v1980, %v1982
        %vm1986 = vc.u32 %v1980, %v1982
        %v1987 = vadd.s32 %v1983, 1
        %v1988 = vsel %vm1986, %v1987, %v1983
        %v1989 = vadd.s32 %v1984, %v1988
        %v1990 = vadd.s32 %v1989, 536870912
        %v1991 = vshrl.u32 %v1990, 30
        %v1992 = vshll.u32 %v1991, 30
        %v1993 = vsub.s32 %v1989, %v1992
        %vm1994 = vcmp.lt.s32.totalorder %v1993, 0
        %v1995 = vsub.s32 0, %v1993
        %v1996 = vsel %vm1994, %v1995, %v1993
        %v1997 = vclz %v1996
        %v1998 = vsub.s32 %v1997, 2
        %vm1999 = vcmp.gt.s32.totalorder 0, %v1998
        %v2000 = vsel %vm1999, 0, %v1998
        %v2001 = vsub.s32 32, %v2000
        %v2002 = vshll.u32 %v1993, %v2000
        %v2003 = vshrl.u32 %v1985, %v2001
        %v2004 = vor.u32 %v2002, %v2003
        %v2005 = vsub.s32 4294967266, %v2000
        %v2006 = vadd.s32 %v2005, 127
        %v2007 = vshll.u32 %v2006, 23
        %v2008 = vor.u32 4788187, %v2007
        %v2009 = vand.u32 2147483647, %v2008
        %v2011 = vcvt.s32.f32 %v2004
        %v2012 = vmul.f32 %v2011, %v2009
        %v2013 = vxor.u32 %v2012, 2147483648
        %v2014 = vsel %vm1931, %v2013, %v2012
        %v2015 = vsub.s32 4, %v1991
        %v2016 = vsel %vm1931, %v2015, %v1991
        %v2017 = vsel %vm1930, %v361, %v2014
        %v2018 = vsel %vm1930, 0, %v2016
        %v2019 = vcosq.f32.pop %v2017
        %v2020 = vsinq.f32.pop %v2017
        %vm2021 = vweird.f32 %v361
        %v2022 = vadd.s32 %v2018, 3
        %v2023 = vand.u32 %v2022, 3
        %vm2024 = vcmp.lt.s32.totalorder %v2023, 2
        %vm2025 = vcmp.eq.s32.totalorder %v2023, 0
        %v2026 = vxor.u32 %v2020, 2147483648
        %v2027 = vsel %vm2025, %v2019, %v2026
        %vm2028 = vcmp.eq.s32.totalorder %v2023, 2
        %v2029 = vxor.u32 %v2019, 2147483648
        %v2030 = vsel %vm2028, %v2029, %v2020
        %v2031 = vsel %vm2024, %v2027, %v2030
        %v2032 = vsel %vm2021, nan, %v2031
        %v2033 = vand.u32 2147483647, %v366
        %vm2034 = vcmp.le.f32.partialorder %v2033, 0.7853982
        %vm2035 = vcmp.lt.s32.totalorder %v366, 0
        %v2036 = vand.u32 %v366, 2139095040
        %v2037 = vshrl.u32 %v2036, 23
        %v2038 = vsub.s32 %v2037, 127
        %v2039 = vand.u32 2147483647, %v366
        %v2040 = vand.u32 %v2039, 8388607
        %v2041 = vor.u32 %v2040, 8388608
        %v2042 = vsub.s32 0, %v2041
        %v2043 = vadd.s32 %v2038, 1
        %vm2044 = vcmp.gt.s32.totalorder %v2043, 0
        %v2045 = vsel %vm2044, %v2043, 0
        %v2046 = vshrl.u32 %v2045, 5
        %v2047 = vand.u32 %v2045, 31
        %v2048 = vsub.s32 32, %v2047
        %v2049 = vshrl.u32 683565275, %v2048
        %v2050 = vshll.u32 683565275, %v2047
        %v2051 = vshrl.u32 2475754826, %v2048
        %v2052 = vor.u32 %v2050, %v2051
        %v2053 = vshll.u32 2475754826, %v2047
        %v2054 = vshrl.u32 2131351028, %v2048
        %v2055 = vor.u32 %v2053, %v2054
        %v2056 = vshll.u32 2131351028, %v2047
        %v2057 = vshrl.u32 2102212464, %v2048
        %v2058 = vor.u32 %v2056, %v2057
        %v2059 = vshll.u32 2102212464, %v2047
        %v2060 = vshrl.u32 920167782, %v2048
        %v2061 = vor.u32 %v2059, %v2060
        %v2062 = vshll.u32 920167782, %v2047
        %v2063 = vshrl.u32 1326507024, %v2048
        %v2064 = vor.u32 %v2062, %v2063
        %vm2065 = vcmp.lt.s32.totalorder %v2046, 1
        %vm2066 = vcmp.lt.s32.totalorder %v2046, 2
        %vm2067 = vcmp.lt.s32.totalorder %v2046, 3
        %vm2068 = vcmp.lt.s32.totalorder %v2046, 4
        %v2069 = vsel %vm2065, %v2049, %v2052
        %v2070 = vsel %vm2068, %v2058, 2102212464
        %v2071 = vsel %vm2067, %v2055, %v2070
        %v2072 = vsel %vm2066, %v2069, %v2071
        %v2073 = vsel %vm2065, %v2052, %v2055
        %v2074 = vsel %vm2068, %v2061, 920167782
        %v2075 = vsel %vm2067, %v2058, %v2074
        %v2076 = vsel %vm2066, %v2073, %v2075
        %v2077 = vsel %vm2065, %v2055, %v2058
        %v2078 = vsel %vm2068, %v2064, 1326507024
        %v2079 = vsel %vm2067, %v2061, %v2078
        %v2080 = vsel %vm2066, %v2077, %v2079
        %v2081 = vshll.u32 %v2041, 8
        %v2082 = vmul.u32.u64.compose %v2081, %v2080
        %v2083 = vextract.low.u32 %v2082
        %v2084 = vextract.high.u32 %v2082
        %v2085 = vmul.u32.u64.compose %v2081, %v2076
        %v2086 = vextract.low.u32 %v2085
        %v2087 = vextract.high.u32 %v2085
        %v2088 = vmul.u32 %v2081, %v2072
        %v2089 = vadd.s32 %v2084, %v2086
        %vm2090 = vc.u32 %v2084, %v2086
        %v2091 = vadd.s32 %v2087, 1
        %v2092 = vsel %vm2090, %v2091, %v2087
        %v2093 = vadd.s32 %v2088, %v2092
        %v2094 = vadd.s32 %v2093, 536870912
        %v2095 = vshrl.u32 %v2094, 30
        %v2096 = vshll.u32 %v2095, 30
        %v2097 = vsub.s32 %v2093, %v2096
        %vm2098 = vcmp.lt.s32.totalorder %v2097, 0
        %v2099 = vsub.s32 0, %v2097
        %v2100 = vsel %vm2098, %v2099, %v2097
        %v2101 = vclz %v2100
        %v2102 = vsub.s32 %v2101, 2
        %vm2103 = vcmp.gt.s32.totalorder 0, %v2102
        %v2104 = vsel %vm2103, 0, %v2102
        %v2105 = vsub.s32 32, %v2104
        %v2106 = vshll.u32 %v2097, %v2104
        %v2107 = vshrl.u32 %v2089, %v2105
        %v2108 = vor.u32 %v2106, %v2107
        %v2109 = vsub.s32 4294967266, %v2104
        %v2110 = vadd.s32 %v2109, 127
        %v2111 = vshll.u32 %v2110, 23
        %v2112 = vor.u32 4788187, %v2111
        %v2113 = vand.u32 2147483647, %v2112
        %v2115 = vcvt.s32.f32 %v2108
        %v2116 = vmul.f32 %v2115, %v2113
        %v2117 = vxor.u32 %v2116, 2147483648
        %v2118 = vsel %vm2035, %v2117, %v2116
        %v2119 = vsub.s32 4, %v2095
        %v2120 = vsel %vm2035, %v2119, %v2095
        %v2121 = vsel %vm2034, %v366, %v2118
        %v2122 = vsel %vm2034, 0, %v2120
        %v2123 = vcosq.f32.pop %v2121
        %v2124 = vsinq.f32.pop %v2121
        %vm2125 = vweird.f32 %v366
        %v2126 = vadd.s32 %v2122, 3
        %v2127 = vand.u32 %v2126, 3
        %vm2128 = vcmp.lt.s32.totalorder %v2127, 2
        %vm2129 = vcmp.eq.s32.totalorder %v2127, 0
        %v2130 = vxor.u32 %v2124, 2147483648
        %v2131 = vsel %vm2129, %v2123, %v2130
        %vm2132 = vcmp.eq.s32.totalorder %v2127, 2
        %v2133 = vxor.u32 %v2123, 2147483648
        %v2134 = vsel %vm2132, %v2133, %v2124
        %v2135 = vsel %vm2128, %v2131, %v2134
        %v2136 = vsel %vm2125, nan, %v2135
        %2137 = vst [vmem:[%s137] sm:$0xff] %v472
        %2138 = vst [vmem:[%s137 + $0x10] sm:$0xff] %v576
        %2139 = vst [vmem:[%s137 + $0x20] sm:$0xff] %v680
        %2140 = vst [vmem:[%s137 + $0x30] sm:$0xff] %v784
        %2141 = vst [vmem:[%s137 + $0x40] sm:$0xff] %v888
        %2142 = vst [vmem:[%s137 + $0x50] sm:$0xff] %v992
        %2143 = vst [vmem:[%s137 + $0x60] sm:$0xff] %v1096
        %2144 = vst [vmem:[%s137 + $0x70] sm:$0xff] %v1200
        %2145 = vst [vmem:[%s137 + $0x80] sm:$0xff] %v1304
        %2146 = vst [vmem:[%s137 + $0x90] sm:$0xff] %v1408
        %2147 = vst [vmem:[%s137 + $0xa0] sm:$0xff] %v1512
        %2148 = vst [vmem:[%s137 + $0xb0] sm:$0xff] %v1616
        %2149 = vst [vmem:[%s137 + $0xc0] sm:$0xff] %v1720
        %2150 = vst [vmem:[%s137 + $0xd0] sm:$0xff] %v1824
        %2151 = vst [vmem:[%s137 + $0xe0] sm:$0xff] %v1928
        %2152 = vst [vmem:[%s137 + $0xf0] sm:$0xff] %v2032
        %2153 = vst [vmem:[%s137 + $0x100] sm:$0xff] %v2136
        %v2154 = vand.u32 2147483647, %v286
        %vm2155 = vcmp.le.f32.partialorder %v2154, 0.7853982
        %vm2156 = vcmp.lt.s32.totalorder %v286, 0
        %v2157 = vand.u32 %v286, 2139095040
        %v2158 = vshrl.u32 %v2157, 23
        %v2159 = vsub.s32 %v2158, 127
        %v2160 = vand.u32 2147483647, %v286
        %v2161 = vand.u32 %v2160, 8388607
        %v2162 = vor.u32 %v2161, 8388608
        %v2163 = vsub.s32 0, %v2162
        %v2164 = vadd.s32 %v2159, 1
        %vm2165 = vcmp.gt.s32.totalorder %v2164, 0
        %v2166 = vsel %vm2165, %v2164, 0
        %v2167 = vshrl.u32 %v2166, 5
        %v2168 = vand.u32 %v2166, 31
        %v2169 = vsub.s32 32, %v2168
        %v2170 = vshrl.u32 683565275, %v2169
        %v2171 = vshll.u32 683565275, %v2168
        %v2172 = vshrl.u32 2475754826, %v2169
        %v2173 = vor.u32 %v2171, %v2172
        %v2174 = vshll.u32 2475754826, %v2168
        %v2175 = vshrl.u32 2131351028, %v2169
        %v2176 = vor.u32 %v2174, %v2175
        %v2177 = vshll.u32 2131351028, %v2168
        %v2178 = vshrl.u32 2102212464, %v2169
        %v2179 = vor.u32 %v2177, %v2178
        %v2180 = vshll.u32 2102212464, %v2168
        %v2181 = vshrl.u32 920167782, %v2169
        %v2182 = vor.u32 %v2180, %v2181
        %v2183 = vshll.u32 920167782, %v2168
        %v2184 = vshrl.u32 1326507024, %v2169
        %v2185 = vor.u32 %v2183, %v2184
        %vm2186 = vcmp.lt.s32.totalorder %v2167, 1
        %vm2187 = vcmp.lt.s32.totalorder %v2167, 2
        %vm2188 = vcmp.lt.s32.totalorder %v2167, 3
        %vm2189 = vcmp.lt.s32.totalorder %v2167, 4
        %v2190 = vsel %vm2186, %v2170, %v2173
        %v2191 = vsel %vm2189, %v2179, 2102212464
        %v2192 = vsel %vm2188, %v2176, %v2191
        %v2193 = vsel %vm2187, %v2190, %v2192
        %v2194 = vsel %vm2186, %v2173, %v2176
        %v2195 = vsel %vm2189, %v2182, 920167782
        %v2196 = vsel %vm2188, %v2179, %v2195
        %v2197 = vsel %vm2187, %v2194, %v2196
        %v2198 = vsel %vm2186, %v2176, %v2179
        %v2199 = vsel %vm2189, %v2185, 1326507024
        %v2200 = vsel %vm2188, %v2182, %v2199
        %v2201 = vsel %vm2187, %v2198, %v2200
        %v2202 = vshll.u32 %v2162, 8
        %v2203 = vmul.u32.u64.compose %v2202, %v2201
        %v2204 = vextract.low.u32 %v2203
        %v2205 = vextract.high.u32 %v2203
        %v2206 = vmul.u32.u64.compose %v2202, %v2197
        %v2207 = vextract.low.u32 %v2206
        %v2208 = vextract.high.u32 %v2206
        %v2209 = vmul.u32 %v2202, %v2193
        %v2210 = vadd.s32 %v2205, %v2207
        %vm2211 = vc.u32 %v2205, %v2207
        %v2212 = vadd.s32 %v2208, 1
        %v2213 = vsel %vm2211, %v2212, %v2208
        %v2214 = vadd.s32 %v2209, %v2213
        %v2215 = vadd.s32 %v2214, 536870912
        %v2216 = vshrl.u32 %v2215, 30
        %v2217 = vshll.u32 %v2216, 30
        %v2218 = vsub.s32 %v2214, %v2217
        %vm2219 = vcmp.lt.s32.totalorder %v2218, 0
        %v2220 = vsub.s32 0, %v2218
        %v2221 = vsel %vm2219, %v2220, %v2218
        %v2222 = vclz %v2221
        %v2223 = vsub.s32 %v2222, 2
        %vm2224 = vcmp.gt.s32.totalorder 0, %v2223
        %v2225 = vsel %vm2224, 0, %v2223
        %v2226 = vsub.s32 32, %v2225
        %v2227 = vshll.u32 %v2218, %v2225
        %v2228 = vshrl.u32 %v2210, %v2226
        %v2229 = vor.u32 %v2227, %v2228
        %v2230 = vsub.s32 4294967266, %v2225
        %v2231 = vadd.s32 %v2230, 127
        %v2232 = vshll.u32 %v2231, 23
        %v2233 = vor.u32 4788187, %v2232
        %v2234 = vand.u32 2147483647, %v2233
        %v2236 = vcvt.s32.f32 %v2229
        %v2237 = vmul.f32 %v2236, %v2234
        %v2238 = vxor.u32 %v2237, 2147483648
        %v2239 = vsel %vm2156, %v2238, %v2237
        %v2240 = vsub.s32 4, %v2216
        %v2241 = vsel %vm2156, %v2240, %v2216
        %v2242 = vsel %vm2155, %v286, %v2239
        %v2243 = vsel %vm2155, 0, %v2241
        %v2244 = vcosq.f32.pop %v2242
        %v2245 = vsinq.f32.pop %v2242
        %vm2246 = vweird.f32 %v286
        %v2247 = vand.u32 %v2243, 3
        %vm2248 = vcmp.lt.s32.totalorder %v2247, 2
        %vm2249 = vcmp.eq.s32.totalorder %v2247, 0
        %v2250 = vxor.u32 %v2245, 2147483648
        %v2251 = vsel %vm2249, %v2244, %v2250
        %vm2252 = vcmp.eq.s32.totalorder %v2247, 2
        %v2253 = vxor.u32 %v2244, 2147483648
        %v2254 = vsel %vm2252, %v2253, %v2245
        %v2255 = vsel %vm2248, %v2251, %v2254
        %v2256 = vsel %vm2246, nan, %v2255
        %v2257 = vand.u32 2147483647, %v291
        %vm2258 = vcmp.le.f32.partialorder %v2257, 0.7853982
        %vm2259 = vcmp.lt.s32.totalorder %v291, 0
        %v2260 = vand.u32 %v291, 2139095040
        %v2261 = vshrl.u32 %v2260, 23
        %v2262 = vsub.s32 %v2261, 127
        %v2263 = vand.u32 2147483647, %v291
        %v2264 = vand.u32 %v2263, 8388607
        %v2265 = vor.u32 %v2264, 8388608
        %v2266 = vsub.s32 0, %v2265
        %v2267 = vadd.s32 %v2262, 1
        %vm2268 = vcmp.gt.s32.totalorder %v2267, 0
        %v2269 = vsel %vm2268, %v2267, 0
        %v2270 = vshrl.u32 %v2269, 5
        %v2271 = vand.u32 %v2269, 31
        %v2272 = vsub.s32 32, %v2271
        %v2273 = vshrl.u32 683565275, %v2272
        %v2274 = vshll.u32 683565275, %v2271
        %v2275 = vshrl.u32 2475754826, %v2272
        %v2276 = vor.u32 %v2274, %v2275
        %v2277 = vshll.u32 2475754826, %v2271
        %v2278 = vshrl.u32 2131351028, %v2272
        %v2279 = vor.u32 %v2277, %v2278
        %v2280 = vshll.u32 2131351028, %v2271
        %v2281 = vshrl.u32 2102212464, %v2272
        %v2282 = vor.u32 %v2280, %v2281
        %v2283 = vshll.u32 2102212464, %v2271
        %v2284 = vshrl.u32 920167782, %v2272
        %v2285 = vor.u32 %v2283, %v2284
        %v2286 = vshll.u32 920167782, %v2271
        %v2287 = vshrl.u32 1326507024, %v2272
        %v2288 = vor.u32 %v2286, %v2287
        %vm2289 = vcmp.lt.s32.totalorder %v2270, 1
        %vm2290 = vcmp.lt.s32.totalorder %v2270, 2
        %vm2291 = vcmp.lt.s32.totalorder %v2270, 3
        %vm2292 = vcmp.lt.s32.totalorder %v2270, 4
        %v2293 = vsel %vm2289, %v2273, %v2276
        %v2294 = vsel %vm2292, %v2282, 2102212464
        %v2295 = vsel %vm2291, %v2279, %v2294
        %v2296 = vsel %vm2290, %v2293, %v2295
        %v2297 = vsel %vm2289, %v2276, %v2279
        %v2298 = vsel %vm2292, %v2285, 920167782
        %v2299 = vsel %vm2291, %v2282, %v2298
        %v2300 = vsel %vm2290, %v2297, %v2299
        %v2301 = vsel %vm2289, %v2279, %v2282
        %v2302 = vsel %vm2292, %v2288, 1326507024
        %v2303 = vsel %vm2291, %v2285, %v2302
        %v2304 = vsel %vm2290, %v2301, %v2303
        %v2305 = vshll.u32 %v2265, 8
        %v2306 = vmul.u32.u64.compose %v2305, %v2304
        %v2307 = vextract.low.u32 %v2306
        %v2308 = vextract.high.u32 %v2306
        %v2309 = vmul.u32.u64.compose %v2305, %v2300
        %v2310 = vextract.low.u32 %v2309
        %v2311 = vextract.high.u32 %v2309
        %v2312 = vmul.u32 %v2305, %v2296
        %v2313 = vadd.s32 %v2308, %v2310
        %vm2314 = vc.u32 %v2308, %v2310
        %v2315 = vadd.s32 %v2311, 1
        %v2316 = vsel %vm2314, %v2315, %v2311
        %v2317 = vadd.s32 %v2312, %v2316
        %v2318 = vadd.s32 %v2317, 536870912
        %v2319 = vshrl.u32 %v2318, 30
        %v2320 = vshll.u32 %v2319, 30
        %v2321 = vsub.s32 %v2317, %v2320
        %vm2322 = vcmp.lt.s32.totalorder %v2321, 0
        %v2323 = vsub.s32 0, %v2321
        %v2324 = vsel %vm2322, %v2323, %v2321
        %v2325 = vclz %v2324
        %v2326 = vsub.s32 %v2325, 2
        %vm2327 = vcmp.gt.s32.totalorder 0, %v2326
        %v2328 = vsel %vm2327, 0, %v2326
        %v2329 = vsub.s32 32, %v2328
        %v2330 = vshll.u32 %v2321, %v2328
        %v2331 = vshrl.u32 %v2313, %v2329
        %v2332 = vor.u32 %v2330, %v2331
        %v2333 = vsub.s32 4294967266, %v2328
        %v2334 = vadd.s32 %v2333, 127
        %v2335 = vshll.u32 %v2334, 23
        %v2336 = vor.u32 4788187, %v2335
        %v2337 = vand.u32 2147483647, %v2336
        %v2339 = vcvt.s32.f32 %v2332
        %v2340 = vmul.f32 %v2339, %v2337
        %v2341 = vxor.u32 %v2340, 2147483648
        %v2342 = vsel %vm2259, %v2341, %v2340
        %v2343 = vsub.s32 4, %v2319
        %v2344 = vsel %vm2259, %v2343, %v2319
        %v2345 = vsel %vm2258, %v291, %v2342
        %v2346 = vsel %vm2258, 0, %v2344
        %v2347 = vcosq.f32.pop %v2345
        %v2348 = vsinq.f32.pop %v2345
        %vm2349 = vweird.f32 %v291
        %v2350 = vand.u32 %v2346, 3
        %vm2351 = vcmp.lt.s32.totalorder %v2350, 2
        %vm2352 = vcmp.eq.s32.totalorder %v2350, 0
        %v2353 = vxor.u32 %v2348, 2147483648
        %v2354 = vsel %vm2352, %v2347, %v2353
        %vm2355 = vcmp.eq.s32.totalorder %v2350, 2
        %v2356 = vxor.u32 %v2347, 2147483648
        %v2357 = vsel %vm2355, %v2356, %v2348
        %v2358 = vsel %vm2351, %v2354, %v2357
        %v2359 = vsel %vm2349, nan, %v2358
        %v2360 = vand.u32 2147483647, %v296
        %vm2361 = vcmp.le.f32.partialorder %v2360, 0.7853982
        %vm2362 = vcmp.lt.s32.totalorder %v296, 0
        %v2363 = vand.u32 %v296, 2139095040
        %v2364 = vshrl.u32 %v2363, 23
        %v2365 = vsub.s32 %v2364, 127
        %v2366 = vand.u32 2147483647, %v296
        %v2367 = vand.u32 %v2366, 8388607
        %v2368 = vor.u32 %v2367, 8388608
        %v2369 = vsub.s32 0, %v2368
        %v2370 = vadd.s32 %v2365, 1
        %vm2371 = vcmp.gt.s32.totalorder %v2370, 0
        %v2372 = vsel %vm2371, %v2370, 0
        %v2373 = vshrl.u32 %v2372, 5
        %v2374 = vand.u32 %v2372, 31
        %v2375 = vsub.s32 32, %v2374
        %v2376 = vshrl.u32 683565275, %v2375
        %v2377 = vshll.u32 683565275, %v2374
        %v2378 = vshrl.u32 2475754826, %v2375
        %v2379 = vor.u32 %v2377, %v2378
        %v2380 = vshll.u32 2475754826, %v2374
        %v2381 = vshrl.u32 2131351028, %v2375
        %v2382 = vor.u32 %v2380, %v2381
        %v2383 = vshll.u32 2131351028, %v2374
        %v2384 = vshrl.u32 2102212464, %v2375
        %v2385 = vor.u32 %v2383, %v2384
        %v2386 = vshll.u32 2102212464, %v2374
        %v2387 = vshrl.u32 920167782, %v2375
        %v2388 = vor.u32 %v2386, %v2387
        %v2389 = vshll.u32 920167782, %v2374
        %v2390 = vshrl.u32 1326507024, %v2375
        %v2391 = vor.u32 %v2389, %v2390
        %vm2392 = vcmp.lt.s32.totalorder %v2373, 1
        %vm2393 = vcmp.lt.s32.totalorder %v2373, 2
        %vm2394 = vcmp.lt.s32.totalorder %v2373, 3
        %vm2395 = vcmp.lt.s32.totalorder %v2373, 4
        %v2396 = vsel %vm2392, %v2376, %v2379
        %v2397 = vsel %vm2395, %v2385, 2102212464
        %v2398 = vsel %vm2394, %v2382, %v2397
        %v2399 = vsel %vm2393, %v2396, %v2398
        %v2400 = vsel %vm2392, %v2379, %v2382
        %v2401 = vsel %vm2395, %v2388, 920167782
        %v2402 = vsel %vm2394, %v2385, %v2401
        %v2403 = vsel %vm2393, %v2400, %v2402
        %v2404 = vsel %vm2392, %v2382, %v2385
        %v2405 = vsel %vm2395, %v2391, 1326507024
        %v2406 = vsel %vm2394, %v2388, %v2405
        %v2407 = vsel %vm2393, %v2404, %v2406
        %v2408 = vshll.u32 %v2368, 8
        %v2409 = vmul.u32.u64.compose %v2408, %v2407
        %v2410 = vextract.low.u32 %v2409
        %v2411 = vextract.high.u32 %v2409
        %v2412 = vmul.u32.u64.compose %v2408, %v2403
        %v2413 = vextract.low.u32 %v2412
        %v2414 = vextract.high.u32 %v2412
        %v2415 = vmul.u32 %v2408, %v2399
        %v2416 = vadd.s32 %v2411, %v2413
        %vm2417 = vc.u32 %v2411, %v2413
        %v2418 = vadd.s32 %v2414, 1
        %v2419 = vsel %vm2417, %v2418, %v2414
        %v2420 = vadd.s32 %v2415, %v2419
        %v2421 = vadd.s32 %v2420, 536870912
        %v2422 = vshrl.u32 %v2421, 30
        %v2423 = vshll.u32 %v2422, 30
        %v2424 = vsub.s32 %v2420, %v2423
        %vm2425 = vcmp.lt.s32.totalorder %v2424, 0
        %v2426 = vsub.s32 0, %v2424
        %v2427 = vsel %vm2425, %v2426, %v2424
        %v2428 = vclz %v2427
        %v2429 = vsub.s32 %v2428, 2
        %vm2430 = vcmp.gt.s32.totalorder 0, %v2429
        %v2431 = vsel %vm2430, 0, %v2429
        %v2432 = vsub.s32 32, %v2431
        %v2433 = vshll.u32 %v2424, %v2431
        %v2434 = vshrl.u32 %v2416, %v2432
        %v2435 = vor.u32 %v2433, %v2434
        %v2436 = vsub.s32 4294967266, %v2431
        %v2437 = vadd.s32 %v2436, 127
        %v2438 = vshll.u32 %v2437, 23
        %v2439 = vor.u32 4788187, %v2438
        %v2440 = vand.u32 2147483647, %v2439
        %v2442 = vcvt.s32.f32 %v2435
        %v2443 = vmul.f32 %v2442, %v2440
        %v2444 = vxor.u32 %v2443, 2147483648
        %v2445 = vsel %vm2362, %v2444, %v2443
        %v2446 = vsub.s32 4, %v2422
        %v2447 = vsel %vm2362, %v2446, %v2422
        %v2448 = vsel %vm2361, %v296, %v2445
        %v2449 = vsel %vm2361, 0, %v2447
        %v2450 = vcosq.f32.pop %v2448
        %v2451 = vsinq.f32.pop %v2448
        %vm2452 = vweird.f32 %v296
        %v2453 = vand.u32 %v2449, 3
        %vm2454 = vcmp.lt.s32.totalorder %v2453, 2
        %vm2455 = vcmp.eq.s32.totalorder %v2453, 0
        %v2456 = vxor.u32 %v2451, 2147483648
        %v2457 = vsel %vm2455, %v2450, %v2456
        %vm2458 = vcmp.eq.s32.totalorder %v2453, 2
        %v2459 = vxor.u32 %v2450, 2147483648
        %v2460 = vsel %vm2458, %v2459, %v2451
        %v2461 = vsel %vm2454, %v2457, %v2460
        %v2462 = vsel %vm2452, nan, %v2461
        %v2463 = vand.u32 2147483647, %v301
        %vm2464 = vcmp.le.f32.partialorder %v2463, 0.7853982
        %vm2465 = vcmp.lt.s32.totalorder %v301, 0
        %v2466 = vand.u32 %v301, 2139095040
        %v2467 = vshrl.u32 %v2466, 23
        %v2468 = vsub.s32 %v2467, 127
        %v2469 = vand.u32 2147483647, %v301
        %v2470 = vand.u32 %v2469, 8388607
        %v2471 = vor.u32 %v2470, 8388608
        %v2472 = vsub.s32 0, %v2471
        %v2473 = vadd.s32 %v2468, 1
        %vm2474 = vcmp.gt.s32.totalorder %v2473, 0
        %v2475 = vsel %vm2474, %v2473, 0
        %v2476 = vshrl.u32 %v2475, 5
        %v2477 = vand.u32 %v2475, 31
        %v2478 = vsub.s32 32, %v2477
        %v2479 = vshrl.u32 683565275, %v2478
        %v2480 = vshll.u32 683565275, %v2477
        %v2481 = vshrl.u32 2475754826, %v2478
        %v2482 = vor.u32 %v2480, %v2481
        %v2483 = vshll.u32 2475754826, %v2477
        %v2484 = vshrl.u32 2131351028, %v2478
        %v2485 = vor.u32 %v2483, %v2484
        %v2486 = vshll.u32 2131351028, %v2477
        %v2487 = vshrl.u32 2102212464, %v2478
        %v2488 = vor.u32 %v2486, %v2487
        %v2489 = vshll.u32 2102212464, %v2477
        %v2490 = vshrl.u32 920167782, %v2478
        %v2491 = vor.u32 %v2489, %v2490
        %v2492 = vshll.u32 920167782, %v2477
        %v2493 = vshrl.u32 1326507024, %v2478
        %v2494 = vor.u32 %v2492, %v2493
        %vm2495 = vcmp.lt.s32.totalorder %v2476, 1
        %vm2496 = vcmp.lt.s32.totalorder %v2476, 2
        %vm2497 = vcmp.lt.s32.totalorder %v2476, 3
        %vm2498 = vcmp.lt.s32.totalorder %v2476, 4
        %v2499 = vsel %vm2495, %v2479, %v2482
        %v2500 = vsel %vm2498, %v2488, 2102212464
        %v2501 = vsel %vm2497, %v2485, %v2500
        %v2502 = vsel %vm2496, %v2499, %v2501
        %v2503 = vsel %vm2495, %v2482, %v2485
        %v2504 = vsel %vm2498, %v2491, 920167782
        %v2505 = vsel %vm2497, %v2488, %v2504
        %v2506 = vsel %vm2496, %v2503, %v2505
        %v2507 = vsel %vm2495, %v2485, %v2488
        %v2508 = vsel %vm2498, %v2494, 1326507024
        %v2509 = vsel %vm2497, %v2491, %v2508
        %v2510 = vsel %vm2496, %v2507, %v2509
        %v2511 = vshll.u32 %v2471, 8
        %v2512 = vmul.u32.u64.compose %v2511, %v2510
        %v2513 = vextract.low.u32 %v2512
        %v2514 = vextract.high.u32 %v2512
        %v2515 = vmul.u32.u64.compose %v2511, %v2506
        %v2516 = vextract.low.u32 %v2515
        %v2517 = vextract.high.u32 %v2515
        %v2518 = vmul.u32 %v2511, %v2502
        %v2519 = vadd.s32 %v2514, %v2516
        %vm2520 = vc.u32 %v2514, %v2516
        %v2521 = vadd.s32 %v2517, 1
        %v2522 = vsel %vm2520, %v2521, %v2517
        %v2523 = vadd.s32 %v2518, %v2522
        %v2524 = vadd.s32 %v2523, 536870912
        %v2525 = vshrl.u32 %v2524, 30
        %v2526 = vshll.u32 %v2525, 30
        %v2527 = vsub.s32 %v2523, %v2526
        %vm2528 = vcmp.lt.s32.totalorder %v2527, 0
        %v2529 = vsub.s32 0, %v2527
        %v2530 = vsel %vm2528, %v2529, %v2527
        %v2531 = vclz %v2530
        %v2532 = vsub.s32 %v2531, 2
        %vm2533 = vcmp.gt.s32.totalorder 0, %v2532
        %v2534 = vsel %vm2533, 0, %v2532
        %v2535 = vsub.s32 32, %v2534
        %v2536 = vshll.u32 %v2527, %v2534
        %v2537 = vshrl.u32 %v2519, %v2535
        %v2538 = vor.u32 %v2536, %v2537
        %v2539 = vsub.s32 4294967266, %v2534
        %v2540 = vadd.s32 %v2539, 127
        %v2541 = vshll.u32 %v2540, 23
        %v2542 = vor.u32 4788187, %v2541
        %v2543 = vand.u32 2147483647, %v2542
        %v2545 = vcvt.s32.f32 %v2538
        %v2546 = vmul.f32 %v2545, %v2543
        %v2547 = vxor.u32 %v2546, 2147483648
        %v2548 = vsel %vm2465, %v2547, %v2546
        %v2549 = vsub.s32 4, %v2525
        %v2550 = vsel %vm2465, %v2549, %v2525
        %v2551 = vsel %vm2464, %v301, %v2548
        %v2552 = vsel %vm2464, 0, %v2550
        %v2553 = vcosq.f32.pop %v2551
        %v2554 = vsinq.f32.pop %v2551
        %vm2555 = vweird.f32 %v301
        %v2556 = vand.u32 %v2552, 3
        %vm2557 = vcmp.lt.s32.totalorder %v2556, 2
        %vm2558 = vcmp.eq.s32.totalorder %v2556, 0
        %v2559 = vxor.u32 %v2554, 2147483648
        %v2560 = vsel %vm2558, %v2553, %v2559
        %vm2561 = vcmp.eq.s32.totalorder %v2556, 2
        %v2562 = vxor.u32 %v2553, 2147483648
        %v2563 = vsel %vm2561, %v2562, %v2554
        %v2564 = vsel %vm2557, %v2560, %v2563
        %v2565 = vsel %vm2555, nan, %v2564
        %v2566 = vand.u32 2147483647, %v306
        %vm2567 = vcmp.le.f32.partialorder %v2566, 0.7853982
        %vm2568 = vcmp.lt.s32.totalorder %v306, 0
        %v2569 = vand.u32 %v306, 2139095040
        %v2570 = vshrl.u32 %v2569, 23
        %v2571 = vsub.s32 %v2570, 127
        %v2572 = vand.u32 2147483647, %v306
        %v2573 = vand.u32 %v2572, 8388607
        %v2574 = vor.u32 %v2573, 8388608
        %v2575 = vsub.s32 0, %v2574
        %v2576 = vadd.s32 %v2571, 1
        %vm2577 = vcmp.gt.s32.totalorder %v2576, 0
        %v2578 = vsel %vm2577, %v2576, 0
        %v2579 = vshrl.u32 %v2578, 5
        %v2580 = vand.u32 %v2578, 31
        %v2581 = vsub.s32 32, %v2580
        %v2582 = vshrl.u32 683565275, %v2581
        %v2583 = vshll.u32 683565275, %v2580
        %v2584 = vshrl.u32 2475754826, %v2581
        %v2585 = vor.u32 %v2583, %v2584
        %v2586 = vshll.u32 2475754826, %v2580
        %v2587 = vshrl.u32 2131351028, %v2581
        %v2588 = vor.u32 %v2586, %v2587
        %v2589 = vshll.u32 2131351028, %v2580
        %v2590 = vshrl.u32 2102212464, %v2581
        %v2591 = vor.u32 %v2589, %v2590
        %v2592 = vshll.u32 2102212464, %v2580
        %v2593 = vshrl.u32 920167782, %v2581
        %v2594 = vor.u32 %v2592, %v2593
        %v2595 = vshll.u32 920167782, %v2580
        %v2596 = vshrl.u32 1326507024, %v2581
        %v2597 = vor.u32 %v2595, %v2596
        %vm2598 = vcmp.lt.s32.totalorder %v2579, 1
        %vm2599 = vcmp.lt.s32.totalorder %v2579, 2
        %vm2600 = vcmp.lt.s32.totalorder %v2579, 3
        %vm2601 = vcmp.lt.s32.totalorder %v2579, 4
        %v2602 = vsel %vm2598, %v2582, %v2585
        %v2603 = vsel %vm2601, %v2591, 2102212464
        %v2604 = vsel %vm2600, %v2588, %v2603
        %v2605 = vsel %vm2599, %v2602, %v2604
        %v2606 = vsel %vm2598, %v2585, %v2588
        %v2607 = vsel %vm2601, %v2594, 920167782
        %v2608 = vsel %vm2600, %v2591, %v2607
        %v2609 = vsel %vm2599, %v2606, %v2608
        %v2610 = vsel %vm2598, %v2588, %v2591
        %v2611 = vsel %vm2601, %v2597, 1326507024
        %v2612 = vsel %vm2600, %v2594, %v2611
        %v2613 = vsel %vm2599, %v2610, %v2612
        %v2614 = vshll.u32 %v2574, 8
        %v2615 = vmul.u32.u64.compose %v2614, %v2613
        %v2616 = vextract.low.u32 %v2615
        %v2617 = vextract.high.u32 %v2615
        %v2618 = vmul.u32.u64.compose %v2614, %v2609
        %v2619 = vextract.low.u32 %v2618
        %v2620 = vextract.high.u32 %v2618
        %v2621 = vmul.u32 %v2614, %v2605
        %v2622 = vadd.s32 %v2617, %v2619
        %vm2623 = vc.u32 %v2617, %v2619
        %v2624 = vadd.s32 %v2620, 1
        %v2625 = vsel %vm2623, %v2624, %v2620
        %v2626 = vadd.s32 %v2621, %v2625
        %v2627 = vadd.s32 %v2626, 536870912
        %v2628 = vshrl.u32 %v2627, 30
        %v2629 = vshll.u32 %v2628, 30
        %v2630 = vsub.s32 %v2626, %v2629
        %vm2631 = vcmp.lt.s32.totalorder %v2630, 0
        %v2632 = vsub.s32 0, %v2630
        %v2633 = vsel %vm2631, %v2632, %v2630
        %v2634 = vclz %v2633
        %v2635 = vsub.s32 %v2634, 2
        %vm2636 = vcmp.gt.s32.totalorder 0, %v2635
        %v2637 = vsel %vm2636, 0, %v2635
        %v2638 = vsub.s32 32, %v2637
        %v2639 = vshll.u32 %v2630, %v2637
        %v2640 = vshrl.u32 %v2622, %v2638
        %v2641 = vor.u32 %v2639, %v2640
        %v2642 = vsub.s32 4294967266, %v2637
        %v2643 = vadd.s32 %v2642, 127
        %v2644 = vshll.u32 %v2643, 23
        %v2645 = vor.u32 4788187, %v2644
        %v2646 = vand.u32 2147483647, %v2645
        %v2648 = vcvt.s32.f32 %v2641
        %v2649 = vmul.f32 %v2648, %v2646
        %v2650 = vxor.u32 %v2649, 2147483648
        %v2651 = vsel %vm2568, %v2650, %v2649
        %v2652 = vsub.s32 4, %v2628
        %v2653 = vsel %vm2568, %v2652, %v2628
        %v2654 = vsel %vm2567, %v306, %v2651
        %v2655 = vsel %vm2567, 0, %v2653
        %v2656 = vcosq.f32.pop %v2654
        %v2657 = vsinq.f32.pop %v2654
        %vm2658 = vweird.f32 %v306
        %v2659 = vand.u32 %v2655, 3
        %vm2660 = vcmp.lt.s32.totalorder %v2659, 2
        %vm2661 = vcmp.eq.s32.totalorder %v2659, 0
        %v2662 = vxor.u32 %v2657, 2147483648
        %v2663 = vsel %vm2661, %v2656, %v2662
        %vm2664 = vcmp.eq.s32.totalorder %v2659, 2
        %v2665 = vxor.u32 %v2656, 2147483648
        %v2666 = vsel %vm2664, %v2665, %v2657
        %v2667 = vsel %vm2660, %v2663, %v2666
        %v2668 = vsel %vm2658, nan, %v2667
        %v2669 = vand.u32 2147483647, %v311
        %vm2670 = vcmp.le.f32.partialorder %v2669, 0.7853982
        %vm2671 = vcmp.lt.s32.totalorder %v311, 0
        %v2672 = vand.u32 %v311, 2139095040
        %v2673 = vshrl.u32 %v2672, 23
        %v2674 = vsub.s32 %v2673, 127
        %v2675 = vand.u32 2147483647, %v311
        %v2676 = vand.u32 %v2675, 8388607
        %v2677 = vor.u32 %v2676, 8388608
        %v2678 = vsub.s32 0, %v2677
        %v2679 = vadd.s32 %v2674, 1
        %vm2680 = vcmp.gt.s32.totalorder %v2679, 0
        %v2681 = vsel %vm2680, %v2679, 0
        %v2682 = vshrl.u32 %v2681, 5
        %v2683 = vand.u32 %v2681, 31
        %v2684 = vsub.s32 32, %v2683
        %v2685 = vshrl.u32 683565275, %v2684
        %v2686 = vshll.u32 683565275, %v2683
        %v2687 = vshrl.u32 2475754826, %v2684
        %v2688 = vor.u32 %v2686, %v2687
        %v2689 = vshll.u32 2475754826, %v2683
        %v2690 = vshrl.u32 2131351028, %v2684
        %v2691 = vor.u32 %v2689, %v2690
        %v2692 = vshll.u32 2131351028, %v2683
        %v2693 = vshrl.u32 2102212464, %v2684
        %v2694 = vor.u32 %v2692, %v2693
        %v2695 = vshll.u32 2102212464, %v2683
        %v2696 = vshrl.u32 920167782, %v2684
        %v2697 = vor.u32 %v2695, %v2696
        %v2698 = vshll.u32 920167782, %v2683
        %v2699 = vshrl.u32 1326507024, %v2684
        %v2700 = vor.u32 %v2698, %v2699
        %vm2701 = vcmp.lt.s32.totalorder %v2682, 1
        %vm2702 = vcmp.lt.s32.totalorder %v2682, 2
        %vm2703 = vcmp.lt.s32.totalorder %v2682, 3
        %vm2704 = vcmp.lt.s32.totalorder %v2682, 4
        %v2705 = vsel %vm2701, %v2685, %v2688
        %v2706 = vsel %vm2704, %v2694, 2102212464
        %v2707 = vsel %vm2703, %v2691, %v2706
        %v2708 = vsel %vm2702, %v2705, %v2707
        %v2709 = vsel %vm2701, %v2688, %v2691
        %v2710 = vsel %vm2704, %v2697, 920167782
        %v2711 = vsel %vm2703, %v2694, %v2710
        %v2712 = vsel %vm2702, %v2709, %v2711
        %v2713 = vsel %vm2701, %v2691, %v2694
        %v2714 = vsel %vm2704, %v2700, 1326507024
        %v2715 = vsel %vm2703, %v2697, %v2714
        %v2716 = vsel %vm2702, %v2713, %v2715
        %v2717 = vshll.u32 %v2677, 8
        %v2718 = vmul.u32.u64.compose %v2717, %v2716
        %v2719 = vextract.low.u32 %v2718
        %v2720 = vextract.high.u32 %v2718
        %v2721 = vmul.u32.u64.compose %v2717, %v2712
        %v2722 = vextract.low.u32 %v2721
        %v2723 = vextract.high.u32 %v2721
        %v2724 = vmul.u32 %v2717, %v2708
        %v2725 = vadd.s32 %v2720, %v2722
        %vm2726 = vc.u32 %v2720, %v2722
        %v2727 = vadd.s32 %v2723, 1
        %v2728 = vsel %vm2726, %v2727, %v2723
        %v2729 = vadd.s32 %v2724, %v2728
        %v2730 = vadd.s32 %v2729, 536870912
        %v2731 = vshrl.u32 %v2730, 30
        %v2732 = vshll.u32 %v2731, 30
        %v2733 = vsub.s32 %v2729, %v2732
        %vm2734 = vcmp.lt.s32.totalorder %v2733, 0
        %v2735 = vsub.s32 0, %v2733
        %v2736 = vsel %vm2734, %v2735, %v2733
        %v2737 = vclz %v2736
        %v2738 = vsub.s32 %v2737, 2
        %vm2739 = vcmp.gt.s32.totalorder 0, %v2738
        %v2740 = vsel %vm2739, 0, %v2738
        %v2741 = vsub.s32 32, %v2740
        %v2742 = vshll.u32 %v2733, %v2740
        %v2743 = vshrl.u32 %v2725, %v2741
        %v2744 = vor.u32 %v2742, %v2743
        %v2745 = vsub.s32 4294967266, %v2740
        %v2746 = vadd.s32 %v2745, 127
        %v2747 = vshll.u32 %v2746, 23
        %v2748 = vor.u32 4788187, %v2747
        %v2749 = vand.u32 2147483647, %v2748
        %v2751 = vcvt.s32.f32 %v2744
        %v2752 = vmul.f32 %v2751, %v2749
        %v2753 = vxor.u32 %v2752, 2147483648
        %v2754 = vsel %vm2671, %v2753, %v2752
        %v2755 = vsub.s32 4, %v2731
        %v2756 = vsel %vm2671, %v2755, %v2731
        %v2757 = vsel %vm2670, %v311, %v2754
        %v2758 = vsel %vm2670, 0, %v2756
        %v2759 = vcosq.f32.pop %v2757
        %v2760 = vsinq.f32.pop %v2757
        %vm2761 = vweird.f32 %v311
        %v2762 = vand.u32 %v2758, 3
        %vm2763 = vcmp.lt.s32.totalorder %v2762, 2
        %vm2764 = vcmp.eq.s32.totalorder %v2762, 0
        %v2765 = vxor.u32 %v2760, 2147483648
        %v2766 = vsel %vm2764, %v2759, %v2765
        %vm2767 = vcmp.eq.s32.totalorder %v2762, 2
        %v2768 = vxor.u32 %v2759, 2147483648
        %v2769 = vsel %vm2767, %v2768, %v2760
        %v2770 = vsel %vm2763, %v2766, %v2769
        %v2771 = vsel %vm2761, nan, %v2770
        %v2772 = vand.u32 2147483647, %v316
        %vm2773 = vcmp.le.f32.partialorder %v2772, 0.7853982
        %vm2774 = vcmp.lt.s32.totalorder %v316, 0
        %v2775 = vand.u32 %v316, 2139095040
        %v2776 = vshrl.u32 %v2775, 23
        %v2777 = vsub.s32 %v2776, 127
        %v2778 = vand.u32 2147483647, %v316
        %v2779 = vand.u32 %v2778, 8388607
        %v2780 = vor.u32 %v2779, 8388608
        %v2781 = vsub.s32 0, %v2780
        %v2782 = vadd.s32 %v2777, 1
        %vm2783 = vcmp.gt.s32.totalorder %v2782, 0
        %v2784 = vsel %vm2783, %v2782, 0
        %v2785 = vshrl.u32 %v2784, 5
        %v2786 = vand.u32 %v2784, 31
        %v2787 = vsub.s32 32, %v2786
        %v2788 = vshrl.u32 683565275, %v2787
        %v2789 = vshll.u32 683565275, %v2786
        %v2790 = vshrl.u32 2475754826, %v2787
        %v2791 = vor.u32 %v2789, %v2790
        %v2792 = vshll.u32 2475754826, %v2786
        %v2793 = vshrl.u32 2131351028, %v2787
        %v2794 = vor.u32 %v2792, %v2793
        %v2795 = vshll.u32 2131351028, %v2786
        %v2796 = vshrl.u32 2102212464, %v2787
        %v2797 = vor.u32 %v2795, %v2796
        %v2798 = vshll.u32 2102212464, %v2786
        %v2799 = vshrl.u32 920167782, %v2787
        %v2800 = vor.u32 %v2798, %v2799
        %v2801 = vshll.u32 920167782, %v2786
        %v2802 = vshrl.u32 1326507024, %v2787
        %v2803 = vor.u32 %v2801, %v2802
        %vm2804 = vcmp.lt.s32.totalorder %v2785, 1
        %vm2805 = vcmp.lt.s32.totalorder %v2785, 2
        %vm2806 = vcmp.lt.s32.totalorder %v2785, 3
        %vm2807 = vcmp.lt.s32.totalorder %v2785, 4
        %v2808 = vsel %vm2804, %v2788, %v2791
        %v2809 = vsel %vm2807, %v2797, 2102212464
        %v2810 = vsel %vm2806, %v2794, %v2809
        %v2811 = vsel %vm2805, %v2808, %v2810
        %v2812 = vsel %vm2804, %v2791, %v2794
        %v2813 = vsel %vm2807, %v2800, 920167782
        %v2814 = vsel %vm2806, %v2797, %v2813
        %v2815 = vsel %vm2805, %v2812, %v2814
        %v2816 = vsel %vm2804, %v2794, %v2797
        %v2817 = vsel %vm2807, %v2803, 1326507024
        %v2818 = vsel %vm2806, %v2800, %v2817
        %v2819 = vsel %vm2805, %v2816, %v2818
        %v2820 = vshll.u32 %v2780, 8
        %v2821 = vmul.u32.u64.compose %v2820, %v2819
        %v2822 = vextract.low.u32 %v2821
        %v2823 = vextract.high.u32 %v2821
        %v2824 = vmul.u32.u64.compose %v2820, %v2815
        %v2825 = vextract.low.u32 %v2824
        %v2826 = vextract.high.u32 %v2824
        %v2827 = vmul.u32 %v2820, %v2811
        %v2828 = vadd.s32 %v2823, %v2825
        %vm2829 = vc.u32 %v2823, %v2825
        %v2830 = vadd.s32 %v2826, 1
        %v2831 = vsel %vm2829, %v2830, %v2826
        %v2832 = vadd.s32 %v2827, %v2831
        %v2833 = vadd.s32 %v2832, 536870912
        %v2834 = vshrl.u32 %v2833, 30
        %v2835 = vshll.u32 %v2834, 30
        %v2836 = vsub.s32 %v2832, %v2835
        %vm2837 = vcmp.lt.s32.totalorder %v2836, 0
        %v2838 = vsub.s32 0, %v2836
        %v2839 = vsel %vm2837, %v2838, %v2836
        %v2840 = vclz %v2839
        %v2841 = vsub.s32 %v2840, 2
        %vm2842 = vcmp.gt.s32.totalorder 0, %v2841
        %v2843 = vsel %vm2842, 0, %v2841
        %v2844 = vsub.s32 32, %v2843
        %v2845 = vshll.u32 %v2836, %v2843
        %v2846 = vshrl.u32 %v2828, %v2844
        %v2847 = vor.u32 %v2845, %v2846
        %v2848 = vsub.s32 4294967266, %v2843
        %v2849 = vadd.s32 %v2848, 127
        %v2850 = vshll.u32 %v2849, 23
        %v2851 = vor.u32 4788187, %v2850
        %v2852 = vand.u32 2147483647, %v2851
        %v2854 = vcvt.s32.f32 %v2847
        %v2855 = vmul.f32 %v2854, %v2852
        %v2856 = vxor.u32 %v2855, 2147483648
        %v2857 = vsel %vm2774, %v2856, %v2855
        %v2858 = vsub.s32 4, %v2834
        %v2859 = vsel %vm2774, %v2858, %v2834
        %v2860 = vsel %vm2773, %v316, %v2857
        %v2861 = vsel %vm2773, 0, %v2859
        %v2862 = vcosq.f32.pop %v2860
        %v2863 = vsinq.f32.pop %v2860
        %vm2864 = vweird.f32 %v316
        %v2865 = vand.u32 %v2861, 3
        %vm2866 = vcmp.lt.s32.totalorder %v2865, 2
        %vm2867 = vcmp.eq.s32.totalorder %v2865, 0
        %v2868 = vxor.u32 %v2863, 2147483648
        %v2869 = vsel %vm2867, %v2862, %v2868
        %vm2870 = vcmp.eq.s32.totalorder %v2865, 2
        %v2871 = vxor.u32 %v2862, 2147483648
        %v2872 = vsel %vm2870, %v2871, %v2863
        %v2873 = vsel %vm2866, %v2869, %v2872
        %v2874 = vsel %vm2864, nan, %v2873
        %v2875 = vand.u32 2147483647, %v321
        %vm2876 = vcmp.le.f32.partialorder %v2875, 0.7853982
        %vm2877 = vcmp.lt.s32.totalorder %v321, 0
        %v2878 = vand.u32 %v321, 2139095040
        %v2879 = vshrl.u32 %v2878, 23
        %v2880 = vsub.s32 %v2879, 127
        %v2881 = vand.u32 2147483647, %v321
        %v2882 = vand.u32 %v2881, 8388607
        %v2883 = vor.u32 %v2882, 8388608
        %v2884 = vsub.s32 0, %v2883
        %v2885 = vadd.s32 %v2880, 1
        %vm2886 = vcmp.gt.s32.totalorder %v2885, 0
        %v2887 = vsel %vm2886, %v2885, 0
        %v2888 = vshrl.u32 %v2887, 5
        %v2889 = vand.u32 %v2887, 31
        %v2890 = vsub.s32 32, %v2889
        %v2891 = vshrl.u32 683565275, %v2890
        %v2892 = vshll.u32 683565275, %v2889
        %v2893 = vshrl.u32 2475754826, %v2890
        %v2894 = vor.u32 %v2892, %v2893
        %v2895 = vshll.u32 2475754826, %v2889
        %v2896 = vshrl.u32 2131351028, %v2890
        %v2897 = vor.u32 %v2895, %v2896
        %v2898 = vshll.u32 2131351028, %v2889
        %v2899 = vshrl.u32 2102212464, %v2890
        %v2900 = vor.u32 %v2898, %v2899
        %v2901 = vshll.u32 2102212464, %v2889
        %v2902 = vshrl.u32 920167782, %v2890
        %v2903 = vor.u32 %v2901, %v2902
        %v2904 = vshll.u32 920167782, %v2889
        %v2905 = vshrl.u32 1326507024, %v2890
        %v2906 = vor.u32 %v2904, %v2905
        %vm2907 = vcmp.lt.s32.totalorder %v2888, 1
        %vm2908 = vcmp.lt.s32.totalorder %v2888, 2
        %vm2909 = vcmp.lt.s32.totalorder %v2888, 3
        %vm2910 = vcmp.lt.s32.totalorder %v2888, 4
        %v2911 = vsel %vm2907, %v2891, %v2894
        %v2912 = vsel %vm2910, %v2900, 2102212464
        %v2913 = vsel %vm2909, %v2897, %v2912
        %v2914 = vsel %vm2908, %v2911, %v2913
        %v2915 = vsel %vm2907, %v2894, %v2897
        %v2916 = vsel %vm2910, %v2903, 920167782
        %v2917 = vsel %vm2909, %v2900, %v2916
        %v2918 = vsel %vm2908, %v2915, %v2917
        %v2919 = vsel %vm2907, %v2897, %v2900
        %v2920 = vsel %vm2910, %v2906, 1326507024
        %v2921 = vsel %vm2909, %v2903, %v2920
        %v2922 = vsel %vm2908, %v2919, %v2921
        %v2923 = vshll.u32 %v2883, 8
        %v2924 = vmul.u32.u64.compose %v2923, %v2922
        %v2925 = vextract.low.u32 %v2924
        %v2926 = vextract.high.u32 %v2924
        %v2927 = vmul.u32.u64.compose %v2923, %v2918
        %v2928 = vextract.low.u32 %v2927
        %v2929 = vextract.high.u32 %v2927
        %v2930 = vmul.u32 %v2923, %v2914
        %v2931 = vadd.s32 %v2926, %v2928
        %vm2932 = vc.u32 %v2926, %v2928
        %v2933 = vadd.s32 %v2929, 1
        %v2934 = vsel %vm2932, %v2933, %v2929
        %v2935 = vadd.s32 %v2930, %v2934
        %v2936 = vadd.s32 %v2935, 536870912
        %v2937 = vshrl.u32 %v2936, 30
        %v2938 = vshll.u32 %v2937, 30
        %v2939 = vsub.s32 %v2935, %v2938
        %vm2940 = vcmp.lt.s32.totalorder %v2939, 0
        %v2941 = vsub.s32 0, %v2939
        %v2942 = vsel %vm2940, %v2941, %v2939
        %v2943 = vclz %v2942
        %v2944 = vsub.s32 %v2943, 2
        %vm2945 = vcmp.gt.s32.totalorder 0, %v2944
        %v2946 = vsel %vm2945, 0, %v2944
        %v2947 = vsub.s32 32, %v2946
        %v2948 = vshll.u32 %v2939, %v2946
        %v2949 = vshrl.u32 %v2931, %v2947
        %v2950 = vor.u32 %v2948, %v2949
        %v2951 = vsub.s32 4294967266, %v2946
        %v2952 = vadd.s32 %v2951, 127
        %v2953 = vshll.u32 %v2952, 23
        %v2954 = vor.u32 4788187, %v2953
        %v2955 = vand.u32 2147483647, %v2954
        %v2957 = vcvt.s32.f32 %v2950
        %v2958 = vmul.f32 %v2957, %v2955
        %v2959 = vxor.u32 %v2958, 2147483648
        %v2960 = vsel %vm2877, %v2959, %v2958
        %v2961 = vsub.s32 4, %v2937
        %v2962 = vsel %vm2877, %v2961, %v2937
        %v2963 = vsel %vm2876, %v321, %v2960
        %v2964 = vsel %vm2876, 0, %v2962
        %v2965 = vcosq.f32.pop %v2963
        %v2966 = vsinq.f32.pop %v2963
        %vm2967 = vweird.f32 %v321
        %v2968 = vand.u32 %v2964, 3
        %vm2969 = vcmp.lt.s32.totalorder %v2968, 2
        %vm2970 = vcmp.eq.s32.totalorder %v2968, 0
        %v2971 = vxor.u32 %v2966, 2147483648
        %v2972 = vsel %vm2970, %v2965, %v2971
        %vm2973 = vcmp.eq.s32.totalorder %v2968, 2
        %v2974 = vxor.u32 %v2965, 2147483648
        %v2975 = vsel %vm2973, %v2974, %v2966
        %v2976 = vsel %vm2969, %v2972, %v2975
        %v2977 = vsel %vm2967, nan, %v2976
        %v2978 = vand.u32 2147483647, %v326
        %vm2979 = vcmp.le.f32.partialorder %v2978, 0.7853982
        %vm2980 = vcmp.lt.s32.totalorder %v326, 0
        %v2981 = vand.u32 %v326, 2139095040
        %v2982 = vshrl.u32 %v2981, 23
        %v2983 = vsub.s32 %v2982, 127
        %v2984 = vand.u32 2147483647, %v326
        %v2985 = vand.u32 %v2984, 8388607
        %v2986 = vor.u32 %v2985, 8388608
        %v2987 = vsub.s32 0, %v2986
        %v2988 = vadd.s32 %v2983, 1
        %vm2989 = vcmp.gt.s32.totalorder %v2988, 0
        %v2990 = vsel %vm2989, %v2988, 0
        %v2991 = vshrl.u32 %v2990, 5
        %v2992 = vand.u32 %v2990, 31
        %v2993 = vsub.s32 32, %v2992
        %v2994 = vshrl.u32 683565275, %v2993
        %v2995 = vshll.u32 683565275, %v2992
        %v2996 = vshrl.u32 2475754826, %v2993
        %v2997 = vor.u32 %v2995, %v2996
        %v2998 = vshll.u32 2475754826, %v2992
        %v2999 = vshrl.u32 2131351028, %v2993
        %v3000 = vor.u32 %v2998, %v2999
        %v3001 = vshll.u32 2131351028, %v2992
        %v3002 = vshrl.u32 2102212464, %v2993
        %v3003 = vor.u32 %v3001, %v3002
        %v3004 = vshll.u32 2102212464, %v2992
        %v3005 = vshrl.u32 920167782, %v2993
        %v3006 = vor.u32 %v3004, %v3005
        %v3007 = vshll.u32 920167782, %v2992
        %v3008 = vshrl.u32 1326507024, %v2993
        %v3009 = vor.u32 %v3007, %v3008
        %vm3010 = vcmp.lt.s32.totalorder %v2991, 1
        %vm3011 = vcmp.lt.s32.totalorder %v2991, 2
        %vm3012 = vcmp.lt.s32.totalorder %v2991, 3
        %vm3013 = vcmp.lt.s32.totalorder %v2991, 4
        %v3014 = vsel %vm3010, %v2994, %v2997
        %v3015 = vsel %vm3013, %v3003, 2102212464
        %v3016 = vsel %vm3012, %v3000, %v3015
        %v3017 = vsel %vm3011, %v3014, %v3016
        %v3018 = vsel %vm3010, %v2997, %v3000
        %v3019 = vsel %vm3013, %v3006, 920167782
        %v3020 = vsel %vm3012, %v3003, %v3019
        %v3021 = vsel %vm3011, %v3018, %v3020
        %v3022 = vsel %vm3010, %v3000, %v3003
        %v3023 = vsel %vm3013, %v3009, 1326507024
        %v3024 = vsel %vm3012, %v3006, %v3023
        %v3025 = vsel %vm3011, %v3022, %v3024
        %v3026 = vshll.u32 %v2986, 8
        %v3027 = vmul.u32.u64.compose %v3026, %v3025
        %v3028 = vextract.low.u32 %v3027
        %v3029 = vextract.high.u32 %v3027
        %v3030 = vmul.u32.u64.compose %v3026, %v3021
        %v3031 = vextract.low.u32 %v3030
        %v3032 = vextract.high.u32 %v3030
        %v3033 = vmul.u32 %v3026, %v3017
        %v3034 = vadd.s32 %v3029, %v3031
        %vm3035 = vc.u32 %v3029, %v3031
        %v3036 = vadd.s32 %v3032, 1
        %v3037 = vsel %vm3035, %v3036, %v3032
        %v3038 = vadd.s32 %v3033, %v3037
        %v3039 = vadd.s32 %v3038, 536870912
        %v3040 = vshrl.u32 %v3039, 30
        %v3041 = vshll.u32 %v3040, 30
        %v3042 = vsub.s32 %v3038, %v3041
        %vm3043 = vcmp.lt.s32.totalorder %v3042, 0
        %v3044 = vsub.s32 0, %v3042
        %v3045 = vsel %vm3043, %v3044, %v3042
        %v3046 = vclz %v3045
        %v3047 = vsub.s32 %v3046, 2
        %vm3048 = vcmp.gt.s32.totalorder 0, %v3047
        %v3049 = vsel %vm3048, 0, %v3047
        %v3050 = vsub.s32 32, %v3049
        %v3051 = vshll.u32 %v3042, %v3049
        %v3052 = vshrl.u32 %v3034, %v3050
        %v3053 = vor.u32 %v3051, %v3052
        %v3054 = vsub.s32 4294967266, %v3049
        %v3055 = vadd.s32 %v3054, 127
        %v3056 = vshll.u32 %v3055, 23
        %v3057 = vor.u32 4788187, %v3056
        %v3058 = vand.u32 2147483647, %v3057
        %v3060 = vcvt.s32.f32 %v3053
        %v3061 = vmul.f32 %v3060, %v3058
        %v3062 = vxor.u32 %v3061, 2147483648
        %v3063 = vsel %vm2980, %v3062, %v3061
        %v3064 = vsub.s32 4, %v3040
        %v3065 = vsel %vm2980, %v3064, %v3040
        %v3066 = vsel %vm2979, %v326, %v3063
        %v3067 = vsel %vm2979, 0, %v3065
        %v3068 = vcosq.f32.pop %v3066
        %v3069 = vsinq.f32.pop %v3066
        %vm3070 = vweird.f32 %v326
        %v3071 = vand.u32 %v3067, 3
        %vm3072 = vcmp.lt.s32.totalorder %v3071, 2
        %vm3073 = vcmp.eq.s32.totalorder %v3071, 0
        %v3074 = vxor.u32 %v3069, 2147483648
        %v3075 = vsel %vm3073, %v3068, %v3074
        %vm3076 = vcmp.eq.s32.totalorder %v3071, 2
        %v3077 = vxor.u32 %v3068, 2147483648
        %v3078 = vsel %vm3076, %v3077, %v3069
        %v3079 = vsel %vm3072, %v3075, %v3078
        %v3080 = vsel %vm3070, nan, %v3079
        %v3081 = vand.u32 2147483647, %v331
        %vm3082 = vcmp.le.f32.partialorder %v3081, 0.7853982
        %vm3083 = vcmp.lt.s32.totalorder %v331, 0
        %v3084 = vand.u32 %v331, 2139095040
        %v3085 = vshrl.u32 %v3084, 23
        %v3086 = vsub.s32 %v3085, 127
        %v3087 = vand.u32 2147483647, %v331
        %v3088 = vand.u32 %v3087, 8388607
        %v3089 = vor.u32 %v3088, 8388608
        %v3090 = vsub.s32 0, %v3089
        %v3091 = vadd.s32 %v3086, 1
        %vm3092 = vcmp.gt.s32.totalorder %v3091, 0
        %v3093 = vsel %vm3092, %v3091, 0
        %v3094 = vshrl.u32 %v3093, 5
        %v3095 = vand.u32 %v3093, 31
        %v3096 = vsub.s32 32, %v3095
        %v3097 = vshrl.u32 683565275, %v3096
        %v3098 = vshll.u32 683565275, %v3095
        %v3099 = vshrl.u32 2475754826, %v3096
        %v3100 = vor.u32 %v3098, %v3099
        %v3101 = vshll.u32 2475754826, %v3095
        %v3102 = vshrl.u32 2131351028, %v3096
        %v3103 = vor.u32 %v3101, %v3102
        %v3104 = vshll.u32 2131351028, %v3095
        %v3105 = vshrl.u32 2102212464, %v3096
        %v3106 = vor.u32 %v3104, %v3105
        %v3107 = vshll.u32 2102212464, %v3095
        %v3108 = vshrl.u32 920167782, %v3096
        %v3109 = vor.u32 %v3107, %v3108
        %v3110 = vshll.u32 920167782, %v3095
        %v3111 = vshrl.u32 1326507024, %v3096
        %v3112 = vor.u32 %v3110, %v3111
        %vm3113 = vcmp.lt.s32.totalorder %v3094, 1
        %vm3114 = vcmp.lt.s32.totalorder %v3094, 2
        %vm3115 = vcmp.lt.s32.totalorder %v3094, 3
        %vm3116 = vcmp.lt.s32.totalorder %v3094, 4
        %v3117 = vsel %vm3113, %v3097, %v3100
        %v3118 = vsel %vm3116, %v3106, 2102212464
        %v3119 = vsel %vm3115, %v3103, %v3118
        %v3120 = vsel %vm3114, %v3117, %v3119
        %v3121 = vsel %vm3113, %v3100, %v3103
        %v3122 = vsel %vm3116, %v3109, 920167782
        %v3123 = vsel %vm3115, %v3106, %v3122
        %v3124 = vsel %vm3114, %v3121, %v3123
        %v3125 = vsel %vm3113, %v3103, %v3106
        %v3126 = vsel %vm3116, %v3112, 1326507024
        %v3127 = vsel %vm3115, %v3109, %v3126
        %v3128 = vsel %vm3114, %v3125, %v3127
        %v3129 = vshll.u32 %v3089, 8
        %v3130 = vmul.u32.u64.compose %v3129, %v3128
        %v3131 = vextract.low.u32 %v3130
        %v3132 = vextract.high.u32 %v3130
        %v3133 = vmul.u32.u64.compose %v3129, %v3124
        %v3134 = vextract.low.u32 %v3133
        %v3135 = vextract.high.u32 %v3133
        %v3136 = vmul.u32 %v3129, %v3120
        %v3137 = vadd.s32 %v3132, %v3134
        %vm3138 = vc.u32 %v3132, %v3134
        %v3139 = vadd.s32 %v3135, 1
        %v3140 = vsel %vm3138, %v3139, %v3135
        %v3141 = vadd.s32 %v3136, %v3140
        %v3142 = vadd.s32 %v3141, 536870912
        %v3143 = vshrl.u32 %v3142, 30
        %v3144 = vshll.u32 %v3143, 30
        %v3145 = vsub.s32 %v3141, %v3144
        %vm3146 = vcmp.lt.s32.totalorder %v3145, 0
        %v3147 = vsub.s32 0, %v3145
        %v3148 = vsel %vm3146, %v3147, %v3145
        %v3149 = vclz %v3148
        %v3150 = vsub.s32 %v3149, 2
        %vm3151 = vcmp.gt.s32.totalorder 0, %v3150
        %v3152 = vsel %vm3151, 0, %v3150
        %v3153 = vsub.s32 32, %v3152
        %v3154 = vshll.u32 %v3145, %v3152
        %v3155 = vshrl.u32 %v3137, %v3153
        %v3156 = vor.u32 %v3154, %v3155
        %v3157 = vsub.s32 4294967266, %v3152
        %v3158 = vadd.s32 %v3157, 127
        %v3159 = vshll.u32 %v3158, 23
        %v3160 = vor.u32 4788187, %v3159
        %v3161 = vand.u32 2147483647, %v3160
        %v3163 = vcvt.s32.f32 %v3156
        %v3164 = vmul.f32 %v3163, %v3161
        %v3165 = vxor.u32 %v3164, 2147483648
        %v3166 = vsel %vm3083, %v3165, %v3164
        %v3167 = vsub.s32 4, %v3143
        %v3168 = vsel %vm3083, %v3167, %v3143
        %v3169 = vsel %vm3082, %v331, %v3166
        %v3170 = vsel %vm3082, 0, %v3168
        %v3171 = vcosq.f32.pop %v3169
        %v3172 = vsinq.f32.pop %v3169
        %vm3173 = vweird.f32 %v331
        %v3174 = vand.u32 %v3170, 3
        %vm3175 = vcmp.lt.s32.totalorder %v3174, 2
        %vm3176 = vcmp.eq.s32.totalorder %v3174, 0
        %v3177 = vxor.u32 %v3172, 2147483648
        %v3178 = vsel %vm3176, %v3171, %v3177
        %vm3179 = vcmp.eq.s32.totalorder %v3174, 2
        %v3180 = vxor.u32 %v3171, 2147483648
        %v3181 = vsel %vm3179, %v3180, %v3172
        %v3182 = vsel %vm3175, %v3178, %v3181
        %v3183 = vsel %vm3173, nan, %v3182
        %v3184 = vand.u32 2147483647, %v336
        %vm3185 = vcmp.le.f32.partialorder %v3184, 0.7853982
        %vm3186 = vcmp.lt.s32.totalorder %v336, 0
        %v3187 = vand.u32 %v336, 2139095040
        %v3188 = vshrl.u32 %v3187, 23
        %v3189 = vsub.s32 %v3188, 127
        %v3190 = vand.u32 2147483647, %v336
        %v3191 = vand.u32 %v3190, 8388607
        %v3192 = vor.u32 %v3191, 8388608
        %v3193 = vsub.s32 0, %v3192
        %v3194 = vadd.s32 %v3189, 1
        %vm3195 = vcmp.gt.s32.totalorder %v3194, 0
        %v3196 = vsel %vm3195, %v3194, 0
        %v3197 = vshrl.u32 %v3196, 5
        %v3198 = vand.u32 %v3196, 31
        %v3199 = vsub.s32 32, %v3198
        %v3200 = vshrl.u32 683565275, %v3199
        %v3201 = vshll.u32 683565275, %v3198
        %v3202 = vshrl.u32 2475754826, %v3199
        %v3203 = vor.u32 %v3201, %v3202
        %v3204 = vshll.u32 2475754826, %v3198
        %v3205 = vshrl.u32 2131351028, %v3199
        %v3206 = vor.u32 %v3204, %v3205
        %v3207 = vshll.u32 2131351028, %v3198
        %v3208 = vshrl.u32 2102212464, %v3199
        %v3209 = vor.u32 %v3207, %v3208
        %v3210 = vshll.u32 2102212464, %v3198
        %v3211 = vshrl.u32 920167782, %v3199
        %v3212 = vor.u32 %v3210, %v3211
        %v3213 = vshll.u32 920167782, %v3198
        %v3214 = vshrl.u32 1326507024, %v3199
        %v3215 = vor.u32 %v3213, %v3214
        %vm3216 = vcmp.lt.s32.totalorder %v3197, 1
        %vm3217 = vcmp.lt.s32.totalorder %v3197, 2
        %vm3218 = vcmp.lt.s32.totalorder %v3197, 3
        %vm3219 = vcmp.lt.s32.totalorder %v3197, 4
        %v3220 = vsel %vm3216, %v3200, %v3203
        %v3221 = vsel %vm3219, %v3209, 2102212464
        %v3222 = vsel %vm3218, %v3206, %v3221
        %v3223 = vsel %vm3217, %v3220, %v3222
        %v3224 = vsel %vm3216, %v3203, %v3206
        %v3225 = vsel %vm3219, %v3212, 920167782
        %v3226 = vsel %vm3218, %v3209, %v3225
        %v3227 = vsel %vm3217, %v3224, %v3226
        %v3228 = vsel %vm3216, %v3206, %v3209
        %v3229 = vsel %vm3219, %v3215, 1326507024
        %v3230 = vsel %vm3218, %v3212, %v3229
        %v3231 = vsel %vm3217, %v3228, %v3230
        %v3232 = vshll.u32 %v3192, 8
        %v3233 = vmul.u32.u64.compose %v3232, %v3231
        %v3234 = vextract.low.u32 %v3233
        %v3235 = vextract.high.u32 %v3233
        %v3236 = vmul.u32.u64.compose %v3232, %v3227
        %v3237 = vextract.low.u32 %v3236
        %v3238 = vextract.high.u32 %v3236
        %v3239 = vmul.u32 %v3232, %v3223
        %v3240 = vadd.s32 %v3235, %v3237
        %vm3241 = vc.u32 %v3235, %v3237
        %v3242 = vadd.s32 %v3238, 1
        %v3243 = vsel %vm3241, %v3242, %v3238
        %v3244 = vadd.s32 %v3239, %v3243
        %v3245 = vadd.s32 %v3244, 536870912
        %v3246 = vshrl.u32 %v3245, 30
        %v3247 = vshll.u32 %v3246, 30
        %v3248 = vsub.s32 %v3244, %v3247
        %vm3249 = vcmp.lt.s32.totalorder %v3248, 0
        %v3250 = vsub.s32 0, %v3248
        %v3251 = vsel %vm3249, %v3250, %v3248
        %v3252 = vclz %v3251
        %v3253 = vsub.s32 %v3252, 2
        %vm3254 = vcmp.gt.s32.totalorder 0, %v3253
        %v3255 = vsel %vm3254, 0, %v3253
        %v3256 = vsub.s32 32, %v3255
        %v3257 = vshll.u32 %v3248, %v3255
        %v3258 = vshrl.u32 %v3240, %v3256
        %v3259 = vor.u32 %v3257, %v3258
        %v3260 = vsub.s32 4294967266, %v3255
        %v3261 = vadd.s32 %v3260, 127
        %v3262 = vshll.u32 %v3261, 23
        %v3263 = vor.u32 4788187, %v3262
        %v3264 = vand.u32 2147483647, %v3263
        %v3266 = vcvt.s32.f32 %v3259
        %v3267 = vmul.f32 %v3266, %v3264
        %v3268 = vxor.u32 %v3267, 2147483648
        %v3269 = vsel %vm3186, %v3268, %v3267
        %v3270 = vsub.s32 4, %v3246
        %v3271 = vsel %vm3186, %v3270, %v3246
        %v3272 = vsel %vm3185, %v336, %v3269
        %v3273 = vsel %vm3185, 0, %v3271
        %v3274 = vcosq.f32.pop %v3272
        %v3275 = vsinq.f32.pop %v3272
        %vm3276 = vweird.f32 %v336
        %v3277 = vand.u32 %v3273, 3
        %vm3278 = vcmp.lt.s32.totalorder %v3277, 2
        %vm3279 = vcmp.eq.s32.totalorder %v3277, 0
        %v3280 = vxor.u32 %v3275, 2147483648
        %v3281 = vsel %vm3279, %v3274, %v3280
        %vm3282 = vcmp.eq.s32.totalorder %v3277, 2
        %v3283 = vxor.u32 %v3274, 2147483648
        %v3284 = vsel %vm3282, %v3283, %v3275
        %v3285 = vsel %vm3278, %v3281, %v3284
        %v3286 = vsel %vm3276, nan, %v3285
        %v3287 = vand.u32 2147483647, %v341
        %vm3288 = vcmp.le.f32.partialorder %v3287, 0.7853982
        %vm3289 = vcmp.lt.s32.totalorder %v341, 0
        %v3290 = vand.u32 %v341, 2139095040
        %v3291 = vshrl.u32 %v3290, 23
        %v3292 = vsub.s32 %v3291, 127
        %v3293 = vand.u32 2147483647, %v341
        %v3294 = vand.u32 %v3293, 8388607
        %v3295 = vor.u32 %v3294, 8388608
        %v3296 = vsub.s32 0, %v3295
        %v3297 = vadd.s32 %v3292, 1
        %vm3298 = vcmp.gt.s32.totalorder %v3297, 0
        %v3299 = vsel %vm3298, %v3297, 0
        %v3300 = vshrl.u32 %v3299, 5
        %v3301 = vand.u32 %v3299, 31
        %v3302 = vsub.s32 32, %v3301
        %v3303 = vshrl.u32 683565275, %v3302
        %v3304 = vshll.u32 683565275, %v3301
        %v3305 = vshrl.u32 2475754826, %v3302
        %v3306 = vor.u32 %v3304, %v3305
        %v3307 = vshll.u32 2475754826, %v3301
        %v3308 = vshrl.u32 2131351028, %v3302
        %v3309 = vor.u32 %v3307, %v3308
        %v3310 = vshll.u32 2131351028, %v3301
        %v3311 = vshrl.u32 2102212464, %v3302
        %v3312 = vor.u32 %v3310, %v3311
        %v3313 = vshll.u32 2102212464, %v3301
        %v3314 = vshrl.u32 920167782, %v3302
        %v3315 = vor.u32 %v3313, %v3314
        %v3316 = vshll.u32 920167782, %v3301
        %v3317 = vshrl.u32 1326507024, %v3302
        %v3318 = vor.u32 %v3316, %v3317
        %vm3319 = vcmp.lt.s32.totalorder %v3300, 1
        %vm3320 = vcmp.lt.s32.totalorder %v3300, 2
        %vm3321 = vcmp.lt.s32.totalorder %v3300, 3
        %vm3322 = vcmp.lt.s32.totalorder %v3300, 4
        %v3323 = vsel %vm3319, %v3303, %v3306
        %v3324 = vsel %vm3322, %v3312, 2102212464
        %v3325 = vsel %vm3321, %v3309, %v3324
        %v3326 = vsel %vm3320, %v3323, %v3325
        %v3327 = vsel %vm3319, %v3306, %v3309
        %v3328 = vsel %vm3322, %v3315, 920167782
        %v3329 = vsel %vm3321, %v3312, %v3328
        %v3330 = vsel %vm3320, %v3327, %v3329
        %v3331 = vsel %vm3319, %v3309, %v3312
        %v3332 = vsel %vm3322, %v3318, 1326507024
        %v3333 = vsel %vm3321, %v3315, %v3332
        %v3334 = vsel %vm3320, %v3331, %v3333
        %v3335 = vshll.u32 %v3295, 8
        %v3336 = vmul.u32.u64.compose %v3335, %v3334
        %v3337 = vextract.low.u32 %v3336
        %v3338 = vextract.high.u32 %v3336
        %v3339 = vmul.u32.u64.compose %v3335, %v3330
        %v3340 = vextract.low.u32 %v3339
        %v3341 = vextract.high.u32 %v3339
        %v3342 = vmul.u32 %v3335, %v3326
        %v3343 = vadd.s32 %v3338, %v3340
        %vm3344 = vc.u32 %v3338, %v3340
        %v3345 = vadd.s32 %v3341, 1
        %v3346 = vsel %vm3344, %v3345, %v3341
        %v3347 = vadd.s32 %v3342, %v3346
        %v3348 = vadd.s32 %v3347, 536870912
        %v3349 = vshrl.u32 %v3348, 30
        %v3350 = vshll.u32 %v3349, 30
        %v3351 = vsub.s32 %v3347, %v3350
        %vm3352 = vcmp.lt.s32.totalorder %v3351, 0
        %v3353 = vsub.s32 0, %v3351
        %v3354 = vsel %vm3352, %v3353, %v3351
        %v3355 = vclz %v3354
        %v3356 = vsub.s32 %v3355, 2
        %vm3357 = vcmp.gt.s32.totalorder 0, %v3356
        %v3358 = vsel %vm3357, 0, %v3356
        %v3359 = vsub.s32 32, %v3358
        %v3360 = vshll.u32 %v3351, %v3358
        %v3361 = vshrl.u32 %v3343, %v3359
        %v3362 = vor.u32 %v3360, %v3361
        %v3363 = vsub.s32 4294967266, %v3358
        %v3364 = vadd.s32 %v3363, 127
        %v3365 = vshll.u32 %v3364, 23
        %v3366 = vor.u32 4788187, %v3365
        %v3367 = vand.u32 2147483647, %v3366
        %v3369 = vcvt.s32.f32 %v3362
        %v3370 = vmul.f32 %v3369, %v3367
        %v3371 = vxor.u32 %v3370, 2147483648
        %v3372 = vsel %vm3289, %v3371, %v3370
        %v3373 = vsub.s32 4, %v3349
        %v3374 = vsel %vm3289, %v3373, %v3349
        %v3375 = vsel %vm3288, %v341, %v3372
        %v3376 = vsel %vm3288, 0, %v3374
        %v3377 = vcosq.f32.pop %v3375
        %v3378 = vsinq.f32.pop %v3375
        %vm3379 = vweird.f32 %v341
        %v3380 = vand.u32 %v3376, 3
        %vm3381 = vcmp.lt.s32.totalorder %v3380, 2
        %vm3382 = vcmp.eq.s32.totalorder %v3380, 0
        %v3383 = vxor.u32 %v3378, 2147483648
        %v3384 = vsel %vm3382, %v3377, %v3383
        %vm3385 = vcmp.eq.s32.totalorder %v3380, 2
        %v3386 = vxor.u32 %v3377, 2147483648
        %v3387 = vsel %vm3385, %v3386, %v3378
        %v3388 = vsel %vm3381, %v3384, %v3387
        %v3389 = vsel %vm3379, nan, %v3388
        %v3390 = vand.u32 2147483647, %v346
        %vm3391 = vcmp.le.f32.partialorder %v3390, 0.7853982
        %vm3392 = vcmp.lt.s32.totalorder %v346, 0
        %v3393 = vand.u32 %v346, 2139095040
        %v3394 = vshrl.u32 %v3393, 23
        %v3395 = vsub.s32 %v3394, 127
        %v3396 = vand.u32 2147483647, %v346
        %v3397 = vand.u32 %v3396, 8388607
        %v3398 = vor.u32 %v3397, 8388608
        %v3399 = vsub.s32 0, %v3398
        %v3400 = vadd.s32 %v3395, 1
        %vm3401 = vcmp.gt.s32.totalorder %v3400, 0
        %v3402 = vsel %vm3401, %v3400, 0
        %v3403 = vshrl.u32 %v3402, 5
        %v3404 = vand.u32 %v3402, 31
        %v3405 = vsub.s32 32, %v3404
        %v3406 = vshrl.u32 683565275, %v3405
        %v3407 = vshll.u32 683565275, %v3404
        %v3408 = vshrl.u32 2475754826, %v3405
        %v3409 = vor.u32 %v3407, %v3408
        %v3410 = vshll.u32 2475754826, %v3404
        %v3411 = vshrl.u32 2131351028, %v3405
        %v3412 = vor.u32 %v3410, %v3411
        %v3413 = vshll.u32 2131351028, %v3404
        %v3414 = vshrl.u32 2102212464, %v3405
        %v3415 = vor.u32 %v3413, %v3414
        %v3416 = vshll.u32 2102212464, %v3404
        %v3417 = vshrl.u32 920167782, %v3405
        %v3418 = vor.u32 %v3416, %v3417
        %v3419 = vshll.u32 920167782, %v3404
        %v3420 = vshrl.u32 1326507024, %v3405
        %v3421 = vor.u32 %v3419, %v3420
        %vm3422 = vcmp.lt.s32.totalorder %v3403, 1
        %vm3423 = vcmp.lt.s32.totalorder %v3403, 2
        %vm3424 = vcmp.lt.s32.totalorder %v3403, 3
        %vm3425 = vcmp.lt.s32.totalorder %v3403, 4
        %v3426 = vsel %vm3422, %v3406, %v3409
        %v3427 = vsel %vm3425, %v3415, 2102212464
        %v3428 = vsel %vm3424, %v3412, %v3427
        %v3429 = vsel %vm3423, %v3426, %v3428
        %v3430 = vsel %vm3422, %v3409, %v3412
        %v3431 = vsel %vm3425, %v3418, 920167782
        %v3432 = vsel %vm3424, %v3415, %v3431
        %v3433 = vsel %vm3423, %v3430, %v3432
        %v3434 = vsel %vm3422, %v3412, %v3415
        %v3435 = vsel %vm3425, %v3421, 1326507024
        %v3436 = vsel %vm3424, %v3418, %v3435
        %v3437 = vsel %vm3423, %v3434, %v3436
        %v3438 = vshll.u32 %v3398, 8
        %v3439 = vmul.u32.u64.compose %v3438, %v3437
        %v3440 = vextract.low.u32 %v3439
        %v3441 = vextract.high.u32 %v3439
        %v3442 = vmul.u32.u64.compose %v3438, %v3433
        %v3443 = vextract.low.u32 %v3442
        %v3444 = vextract.high.u32 %v3442
        %v3445 = vmul.u32 %v3438, %v3429
        %v3446 = vadd.s32 %v3441, %v3443
        %vm3447 = vc.u32 %v3441, %v3443
        %v3448 = vadd.s32 %v3444, 1
        %v3449 = vsel %vm3447, %v3448, %v3444
        %v3450 = vadd.s32 %v3445, %v3449
        %v3451 = vadd.s32 %v3450, 536870912
        %v3452 = vshrl.u32 %v3451, 30
        %v3453 = vshll.u32 %v3452, 30
        %v3454 = vsub.s32 %v3450, %v3453
        %vm3455 = vcmp.lt.s32.totalorder %v3454, 0
        %v3456 = vsub.s32 0, %v3454
        %v3457 = vsel %vm3455, %v3456, %v3454
        %v3458 = vclz %v3457
        %v3459 = vsub.s32 %v3458, 2
        %vm3460 = vcmp.gt.s32.totalorder 0, %v3459
        %v3461 = vsel %vm3460, 0, %v3459
        %v3462 = vsub.s32 32, %v3461
        %v3463 = vshll.u32 %v3454, %v3461
        %v3464 = vshrl.u32 %v3446, %v3462
        %v3465 = vor.u32 %v3463, %v3464
        %v3466 = vsub.s32 4294967266, %v3461
        %v3467 = vadd.s32 %v3466, 127
        %v3468 = vshll.u32 %v3467, 23
        %v3469 = vor.u32 4788187, %v3468
        %v3470 = vand.u32 2147483647, %v3469
        %v3472 = vcvt.s32.f32 %v3465
        %v3473 = vmul.f32 %v3472, %v3470
        %v3474 = vxor.u32 %v3473, 2147483648
        %v3475 = vsel %vm3392, %v3474, %v3473
        %v3476 = vsub.s32 4, %v3452
        %v3477 = vsel %vm3392, %v3476, %v3452
        %v3478 = vsel %vm3391, %v346, %v3475
        %v3479 = vsel %vm3391, 0, %v3477
        %v3480 = vcosq.f32.pop %v3478
        %v3481 = vsinq.f32.pop %v3478
        %vm3482 = vweird.f32 %v346
        %v3483 = vand.u32 %v3479, 3
        %vm3484 = vcmp.lt.s32.totalorder %v3483, 2
        %vm3485 = vcmp.eq.s32.totalorder %v3483, 0
        %v3486 = vxor.u32 %v3481, 2147483648
        %v3487 = vsel %vm3485, %v3480, %v3486
        %vm3488 = vcmp.eq.s32.totalorder %v3483, 2
        %v3489 = vxor.u32 %v3480, 2147483648
        %v3490 = vsel %vm3488, %v3489, %v3481
        %v3491 = vsel %vm3484, %v3487, %v3490
        %v3492 = vsel %vm3482, nan, %v3491
        %v3493 = vand.u32 2147483647, %v351
        %vm3494 = vcmp.le.f32.partialorder %v3493, 0.7853982
        %vm3495 = vcmp.lt.s32.totalorder %v351, 0
        %v3496 = vand.u32 %v351, 2139095040
        %v3497 = vshrl.u32 %v3496, 23
        %v3498 = vsub.s32 %v3497, 127
        %v3499 = vand.u32 2147483647, %v351
        %v3500 = vand.u32 %v3499, 8388607
        %v3501 = vor.u32 %v3500, 8388608
        %v3502 = vsub.s32 0, %v3501
        %v3503 = vadd.s32 %v3498, 1
        %vm3504 = vcmp.gt.s32.totalorder %v3503, 0
        %v3505 = vsel %vm3504, %v3503, 0
        %v3506 = vshrl.u32 %v3505, 5
        %v3507 = vand.u32 %v3505, 31
        %v3508 = vsub.s32 32, %v3507
        %v3509 = vshrl.u32 683565275, %v3508
        %v3510 = vshll.u32 683565275, %v3507
        %v3511 = vshrl.u32 2475754826, %v3508
        %v3512 = vor.u32 %v3510, %v3511
        %v3513 = vshll.u32 2475754826, %v3507
        %v3514 = vshrl.u32 2131351028, %v3508
        %v3515 = vor.u32 %v3513, %v3514
        %v3516 = vshll.u32 2131351028, %v3507
        %v3517 = vshrl.u32 2102212464, %v3508
        %v3518 = vor.u32 %v3516, %v3517
        %v3519 = vshll.u32 2102212464, %v3507
        %v3520 = vshrl.u32 920167782, %v3508
        %v3521 = vor.u32 %v3519, %v3520
        %v3522 = vshll.u32 920167782, %v3507
        %v3523 = vshrl.u32 1326507024, %v3508
        %v3524 = vor.u32 %v3522, %v3523
        %vm3525 = vcmp.lt.s32.totalorder %v3506, 1
        %vm3526 = vcmp.lt.s32.totalorder %v3506, 2
        %vm3527 = vcmp.lt.s32.totalorder %v3506, 3
        %vm3528 = vcmp.lt.s32.totalorder %v3506, 4
        %v3529 = vsel %vm3525, %v3509, %v3512
        %v3530 = vsel %vm3528, %v3518, 2102212464
        %v3531 = vsel %vm3527, %v3515, %v3530
        %v3532 = vsel %vm3526, %v3529, %v3531
        %v3533 = vsel %vm3525, %v3512, %v3515
        %v3534 = vsel %vm3528, %v3521, 920167782
        %v3535 = vsel %vm3527, %v3518, %v3534
        %v3536 = vsel %vm3526, %v3533, %v3535
        %v3537 = vsel %vm3525, %v3515, %v3518
        %v3538 = vsel %vm3528, %v3524, 1326507024
        %v3539 = vsel %vm3527, %v3521, %v3538
        %v3540 = vsel %vm3526, %v3537, %v3539
        %v3541 = vshll.u32 %v3501, 8
        %v3542 = vmul.u32.u64.compose %v3541, %v3540
        %v3543 = vextract.low.u32 %v3542
        %v3544 = vextract.high.u32 %v3542
        %v3545 = vmul.u32.u64.compose %v3541, %v3536
        %v3546 = vextract.low.u32 %v3545
        %v3547 = vextract.high.u32 %v3545
        %v3548 = vmul.u32 %v3541, %v3532
        %v3549 = vadd.s32 %v3544, %v3546
        %vm3550 = vc.u32 %v3544, %v3546
        %v3551 = vadd.s32 %v3547, 1
        %v3552 = vsel %vm3550, %v3551, %v3547
        %v3553 = vadd.s32 %v3548, %v3552
        %v3554 = vadd.s32 %v3553, 536870912
        %v3555 = vshrl.u32 %v3554, 30
        %v3556 = vshll.u32 %v3555, 30
        %v3557 = vsub.s32 %v3553, %v3556
        %vm3558 = vcmp.lt.s32.totalorder %v3557, 0
        %v3559 = vsub.s32 0, %v3557
        %v3560 = vsel %vm3558, %v3559, %v3557
        %v3561 = vclz %v3560
        %v3562 = vsub.s32 %v3561, 2
        %vm3563 = vcmp.gt.s32.totalorder 0, %v3562
        %v3564 = vsel %vm3563, 0, %v3562
        %v3565 = vsub.s32 32, %v3564
        %v3566 = vshll.u32 %v3557, %v3564
        %v3567 = vshrl.u32 %v3549, %v3565
        %v3568 = vor.u32 %v3566, %v3567
        %v3569 = vsub.s32 4294967266, %v3564
        %v3570 = vadd.s32 %v3569, 127
        %v3571 = vshll.u32 %v3570, 23
        %v3572 = vor.u32 4788187, %v3571
        %v3573 = vand.u32 2147483647, %v3572
        %v3575 = vcvt.s32.f32 %v3568
        %v3576 = vmul.f32 %v3575, %v3573
        %v3577 = vxor.u32 %v3576, 2147483648
        %v3578 = vsel %vm3495, %v3577, %v3576
        %v3579 = vsub.s32 4, %v3555
        %v3580 = vsel %vm3495, %v3579, %v3555
        %v3581 = vsel %vm3494, %v351, %v3578
        %v3582 = vsel %vm3494, 0, %v3580
        %v3583 = vcosq.f32.pop %v3581
        %v3584 = vsinq.f32.pop %v3581
        %vm3585 = vweird.f32 %v351
        %v3586 = vand.u32 %v3582, 3
        %vm3587 = vcmp.lt.s32.totalorder %v3586, 2
        %vm3588 = vcmp.eq.s32.totalorder %v3586, 0
        %v3589 = vxor.u32 %v3584, 2147483648
        %v3590 = vsel %vm3588, %v3583, %v3589
        %vm3591 = vcmp.eq.s32.totalorder %v3586, 2
        %v3592 = vxor.u32 %v3583, 2147483648
        %v3593 = vsel %vm3591, %v3592, %v3584
        %v3594 = vsel %vm3587, %v3590, %v3593
        %v3595 = vsel %vm3585, nan, %v3594
        %v3596 = vand.u32 2147483647, %v356
        %vm3597 = vcmp.le.f32.partialorder %v3596, 0.7853982
        %vm3598 = vcmp.lt.s32.totalorder %v356, 0
        %v3599 = vand.u32 %v356, 2139095040
        %v3600 = vshrl.u32 %v3599, 23
        %v3601 = vsub.s32 %v3600, 127
        %v3602 = vand.u32 2147483647, %v356
        %v3603 = vand.u32 %v3602, 8388607
        %v3604 = vor.u32 %v3603, 8388608
        %v3605 = vsub.s32 0, %v3604
        %v3606 = vadd.s32 %v3601, 1
        %vm3607 = vcmp.gt.s32.totalorder %v3606, 0
        %v3608 = vsel %vm3607, %v3606, 0
        %v3609 = vshrl.u32 %v3608, 5
        %v3610 = vand.u32 %v3608, 31
        %v3611 = vsub.s32 32, %v3610
        %v3612 = vshrl.u32 683565275, %v3611
        %v3613 = vshll.u32 683565275, %v3610
        %v3614 = vshrl.u32 2475754826, %v3611
        %v3615 = vor.u32 %v3613, %v3614
        %v3616 = vshll.u32 2475754826, %v3610
        %v3617 = vshrl.u32 2131351028, %v3611
        %v3618 = vor.u32 %v3616, %v3617
        %v3619 = vshll.u32 2131351028, %v3610
        %v3620 = vshrl.u32 2102212464, %v3611
        %v3621 = vor.u32 %v3619, %v3620
        %v3622 = vshll.u32 2102212464, %v3610
        %v3623 = vshrl.u32 920167782, %v3611
        %v3624 = vor.u32 %v3622, %v3623
        %v3625 = vshll.u32 920167782, %v3610
        %v3626 = vshrl.u32 1326507024, %v3611
        %v3627 = vor.u32 %v3625, %v3626
        %vm3628 = vcmp.lt.s32.totalorder %v3609, 1
        %vm3629 = vcmp.lt.s32.totalorder %v3609, 2
        %vm3630 = vcmp.lt.s32.totalorder %v3609, 3
        %vm3631 = vcmp.lt.s32.totalorder %v3609, 4
        %v3632 = vsel %vm3628, %v3612, %v3615
        %v3633 = vsel %vm3631, %v3621, 2102212464
        %v3634 = vsel %vm3630, %v3618, %v3633
        %v3635 = vsel %vm3629, %v3632, %v3634
        %v3636 = vsel %vm3628, %v3615, %v3618
        %v3637 = vsel %vm3631, %v3624, 920167782
        %v3638 = vsel %vm3630, %v3621, %v3637
        %v3639 = vsel %vm3629, %v3636, %v3638
        %v3640 = vsel %vm3628, %v3618, %v3621
        %v3641 = vsel %vm3631, %v3627, 1326507024
        %v3642 = vsel %vm3630, %v3624, %v3641
        %v3643 = vsel %vm3629, %v3640, %v3642
        %v3644 = vshll.u32 %v3604, 8
        %v3645 = vmul.u32.u64.compose %v3644, %v3643
        %v3646 = vextract.low.u32 %v3645
        %v3647 = vextract.high.u32 %v3645
        %v3648 = vmul.u32.u64.compose %v3644, %v3639
        %v3649 = vextract.low.u32 %v3648
        %v3650 = vextract.high.u32 %v3648
        %v3651 = vmul.u32 %v3644, %v3635
        %v3652 = vadd.s32 %v3647, %v3649
        %vm3653 = vc.u32 %v3647, %v3649
        %v3654 = vadd.s32 %v3650, 1
        %v3655 = vsel %vm3653, %v3654, %v3650
        %v3656 = vadd.s32 %v3651, %v3655
        %v3657 = vadd.s32 %v3656, 536870912
        %v3658 = vshrl.u32 %v3657, 30
        %v3659 = vshll.u32 %v3658, 30
        %v3660 = vsub.s32 %v3656, %v3659
        %vm3661 = vcmp.lt.s32.totalorder %v3660, 0
        %v3662 = vsub.s32 0, %v3660
        %v3663 = vsel %vm3661, %v3662, %v3660
        %v3664 = vclz %v3663
        %v3665 = vsub.s32 %v3664, 2
        %vm3666 = vcmp.gt.s32.totalorder 0, %v3665
        %v3667 = vsel %vm3666, 0, %v3665
        %v3668 = vsub.s32 32, %v3667
        %v3669 = vshll.u32 %v3660, %v3667
        %v3670 = vshrl.u32 %v3652, %v3668
        %v3671 = vor.u32 %v3669, %v3670
        %v3672 = vsub.s32 4294967266, %v3667
        %v3673 = vadd.s32 %v3672, 127
        %v3674 = vshll.u32 %v3673, 23
        %v3675 = vor.u32 4788187, %v3674
        %v3676 = vand.u32 2147483647, %v3675
        %v3678 = vcvt.s32.f32 %v3671
        %v3679 = vmul.f32 %v3678, %v3676
        %v3680 = vxor.u32 %v3679, 2147483648
        %v3681 = vsel %vm3598, %v3680, %v3679
        %v3682 = vsub.s32 4, %v3658
        %v3683 = vsel %vm3598, %v3682, %v3658
        %v3684 = vsel %vm3597, %v356, %v3681
        %v3685 = vsel %vm3597, 0, %v3683
        %v3686 = vcosq.f32.pop %v3684
        %v3687 = vsinq.f32.pop %v3684
        %vm3688 = vweird.f32 %v356
        %v3689 = vand.u32 %v3685, 3
        %vm3690 = vcmp.lt.s32.totalorder %v3689, 2
        %vm3691 = vcmp.eq.s32.totalorder %v3689, 0
        %v3692 = vxor.u32 %v3687, 2147483648
        %v3693 = vsel %vm3691, %v3686, %v3692
        %vm3694 = vcmp.eq.s32.totalorder %v3689, 2
        %v3695 = vxor.u32 %v3686, 2147483648
        %v3696 = vsel %vm3694, %v3695, %v3687
        %v3697 = vsel %vm3690, %v3693, %v3696
        %v3698 = vsel %vm3688, nan, %v3697
        %v3699 = vand.u32 2147483647, %v361
        %vm3700 = vcmp.le.f32.partialorder %v3699, 0.7853982
        %vm3701 = vcmp.lt.s32.totalorder %v361, 0
        %v3702 = vand.u32 %v361, 2139095040
        %v3703 = vshrl.u32 %v3702, 23
        %v3704 = vsub.s32 %v3703, 127
        %v3705 = vand.u32 2147483647, %v361
        %v3706 = vand.u32 %v3705, 8388607
        %v3707 = vor.u32 %v3706, 8388608
        %v3708 = vsub.s32 0, %v3707
        %v3709 = vadd.s32 %v3704, 1
        %vm3710 = vcmp.gt.s32.totalorder %v3709, 0
        %v3711 = vsel %vm3710, %v3709, 0
        %v3712 = vshrl.u32 %v3711, 5
        %v3713 = vand.u32 %v3711, 31
        %v3714 = vsub.s32 32, %v3713
        %v3715 = vshrl.u32 683565275, %v3714
        %v3716 = vshll.u32 683565275, %v3713
        %v3717 = vshrl.u32 2475754826, %v3714
        %v3718 = vor.u32 %v3716, %v3717
        %v3719 = vshll.u32 2475754826, %v3713
        %v3720 = vshrl.u32 2131351028, %v3714
        %v3721 = vor.u32 %v3719, %v3720
        %v3722 = vshll.u32 2131351028, %v3713
        %v3723 = vshrl.u32 2102212464, %v3714
        %v3724 = vor.u32 %v3722, %v3723
        %v3725 = vshll.u32 2102212464, %v3713
        %v3726 = vshrl.u32 920167782, %v3714
        %v3727 = vor.u32 %v3725, %v3726
        %v3728 = vshll.u32 920167782, %v3713
        %v3729 = vshrl.u32 1326507024, %v3714
        %v3730 = vor.u32 %v3728, %v3729
        %vm3731 = vcmp.lt.s32.totalorder %v3712, 1
        %vm3732 = vcmp.lt.s32.totalorder %v3712, 2
        %vm3733 = vcmp.lt.s32.totalorder %v3712, 3
        %vm3734 = vcmp.lt.s32.totalorder %v3712, 4
        %v3735 = vsel %vm3731, %v3715, %v3718
        %v3736 = vsel %vm3734, %v3724, 2102212464
        %v3737 = vsel %vm3733, %v3721, %v3736
        %v3738 = vsel %vm3732, %v3735, %v3737
        %v3739 = vsel %vm3731, %v3718, %v3721
        %v3740 = vsel %vm3734, %v3727, 920167782
        %v3741 = vsel %vm3733, %v3724, %v3740
        %v3742 = vsel %vm3732, %v3739, %v3741
        %v3743 = vsel %vm3731, %v3721, %v3724
        %v3744 = vsel %vm3734, %v3730, 1326507024
        %v3745 = vsel %vm3733, %v3727, %v3744
        %v3746 = vsel %vm3732, %v3743, %v3745
        %v3747 = vshll.u32 %v3707, 8
        %v3748 = vmul.u32.u64.compose %v3747, %v3746
        %v3749 = vextract.low.u32 %v3748
        %v3750 = vextract.high.u32 %v3748
        %v3751 = vmul.u32.u64.compose %v3747, %v3742
        %v3752 = vextract.low.u32 %v3751
        %v3753 = vextract.high.u32 %v3751
        %v3754 = vmul.u32 %v3747, %v3738
        %v3755 = vadd.s32 %v3750, %v3752
        %vm3756 = vc.u32 %v3750, %v3752
        %v3757 = vadd.s32 %v3753, 1
        %v3758 = vsel %vm3756, %v3757, %v3753
        %v3759 = vadd.s32 %v3754, %v3758
        %v3760 = vadd.s32 %v3759, 536870912
        %v3761 = vshrl.u32 %v3760, 30
        %v3762 = vshll.u32 %v3761, 30
        %v3763 = vsub.s32 %v3759, %v3762
        %vm3764 = vcmp.lt.s32.totalorder %v3763, 0
        %v3765 = vsub.s32 0, %v3763
        %v3766 = vsel %vm3764, %v3765, %v3763
        %v3767 = vclz %v3766
        %v3768 = vsub.s32 %v3767, 2
        %vm3769 = vcmp.gt.s32.totalorder 0, %v3768
        %v3770 = vsel %vm3769, 0, %v3768
        %v3771 = vsub.s32 32, %v3770
        %v3772 = vshll.u32 %v3763, %v3770
        %v3773 = vshrl.u32 %v3755, %v3771
        %v3774 = vor.u32 %v3772, %v3773
        %v3775 = vsub.s32 4294967266, %v3770
        %v3776 = vadd.s32 %v3775, 127
        %v3777 = vshll.u32 %v3776, 23
        %v3778 = vor.u32 4788187, %v3777
        %v3779 = vand.u32 2147483647, %v3778
        %v3781 = vcvt.s32.f32 %v3774
        %v3782 = vmul.f32 %v3781, %v3779
        %v3783 = vxor.u32 %v3782, 2147483648
        %v3784 = vsel %vm3701, %v3783, %v3782
        %v3785 = vsub.s32 4, %v3761
        %v3786 = vsel %vm3701, %v3785, %v3761
        %v3787 = vsel %vm3700, %v361, %v3784
        %v3788 = vsel %vm3700, 0, %v3786
        %v3789 = vcosq.f32.pop %v3787
        %v3790 = vsinq.f32.pop %v3787
        %vm3791 = vweird.f32 %v361
        %v3792 = vand.u32 %v3788, 3
        %vm3793 = vcmp.lt.s32.totalorder %v3792, 2
        %vm3794 = vcmp.eq.s32.totalorder %v3792, 0
        %v3795 = vxor.u32 %v3790, 2147483648
        %v3796 = vsel %vm3794, %v3789, %v3795
        %vm3797 = vcmp.eq.s32.totalorder %v3792, 2
        %v3798 = vxor.u32 %v3789, 2147483648
        %v3799 = vsel %vm3797, %v3798, %v3790
        %v3800 = vsel %vm3793, %v3796, %v3799
        %v3801 = vsel %vm3791, nan, %v3800
        %v3802 = vand.u32 2147483647, %v366
        %vm3803 = vcmp.le.f32.partialorder %v3802, 0.7853982
        %vm3804 = vcmp.lt.s32.totalorder %v366, 0
        %v3805 = vand.u32 %v366, 2139095040
        %v3806 = vshrl.u32 %v3805, 23
        %v3807 = vsub.s32 %v3806, 127
        %v3808 = vand.u32 2147483647, %v366
        %v3809 = vand.u32 %v3808, 8388607
        %v3810 = vor.u32 %v3809, 8388608
        %v3811 = vsub.s32 0, %v3810
        %v3812 = vadd.s32 %v3807, 1
        %vm3813 = vcmp.gt.s32.totalorder %v3812, 0
        %v3814 = vsel %vm3813, %v3812, 0
        %v3815 = vshrl.u32 %v3814, 5
        %v3816 = vand.u32 %v3814, 31
        %v3817 = vsub.s32 32, %v3816
        %v3818 = vshrl.u32 683565275, %v3817
        %v3819 = vshll.u32 683565275, %v3816
        %v3820 = vshrl.u32 2475754826, %v3817
        %v3821 = vor.u32 %v3819, %v3820
        %v3822 = vshll.u32 2475754826, %v3816
        %v3823 = vshrl.u32 2131351028, %v3817
        %v3824 = vor.u32 %v3822, %v3823
        %v3825 = vshll.u32 2131351028, %v3816
        %v3826 = vshrl.u32 2102212464, %v3817
        %v3827 = vor.u32 %v3825, %v3826
        %v3828 = vshll.u32 2102212464, %v3816
        %v3829 = vshrl.u32 920167782, %v3817
        %v3830 = vor.u32 %v3828, %v3829
        %v3831 = vshll.u32 920167782, %v3816
        %v3832 = vshrl.u32 1326507024, %v3817
        %v3833 = vor.u32 %v3831, %v3832
        %vm3834 = vcmp.lt.s32.totalorder %v3815, 1
        %vm3835 = vcmp.lt.s32.totalorder %v3815, 2
        %vm3836 = vcmp.lt.s32.totalorder %v3815, 3
        %vm3837 = vcmp.lt.s32.totalorder %v3815, 4
        %v3838 = vsel %vm3834, %v3818, %v3821
        %v3839 = vsel %vm3837, %v3827, 2102212464
        %v3840 = vsel %vm3836, %v3824, %v3839
        %v3841 = vsel %vm3835, %v3838, %v3840
        %v3842 = vsel %vm3834, %v3821, %v3824
        %v3843 = vsel %vm3837, %v3830, 920167782
        %v3844 = vsel %vm3836, %v3827, %v3843
        %v3845 = vsel %vm3835, %v3842, %v3844
        %v3846 = vsel %vm3834, %v3824, %v3827
        %v3847 = vsel %vm3837, %v3833, 1326507024
        %v3848 = vsel %vm3836, %v3830, %v3847
        %v3849 = vsel %vm3835, %v3846, %v3848
        %v3850 = vshll.u32 %v3810, 8
        %v3851 = vmul.u32.u64.compose %v3850, %v3849
        %v3852 = vextract.low.u32 %v3851
        %v3853 = vextract.high.u32 %v3851
        %v3854 = vmul.u32.u64.compose %v3850, %v3845
        %v3855 = vextract.low.u32 %v3854
        %v3856 = vextract.high.u32 %v3854
        %v3857 = vmul.u32 %v3850, %v3841
        %v3858 = vadd.s32 %v3853, %v3855
        %vm3859 = vc.u32 %v3853, %v3855
        %v3860 = vadd.s32 %v3856, 1
        %v3861 = vsel %vm3859, %v3860, %v3856
        %v3862 = vadd.s32 %v3857, %v3861
        %v3863 = vadd.s32 %v3862, 536870912
        %v3864 = vshrl.u32 %v3863, 30
        %v3865 = vshll.u32 %v3864, 30
        %v3866 = vsub.s32 %v3862, %v3865
        %vm3867 = vcmp.lt.s32.totalorder %v3866, 0
        %v3868 = vsub.s32 0, %v3866
        %v3869 = vsel %vm3867, %v3868, %v3866
        %v3870 = vclz %v3869
        %v3871 = vsub.s32 %v3870, 2
        %vm3872 = vcmp.gt.s32.totalorder 0, %v3871
        %v3873 = vsel %vm3872, 0, %v3871
        %v3874 = vsub.s32 32, %v3873
        %v3875 = vshll.u32 %v3866, %v3873
        %v3876 = vshrl.u32 %v3858, %v3874
        %v3877 = vor.u32 %v3875, %v3876
        %v3878 = vsub.s32 4294967266, %v3873
        %v3879 = vadd.s32 %v3878, 127
        %v3880 = vshll.u32 %v3879, 23
        %v3881 = vor.u32 4788187, %v3880
        %v3882 = vand.u32 2147483647, %v3881
        %v3884 = vcvt.s32.f32 %v3877
        %v3885 = vmul.f32 %v3884, %v3882
        %v3886 = vxor.u32 %v3885, 2147483648
        %v3887 = vsel %vm3804, %v3886, %v3885
        %v3888 = vsub.s32 4, %v3864
        %v3889 = vsel %vm3804, %v3888, %v3864
        %v3890 = vsel %vm3803, %v366, %v3887
        %v3891 = vsel %vm3803, 0, %v3889
        %v3892 = vcosq.f32.pop %v3890
        %v3893 = vsinq.f32.pop %v3890
        %vm3894 = vweird.f32 %v366
        %v3895 = vand.u32 %v3891, 3
        %vm3896 = vcmp.lt.s32.totalorder %v3895, 2
        %vm3897 = vcmp.eq.s32.totalorder %v3895, 0
        %v3898 = vxor.u32 %v3893, 2147483648
        %v3899 = vsel %vm3897, %v3892, %v3898
        %vm3900 = vcmp.eq.s32.totalorder %v3895, 2
        %v3901 = vxor.u32 %v3892, 2147483648
        %v3902 = vsel %vm3900, %v3901, %v3893
        %v3903 = vsel %vm3896, %v3899, %v3902
        %v3904 = vsel %vm3894, nan, %v3903
        %3905 = vst [vmem:[%s137 + $0x8] sm:$0xff] %v2256
        %3906 = vst [vmem:[%s137 + $0x18] sm:$0xff] %v2359
        %3907 = vst [vmem:[%s137 + $0x28] sm:$0xff] %v2462
        %3908 = vst [vmem:[%s137 + $0x38] sm:$0xff] %v2565
        %3909 = vst [vmem:[%s137 + $0x48] sm:$0xff] %v2668
        %3910 = vst [vmem:[%s137 + $0x58] sm:$0xff] %v2771
        %3911 = vst [vmem:[%s137 + $0x68] sm:$0xff] %v2874
        %3912 = vst [vmem:[%s137 + $0x78] sm:$0xff] %v2977
        %3913 = vst [vmem:[%s137 + $0x88] sm:$0xff] %v3080
        %3914 = vst [vmem:[%s137 + $0x98] sm:$0xff] %v3183
        %3915 = vst [vmem:[%s137 + $0xa8] sm:$0xff] %v3286
        %3916 = vst [vmem:[%s137 + $0xb8] sm:$0xff] %v3389
        %3917 = vst [vmem:[%s137 + $0xc8] sm:$0xff] %v3492
        %3918 = vst [vmem:[%s137 + $0xd8] sm:$0xff] %v3595
        %3919 = vst [vmem:[%s137 + $0xe8] sm:$0xff] %v3698
        %3920 = vst [vmem:[%s137 + $0xf8] sm:$0xff] %v3801
        %3921 = vst [vmem:[%s137 + $0x108] sm:$0xff] %v3904
        %s3922 = sand.u32 %s71, 1
        %s3923 = scalar_lea.sflag [#allocation3], %s3922
        %s3924 = sand.u32 %s71, 1
        %s3925 = smul.addr %s3924, 272
        %s3926 = scalar_lea.vmem [#allocation2], %s3925
        // Predicated region
        $region29: #{tpu_custom_call.1} parent=27 // pred_check
          %p3927 = pneg %p81
        $region30: #{tpu_custom_call.1} parent=27 // pred_check_branch
          %3929 = sbr.rel (%p3927) target = $region32
        $region31: #{tpu_custom_call.1} parent=27 // pred_region
          %s3930 = smul.u32 17, %s16
          %s3932 = ssub.s32 4352, 4352
          %3933 = vsyncadd %s3923, %s3932
          %s3934 = smul.addr %s3930, 2
          %s3935 = smul.addr %s3934, 128
          %s3936 = scalar_lea.hbm %s2, %s3935
          %s3937 = sshll.u32 %s3926, 4
          %s3938 = int_to_ptr.vmem [resolvable:$true] %s3937
          %3943 = dma.vmem_to_hbm [thread:$0]  %s3938, 4352, %s3936, %s3923, 256, 256, 16
        $region32: #{tpu_custom_call.1} parent=27 // pred_fallthru
          _
      $region28: #{tpu_custom_call.1} parent=5 // pred_fallthru
        _
      %p3944 = scmp.le.s32.totalorder 2, %s11
      // Predicated region
      $region33: #{tpu_custom_call.1} parent=5 // pred_check
        %p3945 = pneg %p3944
      $region34: #{tpu_custom_call.1} parent=5 // pred_check_branch
        %3947 = sbr.rel (%p3945) target = $region36
      $region35: #{tpu_custom_call.1} parent=5 // pred_region
        %s3948 = ssub.s32 %s11, 2
        // Predicated region
        $region37: #{tpu_custom_call.1} parent=35 // pred_check
          %p3949 = pneg %p87
        $region38: #{tpu_custom_call.1} parent=35 // pred_check_branch
          %3951 = sbr.rel (%p3949) target = $region40
        $region39: #{tpu_custom_call.1} parent=35 // pred_region
          %s3952 = sand.u32 %s72, 1
          %s3953 = scalar_lea.sflag [#allocation3], %s3952
          %s3954 = sand.u32 %s72, 1
          %s3955 = smul.addr %s3954, 272
          %s3956 = scalar_lea.vmem [#allocation2], %s3955
          %3957 = dma.done %s3953, 4352
        $region40: #{tpu_custom_call.1} parent=35 // pred_fallthru
          _
      $region36: #{tpu_custom_call.1} parent=5 // pred_fallthru
        _
    $region6: #{tpu_custom_call.1} parent=1 // loop_footer
      %s15 = sadd.s32 1, %s11
    $region7: #{tpu_custom_call.1} parent=1 // loop_footer_branch
      %10 = sbr.rel target = $region3
    $region8: #{tpu_custom_call.1} parent=1 // loop_exit
      _
    %3958 = vsyncpa [#allocation3], 1
    %s3959 = scalar_lea.sflag [#allocation3], 1
    %3960 = vsyncpa %s3959, 1

</llo_original>
